<compile_context>
chip_gen: v5e
topology: v5e:2x2
jax: 0.10.0
libtpu: 0.0.40
codegen_flags: <defaults>
</compile_context>

<pallas_src>
import numpy as np
import jax
import jax.numpy as jnp
from jax import lax
from jax.experimental import pallas as pl
from jax.experimental.pallas import tpu as pltpu

# ----------------------------------------------------------------------------
# Configuration (small shapes consistent with the module).
# ----------------------------------------------------------------------------
N = 2                      # batch
IN_CH = 2                  # AlphaZero input planes (fixed by the module)
H = W = 5                  # board_size=(5, 5)
HP, WP = H + 2, W + 2      # spatially zero-padded layout (conv padding=1)
SP = HP * WP               # padded spatial positions per sample = 49
FILTERS = 32               # scaled-down tower width (module default 320)
NUM_BLOCKS = 2             # scaled-down depth (module default 10)
POLICY_SIZE = 25
VALUE_HIDDEN = 128

C_PAD = 128                # lane-padded channel dim
M_PAD = 104                # row (sublane) dim: N*SP = 98 -> next multiple of 8
N_PAD = 8                  # padded batch rows for the head matmuls
HEAD_LANES = 256           # lanes [0:128) -> policy logits, [128:256) -> value fc1
BAND = 32                  # K-band width for tap packing (>= FILTERS)

NUM_CONVS = 1 + 2 * NUM_BLOCKS     # conv_init + 2 convs per residual block
# 3x3 tap t = 3*dy+dx -> row shift in the flattened padded layout.
TAP_SHIFTS = tuple((dy - 1) * WP + (dx - 1) for dy in range(3) for dx in range(3))
# 4 taps share one matmul via 32-lane K bands: 9 taps -> 3 matmuls per conv.
TAP_GROUPS = ((0, 1, 2, 3), (4, 5, 6, 7), (8,))
GROUPS_PER_CONV = len(TAP_GROUPS)


# ----------------------------------------------------------------------------
# The single fused kernel.
# ----------------------------------------------------------------------------
def _alphazero_kernel(x_ref, w_ref, cshift_ref, mask_ref,
                      head_w_ref, head_shift_ref, a_ref, sel_ref,
                      head_bias_ref, wv2_ref, v2b_ref,
                      logits_ref, value_ref):
    mask = mask_ref[...]                              # (M_PAD, C_PAD), hoisted once

    def conv3x3(act, conv_idx):
        # 3x3 "same" conv = 3 MXU matmuls.  Each group packs up to 4 taps: the
        # tap-shifted activation (nonzero only in lanes [0:32)) is moved into
        # its own 32-lane K band with an XLU lane-roll, and the 4 tap weights
        # live in the matching K bands of one (128,128) bf16 weight.
        partials = []
        for g, taps in enumerate(TAP_GROUPS):
            packed = None
            for band, t in enumerate(taps):
                s = TAP_SHIFTS[t]
                v = act if s == 0 else pltpu.roll(act, (-s) % M_PAD, axis=0)
                if band:
                    v = pltpu.roll(v, band * BAND, axis=1)
                packed = v if packed is None else packed + v
            partials.append(jnp.dot(packed.astype(jnp.bfloat16),
                                    w_ref[conv_idx * GROUPS_PER_CONV + g],
                                    preferred_element_type=jnp.float32))
        return (partials[0] + partials[1]) + partials[2]   # independent accumulators

    # conv_init + bn_init (folded) + relu; mask keeps halo/pad rows exactly zero.
    act = jnp.maximum(conv3x3(x_ref[...], 0) + cshift_ref[0], 0.0) * mask

    # Residual tower (BN folded into weights; dropout = identity in eval mode).
    for b in range(NUM_BLOCKS):
        c1 = 1 + 2 * b
        c2 = c1 + 1
        y = jnp.maximum(conv3x3(act, c1) + cshift_ref[c1], 0.0) * mask
        y = conv3x3(y, c2) + cshift_ref[c2]
        act = jnp.maximum(y + act, 0.0) * mask        # shortcut + relu

    # Fused 1x1 heads: lanes 0,1 = policy conv, lane 2 = value conv (BN folded).
    p = jnp.maximum(
        jnp.dot(act.astype(jnp.bfloat16), head_w_ref[...],
                preferred_element_type=jnp.float32)
        + head_shift_ref[...], 0.0)                   # (M_PAD, C_PAD)

    # NCHW flatten + policy_fc / value_fc1 folded into row-expanded weights
    # (zero at non-interior rows), then reduced per-sample by one selector matmul.
    contrib = (p[:, 0:1] * a_ref[0]
               + p[:, 1:2] * a_ref[1]
               + p[:, 2:3] * a_ref[2])                # (M_PAD, HEAD_LANES) f32
    sums = jnp.dot(sel_ref[...], contrib.astype(jnp.bfloat16),
                   preferred_element_type=jnp.float32) + head_bias_ref[...]

    logits_ref[...] = sums[:, 0:128]                  # cols 0..24 are the real logits
    vh = jnp.maximum(sums[:, 128:256], 0.0)           # value_fc1 + relu (dropout = id)
    value_ref[...] = jnp.tanh(
        jnp.dot(vh.astype(jnp.bfloat16), wv2_ref[...],
                preferred_element_type=jnp.float32) + v2b_ref[...])


@jax.jit
def alphazero_forward(x_nchw, prep):
    # Tiny input prep: NCHW -> zero-padded NHWC slab (M_PAD, C_PAD).
    x = jnp.transpose(x_nchw, (0, 2, 3, 1))
    x = jnp.pad(x, ((0, 0), (1, 1), (1, 1), (0, 0)))
    x = x.reshape(N * SP, IN_CH)
    x_slab = jnp.pad(x, ((0, M_PAD - N * SP), (0, C_PAD - IN_CH)))

    operands = [x_slab, prep["w_all"], prep["cshift"], prep["mask"],
                prep["head_w"], prep["head_shift"], prep["a_all"], prep["sel"],
                prep["head_bias"], prep["wv2"], prep["v2b"]]

    logits_pad, value_pad = pl.pallas_call(
        _alphazero_kernel,
        out_shape=(jax.ShapeDtypeStruct((N_PAD, 128), jnp.float32),
                   jax.ShapeDtypeStruct((N_PAD, 128), jnp.float32)),
        in_specs=[pl.BlockSpec(memory_space=pltpu.MemorySpace.VMEM)] * len(operands),
        out_specs=(pl.BlockSpec(memory_space=pltpu.MemorySpace.VMEM),
                   pl.BlockSpec(memory_space=pltpu.MemorySpace.VMEM)),
    )(*operands)
    return logits_pad[:N, :POLICY_SIZE], value_pad[:N, :1]


# ----------------------------------------------------------------------------
# Parameters (deterministic, synthetic) + static kernel-layout preparation.
# ----------------------------------------------------------------------------
def bn_fold(gamma, beta, mean, var, eps=1e-5):
    scale = gamma / jnp.sqrt(var + eps)
    return scale, beta - mean * scale


def _bn_params(key, c):
    k1, k2, k3, k4 = jax.random.split(key, 4)
    gamma = 1.0 + 0.1 * jax.random.normal(k1, (c,), jnp.float32)
    beta = 0.1 * jax.random.normal(k2, (c,), jnp.float32)
    mean = 0.1 * jax.random.normal(k3, (c,), jnp.float32)
    var = 1.0 + 0.1 * jnp.abs(jax.random.normal(k4, (c,), jnp.float32))
    return bn_fold(gamma, beta, mean, var)


def init_params(key):
    keys = iter(jax.random.split(key, 32))

    def nrm(shape):
        return 0.1 * jax.random.normal(next(keys), shape, jnp.float32)

    p = {"conv_init_w": nrm((3, 3, IN_CH, FILTERS)),        # HWIO
         "bn_init": _bn_params(next(keys), FILTERS),
         "blocks": []}
    for _ in range(NUM_BLOCKS):
        p["blocks"].append({
            "w1": nrm((3, 3, FILTERS, FILTERS)), "bn1": _bn_params(next(keys), FILTERS),
            "w2": nrm((3, 3, FILTERS, FILTERS)), "bn2": _bn_params(next(keys), FILTERS)})
    p["policy_conv_w"] = nrm((FILTERS, 2))
    p["policy_conv_b"] = nrm((2,))
    p["policy_bn"] = _bn_params(next(keys), 2)
    p["policy_fc_w"] = nrm((2 * H * W, POLICY_SIZE))
    p["policy_fc_b"] = nrm((POLICY_SIZE,))
    p["value_conv_w"] = nrm((FILTERS, 1))
    p["value_conv_b"] = nrm((1,))
    p["value_bn"] = _bn_params(next(keys), 1)
    p["value_fc1_w"] = nrm((H * W, VALUE_HIDDEN))
    p["value_fc1_b"] = nrm((VALUE_HIDDEN,))
    p["value_fc2_w"] = nrm((VALUE_HIDDEN, 1))
    p["value_fc2_b"] = nrm((1,))
    return p


def prepare(params):
    """Fold BN into weights, pack 4 taps per K-banded (128,128) weight, pad to
    lane/sublane-dense shapes, pre-expand head FC weights (done once, offline)."""
    def pack_conv(w_hwio, scale):
        ci, co = int(w_hwio.shape[2]), int(w_hwio.shape[3])
        w = (w_hwio * scale[None, None, None, :]).reshape(9, ci, co)
        groups = []
        for taps in TAP_GROUPS:
            wg = jnp.zeros((C_PAD, C_PAD), jnp.float32)
            for band, t in enumerate(taps):
                wg = wg.at[band * BAND:band * BAND + ci, :co].set(w[t])
            groups.append(wg)
        return jnp.stack(groups)                       # (3, C_PAD, C_PAD)

    def pad_shift(t):
        return jnp.pad(t, (0, C_PAD - t.shape[0])).reshape(1, C_PAD)

    w_list, s_list = [], []
    s0, t0 = params["bn_init"]
    w_list.append(pack_conv(params["conv_init_w"], s0)); s_list.append(pad_shift(t0))
    for blk in params["blocks"]:
        s1, t1 = blk["bn1"]; s2, t2 = blk["bn2"]
        w_list.append(pack_conv(blk["w1"], s1)); s_list.append(pad_shift(t1))
        w_list.append(pack_conv(blk["w2"], s2)); s_list.append(pad_shift(t2))
    w_all = jnp.concatenate(w_list, axis=0).astype(jnp.bfloat16)   # (5*3, 128, 128)
    cshift = jnp.stack(s_list)                                     # (NUM_CONVS, 1, C_PAD)

    # Fused 1x1 policy (cols 0,1) + value (col 2) conv, BN + conv bias folded.
    ps, pt = params["policy_bn"]
    vs, vt = params["value_bn"]
    head_w = jnp.zeros((C_PAD, C_PAD), jnp.float32)
    head_w = head_w.at[:FILTERS, 0:2].set(params["policy_conv_w"] * ps[None, :])
    head_w = head_w.at[:FILTERS, 2:3].set(params["value_conv_w"] * vs[None, :])
    head_w = head_w.astype(jnp.bfloat16)
    head_shift = jnp.zeros((1, C_PAD), jnp.float32)
    head_shift = head_shift.at[0, 0:2].set(params["policy_conv_b"] * ps + pt)
    head_shift = head_shift.at[0, 2:3].set(params["value_conv_b"] * vs + vt)

    # Row metadata for the padded (n, i, j) layout.
    r = np.arange(M_PAD)
    n_idx, q = r // SP, r % SP
    i, j = q // WP, q % WP
    valid = (r < N * SP) & (i >= 1) & (i <= H) & (j >= 1) & (j <= W)
    sidx = np.where(valid, (i - 1) * W + (j - 1), 0)           # h*W + w
    valid_f = jnp.asarray(valid.astype(np.float32))
    sidx_j = jnp.asarray(sidx)
    mask_full = jnp.tile(valid_f[:, None], (1, C_PAD))         # full-width, hoisted

    # Row-expanded head FC weights (fold NCHW flatten permutation + FC).
    pfc_w, vfc1_w = params["policy_fc_w"], params["value_fc1_w"]
    a0 = jnp.zeros((M_PAD, HEAD_LANES), jnp.float32).at[:, :POLICY_SIZE].set(
        pfc_w[sidx_j, :] * valid_f[:, None])                   # policy channel 0
    a1 = jnp.zeros((M_PAD, HEAD_LANES), jnp.float32).at[:, :POLICY_SIZE].set(
        pfc_w[H * W + sidx_j, :] * valid_f[:, None])           # policy channel 1
    a2 = jnp.zeros((M_PAD, HEAD_LANES), jnp.float32).at[:, 128:128 + VALUE_HIDDEN].set(
        vfc1_w[sidx_j, :] * valid_f[:, None])                  # value channel
    a_all = jnp.stack([a0, a1, a2])

    sel = np.zeros((N_PAD, M_PAD), np.float32)
    for nn in range(N):
        sel[nn, nn * SP:(nn + 1) * SP] = 1.0                   # per-sample row selector
    sel = jnp.asarray(sel).astype(jnp.bfloat16)                # 0/1: exact in bf16

    head_bias = jnp.zeros((1, HEAD_LANES), jnp.float32)
    head_bias = head_bias.at[0, :POLICY_SIZE].set(params["policy_fc_b"])
    head_bias = head_bias.at[0, 128:128 + VALUE_HIDDEN].set(params["value_fc1_b"])

    wv2 = jnp.zeros((VALUE_HIDDEN, C_PAD), jnp.float32).at[:, 0:1].set(
        params["value_fc2_w"]).astype(jnp.bfloat16)
    v2b = jnp.zeros((1, C_PAD), jnp.float32).at[0, 0].set(params["value_fc2_b"][0])

    return {"w_all": w_all, "cshift": cshift, "mask": mask_full,
            "head_w": head_w, "head_shift": head_shift, "a_all": a_all, "sel": sel,
            "head_bias": head_bias, "wv2": wv2, "v2b": v2b}


# ----------------------------------------------------------------------------
# Pure-JAX f32 reference (eval-mode semantics of AlphaZeroResNet.forward).
# ----------------------------------------------------------------------------
def forward_reference(x_nchw, params):
    dn = ("NHWC", "HWIO", "NHWC")

    def conv3x3(x, w):
        return lax.conv_general_dilated(x, w, (1, 1), ((1, 1), (1, 1)),
                                        dimension_numbers=dn)

    x = jnp.transpose(x_nchw, (0, 2, 3, 1))
    s, t = params["bn_init"]
    x = jnp.maximum(conv3x3(x, params["conv_init_w"]) * s + t, 0.0)
    for blk in params["blocks"]:
        s1, t1 = blk["bn1"]; s2, t2 = blk["bn2"]
        y = jnp.maximum(conv3x3(x, blk["w1"]) * s1 + t1, 0.0)
        y = conv3x3(y, blk["w2"]) * s2 + t2
        x = jnp.maximum(y + x, 0.0)
    ps, pt = params["policy_bn"]
    p = jnp.maximum((x @ params["policy_conv_w"] + params["policy_conv_b"]) * ps + pt, 0.0)
    p = jnp.transpose(p, (0, 3, 1, 2)).reshape(N, -1)          # NCHW flatten
    logits = p @ params["policy_fc_w"] + params["policy_fc_b"]
    vs, vt = params["value_bn"]
    v = jnp.maximum((x @ params["value_conv_w"] + params["value_conv_b"]) * vs + vt, 0.0)
    v = jnp.transpose(v, (0, 3, 1, 2)).reshape(N, -1)
    v = jnp.maximum(v @ params["value_fc1_w"] + params["value_fc1_b"], 0.0)
    return logits, jnp.tanh(v @ params["value_fc2_w"] + params["value_fc2_b"])


if __name__ == "__main__":
    key = jax.random.PRNGKey(0)
    kx, kp = jax.random.split(key)

    x = jax.random.normal(kx, (N, IN_CH, H, W), jnp.float32)   # NCHW like PyTorch
    params = init_params(kp)
    prep = prepare(params)

    logits, value = alphazero_forward(x, prep)
    jax.block_until_ready((logits, value))

    ref_logits, ref_value = forward_reference(x, params)
    assert logits.shape == (N, POLICY_SIZE), logits.shape
    assert value.shape == (N, 1), value.shape
    assert bool(jnp.all(jnp.isfinite(logits))) and bool(jnp.all(jnp.isfinite(value)))
    assert bool(jnp.all(jnp.abs(value) <= 1.0))
    # bf16 MXU operands (f32 accumulation): loosened tolerance vs f32 reference.
    assert bool(jnp.allclose(logits, ref_logits, atol=5e-2, rtol=5e-2))
    assert bool(jnp.allclose(value, ref_value, atol=5e-2, rtol=5e-2))
    print("KERNEL_OK")
</pallas_src>

<mosaic_0001>
module attributes {stable_mosaic.version = 11 : i64} {
  func.func @_alphazero_kernel(%arg0: memref<104x128xf32, #tpu.memory_space<vmem>>, %arg1: memref<15x128x128xbf16, #tpu.memory_space<vmem>>, %arg2: memref<5x1x128xf32, #tpu.memory_space<vmem>>, %arg3: memref<104x128xf32, #tpu.memory_space<vmem>>, %arg4: memref<128x128xbf16, #tpu.memory_space<vmem>>, %arg5: memref<1x128xf32, #tpu.memory_space<vmem>>, %arg6: memref<3x104x256xf32, #tpu.memory_space<vmem>>, %arg7: memref<8x104xbf16, #tpu.memory_space<vmem>>, %arg8: memref<1x256xf32, #tpu.memory_space<vmem>>, %arg9: memref<128x128xbf16, #tpu.memory_space<vmem>>, %arg10: memref<1x128xf32, #tpu.memory_space<vmem>>, %arg11: memref<8x128xf32, #tpu.memory_space<vmem>>, %arg12: memref<8x128xf32, #tpu.memory_space<vmem>>) attributes {dimension_semantics = [], scalar_prefetch = 0 : i64, scratch_operands = 0 : i64, tpu.core_type = #tpu.core_type<tc>} {
    %c0 = arith.constant 0 : index
    %c0_0 = arith.constant 0 : index
    %0 = vector.load %arg3[%c0, %c0_0] : memref<104x128xf32, #tpu.memory_space<vmem>>, vector<104x128xf32>
    %c0_1 = arith.constant 0 : index
    %c0_2 = arith.constant 0 : index
    %1 = vector.load %arg0[%c0_1, %c0_2] : memref<104x128xf32, #tpu.memory_space<vmem>>, vector<104x128xf32>
    %c8_i32 = arith.constant 8 : i32
    %2 = tpu.dynamic_rotate %1 by %c8_i32 dim 0 : vector<104x128xf32>, i32 -> vector<104x128xf32>
    %c7_i32 = arith.constant 7 : i32
    %3 = tpu.dynamic_rotate %1 by %c7_i32 dim 0 : vector<104x128xf32>, i32 -> vector<104x128xf32>
    %c32_i32 = arith.constant 32 : i32
    %4 = tpu.dynamic_rotate %3 by %c32_i32 dim 1 : vector<104x128xf32>, i32 -> vector<104x128xf32>
    %5 = arith.addf %2, %4 : vector<104x128xf32>
    %c6_i32 = arith.constant 6 : i32
    %6 = tpu.dynamic_rotate %1 by %c6_i32 dim 0 : vector<104x128xf32>, i32 -> vector<104x128xf32>
    %c64_i32 = arith.constant 64 : i32
    %7 = tpu.dynamic_rotate %6 by %c64_i32 dim 1 : vector<104x128xf32>, i32 -> vector<104x128xf32>
    %8 = arith.addf %5, %7 : vector<104x128xf32>
    %c1_i32 = arith.constant 1 : i32
    %9 = tpu.dynamic_rotate %1 by %c1_i32 dim 0 : vector<104x128xf32>, i32 -> vector<104x128xf32>
    %c96_i32 = arith.constant 96 : i32
    %10 = tpu.dynamic_rotate %9 by %c96_i32 dim 1 : vector<104x128xf32>, i32 -> vector<104x128xf32>
    %11 = arith.addf %8, %10 : vector<104x128xf32>
    %12 = arith.truncf %11 : vector<104x128xf32> to vector<104x128xbf16>
    %c0_3 = arith.constant 0 : index
    %c0_4 = arith.constant 0 : index
    %c0_5 = arith.constant 0 : index
    %13 = vector.load %arg1[%c0_3, %c0_4, %c0_5] : memref<15x128x128xbf16, #tpu.memory_space<vmem>>, vector<1x128x128xbf16>
    %14 = vector.shape_cast %13 : vector<1x128x128xbf16> to vector<128x128xbf16>
    %cst = arith.constant dense<0.000000e+00> : vector<104x128xf32>
    %15 = tpu.matmul %12, %14, %cst {dimension_numbers = #tpu.dot_dimension_numbers<[1], [0], [0], [1], [0, 0, 1, 1], [], []>} : vector<104x128xbf16>, vector<128x128xbf16>, vector<104x128xf32> -> vector<104x128xf32>
    %c103_i32 = arith.constant 103 : i32
    %16 = tpu.dynamic_rotate %1 by %c103_i32 dim 0 : vector<104x128xf32>, i32 -> vector<104x128xf32>
    %c32_i32_6 = arith.constant 32 : i32
    %17 = tpu.dynamic_rotate %16 by %c32_i32_6 dim 1 : vector<104x128xf32>, i32 -> vector<104x128xf32>
    %18 = arith.addf %1, %17 : vector<104x128xf32>
    %c98_i32 = arith.constant 98 : i32
    %19 = tpu.dynamic_rotate %1 by %c98_i32 dim 0 : vector<104x128xf32>, i32 -> vector<104x128xf32>
    %c64_i32_7 = arith.constant 64 : i32
    %20 = tpu.dynamic_rotate %19 by %c64_i32_7 dim 1 : vector<104x128xf32>, i32 -> vector<104x128xf32>
    %21 = arith.addf %18, %20 : vector<104x128xf32>
    %c97_i32 = arith.constant 97 : i32
    %22 = tpu.dynamic_rotate %1 by %c97_i32 dim 0 : vector<104x128xf32>, i32 -> vector<104x128xf32>
    %c96_i32_8 = arith.constant 96 : i32
    %23 = tpu.dynamic_rotate %22 by %c96_i32_8 dim 1 : vector<104x128xf32>, i32 -> vector<104x128xf32>
    %24 = arith.addf %21, %23 : vector<104x128xf32>
    %25 = arith.truncf %24 : vector<104x128xf32> to vector<104x128xbf16>
    %c1 = arith.constant 1 : index
    %c0_9 = arith.constant 0 : index
    %c0_10 = arith.constant 0 : index
    %26 = vector.load %arg1[%c1, %c0_9, %c0_10] : memref<15x128x128xbf16, #tpu.memory_space<vmem>>, vector<1x128x128xbf16>
    %27 = vector.shape_cast %26 : vector<1x128x128xbf16> to vector<128x128xbf16>
    %cst_11 = arith.constant dense<0.000000e+00> : vector<104x128xf32>
    %28 = tpu.matmul %25, %27, %cst_11 {dimension_numbers = #tpu.dot_dimension_numbers<[1], [0], [0], [1], [0, 0, 1, 1], [], []>} : vector<104x128xbf16>, vector<128x128xbf16>, vector<104x128xf32> -> vector<104x128xf32>
    %c96_i32_12 = arith.constant 96 : i32
    %29 = tpu.dynamic_rotate %1 by %c96_i32_12 dim 0 : vector<104x128xf32>, i32 -> vector<104x128xf32>
    %30 = arith.truncf %29 : vector<104x128xf32> to vector<104x128xbf16>
    %c2 = arith.constant 2 : index
    %c0_13 = arith.constant 0 : index
    %c0_14 = arith.constant 0 : index
    %31 = vector.load %arg1[%c2, %c0_13, %c0_14] : memref<15x128x128xbf16, #tpu.memory_space<vmem>>, vector<1x128x128xbf16>
    %32 = vector.shape_cast %31 : vector<1x128x128xbf16> to vector<128x128xbf16>
    %cst_15 = arith.constant dense<0.000000e+00> : vector<104x128xf32>
    %33 = tpu.matmul %30, %32, %cst_15 {dimension_numbers = #tpu.dot_dimension_numbers<[1], [0], [0], [1], [0, 0, 1, 1], [], []>} : vector<104x128xbf16>, vector<128x128xbf16>, vector<104x128xf32> -> vector<104x128xf32>
    %34 = arith.addf %15, %28 : vector<104x128xf32>
    %35 = arith.addf %34, %33 : vector<104x128xf32>
    %c0_16 = arith.constant 0 : index
    %c0_17 = arith.constant 0 : index
    %c0_18 = arith.constant 0 : index
    %36 = vector.load %arg2[%c0_16, %c0_17, %c0_18] : memref<5x1x128xf32, #tpu.memory_space<vmem>>, vector<1x1x128xf32>
    %37 = vector.shape_cast %36 : vector<1x1x128xf32> to vector<1x128xf32>
    %38 = vector.broadcast %37 : vector<1x128xf32> to vector<104x128xf32>
    %39 = arith.addf %35, %38 : vector<104x128xf32>
    %cst_19 = arith.constant 0.000000e+00 : f32
    %40 = vector.broadcast %cst_19 : f32 to vector<104x128xf32>
    %41 = arith.maximumf %39, %40 : vector<104x128xf32>
    %42 = arith.mulf %41, %0 : vector<104x128xf32>
    %c8_i32_20 = arith.constant 8 : i32
    %43 = tpu.dynamic_rotate %42 by %c8_i32_20 dim 0 : vector<104x128xf32>, i32 -> vector<104x128xf32>
    %c7_i32_21 = arith.constant 7 : i32
    %44 = tpu.dynamic_rotate %42 by %c7_i32_21 dim 0 : vector<104x128xf32>, i32 -> vector<104x128xf32>
    %c32_i32_22 = arith.constant 32 : i32
    %45 = tpu.dynamic_rotate %44 by %c32_i32_22 dim 1 : vector<104x128xf32>, i32 -> vector<104x128xf32>
    %46 = arith.addf %43, %45 : vector<104x128xf32>
    %c6_i32_23 = arith.constant 6 : i32
    %47 = tpu.dynamic_rotate %42 by %c6_i32_23 dim 0 : vector<104x128xf32>, i32 -> vector<104x128xf32>
    %c64_i32_24 = arith.constant 64 : i32
    %48 = tpu.dynamic_rotate %47 by %c64_i32_24 dim 1 : vector<104x128xf32>, i32 -> vector<104x128xf32>
    %49 = arith.addf %46, %48 : vector<104x128xf32>
    %c1_i32_25 = arith.constant 1 : i32
    %50 = tpu.dynamic_rotate %42 by %c1_i32_25 dim 0 : vector<104x128xf32>, i32 -> vector<104x128xf32>
    %c96_i32_26 = arith.constant 96 : i32
    %51 = tpu.dynamic_rotate %50 by %c96_i32_26 dim 1 : vector<104x128xf32>, i32 -> vector<104x128xf32>
    %52 = arith.addf %49, %51 : vector<104x128xf32>
    %53 = arith.truncf %52 : vector<104x128xf32> to vector<104x128xbf16>
    %c3 = arith.constant 3 : index
    %c0_27 = arith.constant 0 : index
    %c0_28 = arith.constant 0 : index
    %54 = vector.load %arg1[%c3, %c0_27, %c0_28] : memref<15x128x128xbf16, #tpu.memory_space<vmem>>, vector<1x128x128xbf16>
    %55 = vector.shape_cast %54 : vector<1x128x128xbf16> to vector<128x128xbf16>
    %cst_29 = arith.constant dense<0.000000e+00> : vector<104x128xf32>
    %56 = tpu.matmul %53, %55, %cst_29 {dimension_numbers = #tpu.dot_dimension_numbers<[1], [0], [0], [1], [0, 0, 1, 1], [], []>} : vector<104x128xbf16>, vector<128x128xbf16>, vector<104x128xf32> -> vector<104x128xf32>
    %c103_i32_30 = arith.constant 103 : i32
    %57 = tpu.dynamic_rotate %42 by %c103_i32_30 dim 0 : vector<104x128xf32>, i32 -> vector<104x128xf32>
    %c32_i32_31 = arith.constant 32 : i32
    %58 = tpu.dynamic_rotate %57 by %c32_i32_31 dim 1 : vector<104x128xf32>, i32 -> vector<104x128xf32>
    %59 = arith.addf %42, %58 : vector<104x128xf32>
    %c98_i32_32 = arith.constant 98 : i32
    %60 = tpu.dynamic_rotate %42 by %c98_i32_32 dim 0 : vector<104x128xf32>, i32 -> vector<104x128xf32>
    %c64_i32_33 = arith.constant 64 : i32
    %61 = tpu.dynamic_rotate %60 by %c64_i32_33 dim 1 : vector<104x128xf32>, i32 -> vector<104x128xf32>
    %62 = arith.addf %59, %61 : vector<104x128xf32>
    %c97_i32_34 = arith.constant 97 : i32
    %63 = tpu.dynamic_rotate %42 by %c97_i32_34 dim 0 : vector<104x128xf32>, i32 -> vector<104x128xf32>
    %c96_i32_35 = arith.constant 96 : i32
    %64 = tpu.dynamic_rotate %63 by %c96_i32_35 dim 1 : vector<104x128xf32>, i32 -> vector<104x128xf32>
    %65 = arith.addf %62, %64 : vector<104x128xf32>
    %66 = arith.truncf %65 : vector<104x128xf32> to vector<104x128xbf16>
    %c4 = arith.constant 4 : index
    %c0_36 = arith.constant 0 : index
    %c0_37 = arith.constant 0 : index
    %67 = vector.load %arg1[%c4, %c0_36, %c0_37] : memref<15x128x128xbf16, #tpu.memory_space<vmem>>, vector<1x128x128xbf16>
    %68 = vector.shape_cast %67 : vector<1x128x128xbf16> to vector<128x128xbf16>
    %cst_38 = arith.constant dense<0.000000e+00> : vector<104x128xf32>
    %69 = tpu.matmul %66, %68, %cst_38 {dimension_numbers = #tpu.dot_dimension_numbers<[1], [0], [0], [1], [0, 0, 1, 1], [], []>} : vector<104x128xbf16>, vector<128x128xbf16>, vector<104x128xf32> -> vector<104x128xf32>
    %c96_i32_39 = arith.constant 96 : i32
    %70 = tpu.dynamic_rotate %42 by %c96_i32_39 dim 0 : vector<104x128xf32>, i32 -> vector<104x128xf32>
    %71 = arith.truncf %70 : vector<104x128xf32> to vector<104x128xbf16>
    %c5 = arith.constant 5 : index
    %c0_40 = arith.constant 0 : index
    %c0_41 = arith.constant 0 : index
    %72 = vector.load %arg1[%c5, %c0_40, %c0_41] : memref<15x128x128xbf16, #tpu.memory_space<vmem>>, vector<1x128x128xbf16>
    %73 = vector.shape_cast %72 : vector<1x128x128xbf16> to vector<128x128xbf16>
    %cst_42 = arith.constant dense<0.000000e+00> : vector<104x128xf32>
    %74 = tpu.matmul %71, %73, %cst_42 {dimension_numbers = #tpu.dot_dimension_numbers<[1], [0], [0], [1], [0, 0, 1, 1], [], []>} : vector<104x128xbf16>, vector<128x128xbf16>, vector<104x128xf32> -> vector<104x128xf32>
    %75 = arith.addf %56, %69 : vector<104x128xf32>
    %76 = arith.addf %75, %74 : vector<104x128xf32>
    %c1_43 = arith.constant 1 : index
    %c0_44 = arith.constant 0 : index
    %c0_45 = arith.constant 0 : index
    %77 = vector.load %arg2[%c1_43, %c0_44, %c0_45] : memref<5x1x128xf32, #tpu.memory_space<vmem>>, vector<1x1x128xf32>
    %78 = vector.shape_cast %77 : vector<1x1x128xf32> to vector<1x128xf32>
    %79 = vector.broadcast %78 : vector<1x128xf32> to vector<104x128xf32>
    %80 = arith.addf %76, %79 : vector<104x128xf32>
    %cst_46 = arith.constant 0.000000e+00 : f32
    %81 = vector.broadcast %cst_46 : f32 to vector<104x128xf32>
    %82 = arith.maximumf %80, %81 : vector<104x128xf32>
    %83 = arith.mulf %82, %0 : vector<104x128xf32>
    %c8_i32_47 = arith.constant 8 : i32
    %84 = tpu.dynamic_rotate %83 by %c8_i32_47 dim 0 : vector<104x128xf32>, i32 -> vector<104x128xf32>
    %c7_i32_48 = arith.constant 7 : i32
    %85 = tpu.dynamic_rotate %83 by %c7_i32_48 dim 0 : vector<104x128xf32>, i32 -> vector<104x128xf32>
    %c32_i32_49 = arith.constant 32 : i32
    %86 = tpu.dynamic_rotate %85 by %c32_i32_49 dim 1 : vector<104x128xf32>, i32 -> vector<104x128xf32>
    %87 = arith.addf %84, %86 : vector<104x128xf32>
    %c6_i32_50 = arith.constant 6 : i32
    %88 = tpu.dynamic_rotate %83 by %c6_i32_50 dim 0 : vector<104x128xf32>, i32 -> vector<104x128xf32>
    %c64_i32_51 = arith.constant 64 : i32
    %89 = tpu.dynamic_rotate %88 by %c64_i32_51 dim 1 : vector<104x128xf32>, i32 -> vector<104x128xf32>
    %90 = arith.addf %87, %89 : vector<104x128xf32>
    %c1_i32_52 = arith.constant 1 : i32
    %91 = tpu.dynamic_rotate %83 by %c1_i32_52 dim 0 : vector<104x128xf32>, i32 -> vector<104x128xf32>
    %c96_i32_53 = arith.constant 96 : i32
    %92 = tpu.dynamic_rotate %91 by %c96_i32_53 dim 1 : vector<104x128xf32>, i32 -> vector<104x128xf32>
    %93 = arith.addf %90, %92 : vector<104x128xf32>
    %94 = arith.truncf %93 : vector<104x128xf32> to vector<104x128xbf16>
    %c6 = arith.constant 6 : index
    %c0_54 = arith.constant 0 : index
    %c0_55 = arith.constant 0 : index
    %95 = vector.load %arg1[%c6, %c0_54, %c0_55] : memref<15x128x128xbf16, #tpu.memory_space<vmem>>, vector<1x128x128xbf16>
    %96 = vector.shape_cast %95 : vector<1x128x128xbf16> to vector<128x128xbf16>
    %cst_56 = arith.constant dense<0.000000e+00> : vector<104x128xf32>
    %97 = tpu.matmul %94, %96, %cst_56 {dimension_numbers = #tpu.dot_dimension_numbers<[1], [0], [0], [1], [0, 0, 1, 1], [], []>} : vector<104x128xbf16>, vector<128x128xbf16>, vector<104x128xf32> -> vector<104x128xf32>
    %c103_i32_57 = arith.constant 103 : i32
    %98 = tpu.dynamic_rotate %83 by %c103_i32_57 dim 0 : vector<104x128xf32>, i32 -> vector<104x128xf32>
    %c32_i32_58 = arith.constant 32 : i32
    %99 = tpu.dynamic_rotate %98 by %c32_i32_58 dim 1 : vector<104x128xf32>, i32 -> vector<104x128xf32>
    %100 = arith.addf %83, %99 : vector<104x128xf32>
    %c98_i32_59 = arith.constant 98 : i32
    %101 = tpu.dynamic_rotate %83 by %c98_i32_59 dim 0 : vector<104x128xf32>, i32 -> vector<104x128xf32>
    %c64_i32_60 = arith.constant 64 : i32
    %102 = tpu.dynamic_rotate %101 by %c64_i32_60 dim 1 : vector<104x128xf32>, i32 -> vector<104x128xf32>
    %103 = arith.addf %100, %102 : vector<104x128xf32>
    %c97_i32_61 = arith.constant 97 : i32
    %104 = tpu.dynamic_rotate %83 by %c97_i32_61 dim 0 : vector<104x128xf32>, i32 -> vector<104x128xf32>
    %c96_i32_62 = arith.constant 96 : i32
    %105 = tpu.dynamic_rotate %104 by %c96_i32_62 dim 1 : vector<104x128xf32>, i32 -> vector<104x128xf32>
    %106 = arith.addf %103, %105 : vector<104x128xf32>
    %107 = arith.truncf %106 : vector<104x128xf32> to vector<104x128xbf16>
    %c7 = arith.constant 7 : index
    %c0_63 = arith.constant 0 : index
    %c0_64 = arith.constant 0 : index
    %108 = vector.load %arg1[%c7, %c0_63, %c0_64] : memref<15x128x128xbf16, #tpu.memory_space<vmem>>, vector<1x128x128xbf16>
    %109 = vector.shape_cast %108 : vector<1x128x128xbf16> to vector<128x128xbf16>
    %cst_65 = arith.constant dense<0.000000e+00> : vector<104x128xf32>
    %110 = tpu.matmul %107, %109, %cst_65 {dimension_numbers = #tpu.dot_dimension_numbers<[1], [0], [0], [1], [0, 0, 1, 1], [], []>} : vector<104x128xbf16>, vector<128x128xbf16>, vector<104x128xf32> -> vector<104x128xf32>
    %c96_i32_66 = arith.constant 96 : i32
    %111 = tpu.dynamic_rotate %83 by %c96_i32_66 dim 0 : vector<104x128xf32>, i32 -> vector<104x128xf32>
    %112 = arith.truncf %111 : vector<104x128xf32> to vector<104x128xbf16>
    %c8 = arith.constant 8 : index
    %c0_67 = arith.constant 0 : index
    %c0_68 = arith.constant 0 : index
    %113 = vector.load %arg1[%c8, %c0_67, %c0_68] : memref<15x128x128xbf16, #tpu.memory_space<vmem>>, vector<1x128x128xbf16>
    %114 = vector.shape_cast %113 : vector<1x128x128xbf16> to vector<128x128xbf16>
    %cst_69 = arith.constant dense<0.000000e+00> : vector<104x128xf32>
    %115 = tpu.matmul %112, %114, %cst_69 {dimension_numbers = #tpu.dot_dimension_numbers<[1], [0], [0], [1], [0, 0, 1, 1], [], []>} : vector<104x128xbf16>, vector<128x128xbf16>, vector<104x128xf32> -> vector<104x128xf32>
    %116 = arith.addf %97, %110 : vector<104x128xf32>
    %117 = arith.addf %116, %115 : vector<104x128xf32>
    %c2_70 = arith.constant 2 : index
    %c0_71 = arith.constant 0 : index
    %c0_72 = arith.constant 0 : index
    %118 = vector.load %arg2[%c2_70, %c0_71, %c0_72] : memref<5x1x128xf32, #tpu.memory_space<vmem>>, vector<1x1x128xf32>
    %119 = vector.shape_cast %118 : vector<1x1x128xf32> to vector<1x128xf32>
    %120 = vector.broadcast %119 : vector<1x128xf32> to vector<104x128xf32>
    %121 = arith.addf %117, %120 : vector<104x128xf32>
    %122 = arith.addf %121, %42 : vector<104x128xf32>
    %cst_73 = arith.constant 0.000000e+00 : f32
    %123 = vector.broadcast %cst_73 : f32 to vector<104x128xf32>
    %124 = arith.maximumf %122, %123 : vector<104x128xf32>
    %125 = arith.mulf %124, %0 : vector<104x128xf32>
    %c8_i32_74 = arith.constant 8 : i32
    %126 = tpu.dynamic_rotate %125 by %c8_i32_74 dim 0 : vector<104x128xf32>, i32 -> vector<104x128xf32>
    %c7_i32_75 = arith.constant 7 : i32
    %127 = tpu.dynamic_rotate %125 by %c7_i32_75 dim 0 : vector<104x128xf32>, i32 -> vector<104x128xf32>
    %c32_i32_76 = arith.constant 32 : i32
    %128 = tpu.dynamic_rotate %127 by %c32_i32_76 dim 1 : vector<104x128xf32>, i32 -> vector<104x128xf32>
    %129 = arith.addf %126, %128 : vector<104x128xf32>
    %c6_i32_77 = arith.constant 6 : i32
    %130 = tpu.dynamic_rotate %125 by %c6_i32_77 dim 0 : vector<104x128xf32>, i32 -> vector<104x128xf32>
    %c64_i32_78 = arith.constant 64 : i32
    %131 = tpu.dynamic_rotate %130 by %c64_i32_78 dim 1 : vector<104x128xf32>, i32 -> vector<104x128xf32>
    %132 = arith.addf %129, %131 : vector<104x128xf32>
    %c1_i32_79 = arith.constant 1 : i32
    %133 = tpu.dynamic_rotate %125 by %c1_i32_79 dim 0 : vector<104x128xf32>, i32 -> vector<104x128xf32>
    %c96_i32_80 = arith.constant 96 : i32
    %134 = tpu.dynamic_rotate %133 by %c96_i32_80 dim 1 : vector<104x128xf32>, i32 -> vector<104x128xf32>
    %135 = arith.addf %132, %134 : vector<104x128xf32>
    %136 = arith.truncf %135 : vector<104x128xf32> to vector<104x128xbf16>
    %c9 = arith.constant 9 : index
    %c0_81 = arith.constant 0 : index
    %c0_82 = arith.constant 0 : index
    %137 = vector.load %arg1[%c9, %c0_81, %c0_82] : memref<15x128x128xbf16, #tpu.memory_space<vmem>>, vector<1x128x128xbf16>
    %138 = vector.shape_cast %137 : vector<1x128x128xbf16> to vector<128x128xbf16>
    %cst_83 = arith.constant dense<0.000000e+00> : vector<104x128xf32>
    %139 = tpu.matmul %136, %138, %cst_83 {dimension_numbers = #tpu.dot_dimension_numbers<[1], [0], [0], [1], [0, 0, 1, 1], [], []>} : vector<104x128xbf16>, vector<128x128xbf16>, vector<104x128xf32> -> vector<104x128xf32>
    %c103_i32_84 = arith.constant 103 : i32
    %140 = tpu.dynamic_rotate %125 by %c103_i32_84 dim 0 : vector<104x128xf32>, i32 -> vector<104x128xf32>
    %c32_i32_85 = arith.constant 32 : i32
    %141 = tpu.dynamic_rotate %140 by %c32_i32_85 dim 1 : vector<104x128xf32>, i32 -> vector<104x128xf32>
    %142 = arith.addf %125, %141 : vector<104x128xf32>
    %c98_i32_86 = arith.constant 98 : i32
    %143 = tpu.dynamic_rotate %125 by %c98_i32_86 dim 0 : vector<104x128xf32>, i32 -> vector<104x128xf32>
    %c64_i32_87 = arith.constant 64 : i32
    %144 = tpu.dynamic_rotate %143 by %c64_i32_87 dim 1 : vector<104x128xf32>, i32 -> vector<104x128xf32>
    %145 = arith.addf %142, %144 : vector<104x128xf32>
    %c97_i32_88 = arith.constant 97 : i32
    %146 = tpu.dynamic_rotate %125 by %c97_i32_88 dim 0 : vector<104x128xf32>, i32 -> vector<104x128xf32>
    %c96_i32_89 = arith.constant 96 : i32
    %147 = tpu.dynamic_rotate %146 by %c96_i32_89 dim 1 : vector<104x128xf32>, i32 -> vector<104x128xf32>
    %148 = arith.addf %145, %147 : vector<104x128xf32>
    %149 = arith.truncf %148 : vector<104x128xf32> to vector<104x128xbf16>
    %c10 = arith.constant 10 : index
    %c0_90 = arith.constant 0 : index
    %c0_91 = arith.constant 0 : index
    %150 = vector.load %arg1[%c10, %c0_90, %c0_91] : memref<15x128x128xbf16, #tpu.memory_space<vmem>>, vector<1x128x128xbf16>
    %151 = vector.shape_cast %150 : vector<1x128x128xbf16> to vector<128x128xbf16>
    %cst_92 = arith.constant dense<0.000000e+00> : vector<104x128xf32>
    %152 = tpu.matmul %149, %151, %cst_92 {dimension_numbers = #tpu.dot_dimension_numbers<[1], [0], [0], [1], [0, 0, 1, 1], [], []>} : vector<104x128xbf16>, vector<128x128xbf16>, vector<104x128xf32> -> vector<104x128xf32>
    %c96_i32_93 = arith.constant 96 : i32
    %153 = tpu.dynamic_rotate %125 by %c96_i32_93 dim 0 : vector<104x128xf32>, i32 -> vector<104x128xf32>
    %154 = arith.truncf %153 : vector<104x128xf32> to vector<104x128xbf16>
    %c11 = arith.constant 11 : index
    %c0_94 = arith.constant 0 : index
    %c0_95 = arith.constant 0 : index
    %155 = vector.load %arg1[%c11, %c0_94, %c0_95] : memref<15x128x128xbf16, #tpu.memory_space<vmem>>, vector<1x128x128xbf16>
    %156 = vector.shape_cast %155 : vector<1x128x128xbf16> to vector<128x128xbf16>
    %cst_96 = arith.constant dense<0.000000e+00> : vector<104x128xf32>
    %157 = tpu.matmul %154, %156, %cst_96 {dimension_numbers = #tpu.dot_dimension_numbers<[1], [0], [0], [1], [0, 0, 1, 1], [], []>} : vector<104x128xbf16>, vector<128x128xbf16>, vector<104x128xf32> -> vector<104x128xf32>
    %158 = arith.addf %139, %152 : vector<104x128xf32>
    %159 = arith.addf %158, %157 : vector<104x128xf32>
    %c3_97 = arith.constant 3 : index
    %c0_98 = arith.constant 0 : index
    %c0_99 = arith.constant 0 : index
    %160 = vector.load %arg2[%c3_97, %c0_98, %c0_99] : memref<5x1x128xf32, #tpu.memory_space<vmem>>, vector<1x1x128xf32>
    %161 = vector.shape_cast %160 : vector<1x1x128xf32> to vector<1x128xf32>
    %162 = vector.broadcast %161 : vector<1x128xf32> to vector<104x128xf32>
    %163 = arith.addf %159, %162 : vector<104x128xf32>
    %cst_100 = arith.constant 0.000000e+00 : f32
    %164 = vector.broadcast %cst_100 : f32 to vector<104x128xf32>
    %165 = arith.maximumf %163, %164 : vector<104x128xf32>
    %166 = arith.mulf %165, %0 : vector<104x128xf32>
    %c8_i32_101 = arith.constant 8 : i32
    %167 = tpu.dynamic_rotate %166 by %c8_i32_101 dim 0 : vector<104x128xf32>, i32 -> vector<104x128xf32>
    %c7_i32_102 = arith.constant 7 : i32
    %168 = tpu.dynamic_rotate %166 by %c7_i32_102 dim 0 : vector<104x128xf32>, i32 -> vector<104x128xf32>
    %c32_i32_103 = arith.constant 32 : i32
    %169 = tpu.dynamic_rotate %168 by %c32_i32_103 dim 1 : vector<104x128xf32>, i32 -> vector<104x128xf32>
    %170 = arith.addf %167, %169 : vector<104x128xf32>
    %c6_i32_104 = arith.constant 6 : i32
    %171 = tpu.dynamic_rotate %166 by %c6_i32_104 dim 0 : vector<104x128xf32>, i32 -> vector<104x128xf32>
    %c64_i32_105 = arith.constant 64 : i32
    %172 = tpu.dynamic_rotate %171 by %c64_i32_105 dim 1 : vector<104x128xf32>, i32 -> vector<104x128xf32>
    %173 = arith.addf %170, %172 : vector<104x128xf32>
    %c1_i32_106 = arith.constant 1 : i32
    %174 = tpu.dynamic_rotate %166 by %c1_i32_106 dim 0 : vector<104x128xf32>, i32 -> vector<104x128xf32>
    %c96_i32_107 = arith.constant 96 : i32
    %175 = tpu.dynamic_rotate %174 by %c96_i32_107 dim 1 : vector<104x128xf32>, i32 -> vector<104x128xf32>
    %176 = arith.addf %173, %175 : vector<104x128xf32>
    %177 = arith.truncf %176 : vector<104x128xf32> to vector<104x128xbf16>
    %c12 = arith.constant 12 : index
    %c0_108 = arith.constant 0 : index
    %c0_109 = arith.constant 0 : index
    %178 = vector.load %arg1[%c12, %c0_108, %c0_109] : memref<15x128x128xbf16, #tpu.memory_space<vmem>>, vector<1x128x128xbf16>
    %179 = vector.shape_cast %178 : vector<1x128x128xbf16> to vector<128x128xbf16>
    %cst_110 = arith.constant dense<0.000000e+00> : vector<104x128xf32>
    %180 = tpu.matmul %177, %179, %cst_110 {dimension_numbers = #tpu.dot_dimension_numbers<[1], [0], [0], [1], [0, 0, 1, 1], [], []>} : vector<104x128xbf16>, vector<128x128xbf16>, vector<104x128xf32> -> vector<104x128xf32>
    %c103_i32_111 = arith.constant 103 : i32
    %181 = tpu.dynamic_rotate %166 by %c103_i32_111 dim 0 : vector<104x128xf32>, i32 -> vector<104x128xf32>
    %c32_i32_112 = arith.constant 32 : i32
    %182 = tpu.dynamic_rotate %181 by %c32_i32_112 dim 1 : vector<104x128xf32>, i32 -> vector<104x128xf32>
    %183 = arith.addf %166, %182 : vector<104x128xf32>
    %c98_i32_113 = arith.constant 98 : i32
    %184 = tpu.dynamic_rotate %166 by %c98_i32_113 dim 0 : vector<104x128xf32>, i32 -> vector<104x128xf32>
    %c64_i32_114 = arith.constant 64 : i32
    %185 = tpu.dynamic_rotate %184 by %c64_i32_114 dim 1 : vector<104x128xf32>, i32 -> vector<104x128xf32>
    %186 = arith.addf %183, %185 : vector<104x128xf32>
    %c97_i32_115 = arith.constant 97 : i32
    %187 = tpu.dynamic_rotate %166 by %c97_i32_115 dim 0 : vector<104x128xf32>, i32 -> vector<104x128xf32>
    %c96_i32_116 = arith.constant 96 : i32
    %188 = tpu.dynamic_rotate %187 by %c96_i32_116 dim 1 : vector<104x128xf32>, i32 -> vector<104x128xf32>
    %189 = arith.addf %186, %188 : vector<104x128xf32>
    %190 = arith.truncf %189 : vector<104x128xf32> to vector<104x128xbf16>
    %c13 = arith.constant 13 : index
    %c0_117 = arith.constant 0 : index
    %c0_118 = arith.constant 0 : index
    %191 = vector.load %arg1[%c13, %c0_117, %c0_118] : memref<15x128x128xbf16, #tpu.memory_space<vmem>>, vector<1x128x128xbf16>
    %192 = vector.shape_cast %191 : vector<1x128x128xbf16> to vector<128x128xbf16>
    %cst_119 = arith.constant dense<0.000000e+00> : vector<104x128xf32>
    %193 = tpu.matmul %190, %192, %cst_119 {dimension_numbers = #tpu.dot_dimension_numbers<[1], [0], [0], [1], [0, 0, 1, 1], [], []>} : vector<104x128xbf16>, vector<128x128xbf16>, vector<104x128xf32> -> vector<104x128xf32>
    %c96_i32_120 = arith.constant 96 : i32
    %194 = tpu.dynamic_rotate %166 by %c96_i32_120 dim 0 : vector<104x128xf32>, i32 -> vector<104x128xf32>
    %195 = arith.truncf %194 : vector<104x128xf32> to vector<104x128xbf16>
    %c14 = arith.constant 14 : index
    %c0_121 = arith.constant 0 : index
    %c0_122 = arith.constant 0 : index
    %196 = vector.load %arg1[%c14, %c0_121, %c0_122] : memref<15x128x128xbf16, #tpu.memory_space<vmem>>, vector<1x128x128xbf16>
    %197 = vector.shape_cast %196 : vector<1x128x128xbf16> to vector<128x128xbf16>
    %cst_123 = arith.constant dense<0.000000e+00> : vector<104x128xf32>
    %198 = tpu.matmul %195, %197, %cst_123 {dimension_numbers = #tpu.dot_dimension_numbers<[1], [0], [0], [1], [0, 0, 1, 1], [], []>} : vector<104x128xbf16>, vector<128x128xbf16>, vector<104x128xf32> -> vector<104x128xf32>
    %199 = arith.addf %180, %193 : vector<104x128xf32>
    %200 = arith.addf %199, %198 : vector<104x128xf32>
    %c4_124 = arith.constant 4 : index
    %c0_125 = arith.constant 0 : index
    %c0_126 = arith.constant 0 : index
    %201 = vector.load %arg2[%c4_124, %c0_125, %c0_126] : memref<5x1x128xf32, #tpu.memory_space<vmem>>, vector<1x1x128xf32>
    %202 = vector.shape_cast %201 : vector<1x1x128xf32> to vector<1x128xf32>
    %203 = vector.broadcast %202 : vector<1x128xf32> to vector<104x128xf32>
    %204 = arith.addf %200, %203 : vector<104x128xf32>
    %205 = arith.addf %204, %125 : vector<104x128xf32>
    %cst_127 = arith.constant 0.000000e+00 : f32
    %206 = vector.broadcast %cst_127 : f32 to vector<104x128xf32>
    %207 = arith.maximumf %205, %206 : vector<104x128xf32>
    %208 = arith.mulf %207, %0 : vector<104x128xf32>
    %209 = arith.truncf %208 : vector<104x128xf32> to vector<104x128xbf16>
    %c0_128 = arith.constant 0 : index
    %c0_129 = arith.constant 0 : index
    %210 = vector.load %arg4[%c0_128, %c0_129] : memref<128x128xbf16, #tpu.memory_space<vmem>>, vector<128x128xbf16>
    %cst_130 = arith.constant dense<0.000000e+00> : vector<104x128xf32>
    %211 = tpu.matmul %209, %210, %cst_130 {dimension_numbers = #tpu.dot_dimension_numbers<[1], [0], [0], [1], [0, 0, 1, 1], [], []>} : vector<104x128xbf16>, vector<128x128xbf16>, vector<104x128xf32> -> vector<104x128xf32>
    %c0_131 = arith.constant 0 : index
    %c0_132 = arith.constant 0 : index
    %212 = vector.load %arg5[%c0_131, %c0_132] : memref<1x128xf32, #tpu.memory_space<vmem>>, vector<1x128xf32>
    %213 = vector.broadcast %212 : vector<1x128xf32> to vector<104x128xf32>
    %214 = arith.addf %211, %213 : vector<104x128xf32>
    %cst_133 = arith.constant 0.000000e+00 : f32
    %215 = vector.broadcast %cst_133 : f32 to vector<104x128xf32>
    %216 = arith.maximumf %214, %215 : vector<104x128xf32>
    %217 = vector.extract_strided_slice %216 {offsets = [0, 0], sizes = [104, 1], strides = [1, 1]} : vector<104x128xf32> to vector<104x1xf32>
    %c0_134 = arith.constant 0 : index
    %c0_135 = arith.constant 0 : index
    %c0_136 = arith.constant 0 : index
    %218 = vector.load %arg6[%c0_134, %c0_135, %c0_136] : memref<3x104x256xf32, #tpu.memory_space<vmem>>, vector<1x104x256xf32>
    %219 = vector.shape_cast %218 : vector<1x104x256xf32> to vector<104x256xf32>
    %220 = vector.broadcast %217 : vector<104x1xf32> to vector<104x256xf32>
    %221 = arith.mulf %220, %219 : vector<104x256xf32>
    %222 = vector.extract_strided_slice %216 {offsets = [0, 1], sizes = [104, 1], strides = [1, 1]} : vector<104x128xf32> to vector<104x1xf32>
    %c1_137 = arith.constant 1 : index
    %c0_138 = arith.constant 0 : index
    %c0_139 = arith.constant 0 : index
    %223 = vector.load %arg6[%c1_137, %c0_138, %c0_139] : memref<3x104x256xf32, #tpu.memory_space<vmem>>, vector<1x104x256xf32>
    %224 = vector.shape_cast %223 : vector<1x104x256xf32> to vector<104x256xf32>
    %225 = vector.broadcast %222 : vector<104x1xf32> to vector<104x256xf32>
    %226 = arith.mulf %225, %224 : vector<104x256xf32>
    %227 = arith.addf %221, %226 : vector<104x256xf32>
    %228 = vector.extract_strided_slice %216 {offsets = [0, 2], sizes = [104, 1], strides = [1, 1]} : vector<104x128xf32> to vector<104x1xf32>
    %c2_140 = arith.constant 2 : index
    %c0_141 = arith.constant 0 : index
    %c0_142 = arith.constant 0 : index
    %229 = vector.load %arg6[%c2_140, %c0_141, %c0_142] : memref<3x104x256xf32, #tpu.memory_space<vmem>>, vector<1x104x256xf32>
    %230 = vector.shape_cast %229 : vector<1x104x256xf32> to vector<104x256xf32>
    %231 = vector.broadcast %228 : vector<104x1xf32> to vector<104x256xf32>
    %232 = arith.mulf %231, %230 : vector<104x256xf32>
    %233 = arith.addf %227, %232 : vector<104x256xf32>
    %c0_143 = arith.constant 0 : index
    %c0_144 = arith.constant 0 : index
    %234 = vector.load %arg7[%c0_143, %c0_144] : memref<8x104xbf16, #tpu.memory_space<vmem>>, vector<8x104xbf16>
    %235 = arith.truncf %233 : vector<104x256xf32> to vector<104x256xbf16>
    %cst_145 = arith.constant dense<0.000000e+00> : vector<8x256xf32>
    %236 = tpu.matmul %234, %235, %cst_145 {dimension_numbers = #tpu.dot_dimension_numbers<[1], [0], [0], [1], [0, 0, 1, 1], [], []>} : vector<8x104xbf16>, vector<104x256xbf16>, vector<8x256xf32> -> vector<8x256xf32>
    %c0_146 = arith.constant 0 : index
    %c0_147 = arith.constant 0 : index
    %237 = vector.load %arg8[%c0_146, %c0_147] : memref<1x256xf32, #tpu.memory_space<vmem>>, vector<1x256xf32>
    %238 = vector.broadcast %237 : vector<1x256xf32> to vector<8x256xf32>
    %239 = arith.addf %236, %238 : vector<8x256xf32>
    %240 = vector.extract_strided_slice %239 {offsets = [0, 0], sizes = [8, 128], strides = [1, 1]} : vector<8x256xf32> to vector<8x128xf32>
    %c0_148 = arith.constant 0 : index
    %c0_149 = arith.constant 0 : index
    %241 = vector.load %arg11[%c0_148, %c0_149] : memref<8x128xf32, #tpu.memory_space<vmem>>, vector<8x128xf32>
    tpu.vector_store %arg11[%c0_148, %c0_149], %240 {strides = array<i32>} : memref<8x128xf32, #tpu.memory_space<vmem>>, vector<8x128xf32>,
    %242 = vector.extract_strided_slice %239 {offsets = [0, 128], sizes = [8, 128], strides = [1, 1]} : vector<8x256xf32> to vector<8x128xf32>
    %cst_150 = arith.constant 0.000000e+00 : f32
    %243 = vector.broadcast %cst_150 : f32 to vector<8x128xf32>
    %244 = arith.maximumf %242, %243 : vector<8x128xf32>
    %245 = arith.truncf %244 : vector<8x128xf32> to vector<8x128xbf16>
    %c0_151 = arith.constant 0 : index
    %c0_152 = arith.constant 0 : index
    %246 = vector.load %arg9[%c0_151, %c0_152] : memref<128x128xbf16, #tpu.memory_space<vmem>>, vector<128x128xbf16>
    %cst_153 = arith.constant dense<0.000000e+00> : vector<8x128xf32>
    %247 = tpu.matmul %245, %246, %cst_153 {dimension_numbers = #tpu.dot_dimension_numbers<[1], [0], [0], [1], [0, 0, 1, 1], [], []>} : vector<8x128xbf16>, vector<128x128xbf16>, vector<8x128xf32> -> vector<8x128xf32>
    %c0_154 = arith.constant 0 : index
    %c0_155 = arith.constant 0 : index
    %248 = vector.load %arg10[%c0_154, %c0_155] : memref<1x128xf32, #tpu.memory_space<vmem>>, vector<1x128xf32>
    %249 = vector.broadcast %248 : vector<1x128xf32> to vector<8x128xf32>
    %250 = arith.addf %247, %249 : vector<8x128xf32>
    %251 = math.tanh %250 : vector<8x128xf32>
    %c0_156 = arith.constant 0 : index
    %c0_157 = arith.constant 0 : index
    %252 = vector.load %arg12[%c0_156, %c0_157] : memref<8x128xf32, #tpu.memory_space<vmem>>, vector<8x128xf32>
    tpu.vector_store %arg12[%c0_156, %c0_157], %251 {strides = array<i32>} : memref<8x128xf32, #tpu.memory_space<vmem>>, vector<8x128xf32>,
    return
  }
}

</mosaic_0001>

<llo_original>
// kernel: alphazero_forward.1
$region0: #{alphazero_forward.1}
  #allocation0 [shape = 'u32[]', space=smem, size = 0x4, offset = 0x4, fixed_abs, tag = 'smem constant byte address 0x4 - core index']
  #allocation1 [shape = 'u32[72,128]{1,0:T(1,128)}', space=vmem, size = 0x9000, scoped, tag = 'internal scratch']
  %s0 = inlined_call_operand.vmem [shape: f32[104,128], index: 0, kind: input, shape index: {}]
  %s1 = inlined_call_operand.hbm [shape: bf16[15,128,128], index: 1, kind: input, shape index: {}]
  %s2 = inlined_call_operand.vmem [shape: f32[5,1,128], index: 2, kind: input, shape index: {}]
  %s3 = inlined_call_operand.vmem [shape: f32[104,128], index: 3, kind: input, shape index: {}]
  %s4 = inlined_call_operand.vmem [shape: bf16[128,128], index: 4, kind: input, shape index: {}]
  %s5 = inlined_call_operand.vmem [shape: f32[1,128], index: 5, kind: input, shape index: {}]
  %s6 = inlined_call_operand.hbm [shape: f32[3,104,256], index: 6, kind: input, shape index: {}]
  %s7 = inlined_call_operand.vmem [shape: bf16[8,104], index: 7, kind: input, shape index: {}]
  %s8 = inlined_call_operand.vmem [shape: f32[1,256], index: 8, kind: input, shape index: {}]
  %s9 = inlined_call_operand.vmem [shape: bf16[128,128], index: 9, kind: input, shape index: {}]
  %s10 = inlined_call_operand.vmem [shape: f32[1,128], index: 10, kind: input, shape index: {}]
  %s11 = inlined_call_operand.vmem [shape: f32[8,128], index: 11, kind: output, shape index: {0}]
  %s12 = inlined_call_operand.vmem [shape: f32[8,128], index: 12, kind: output, shape index: {1}]
  %13 = xla_tuple %s11, %s12
  %s14 = sld [smem:[#allocation0]]
  $region70: #{alphazero_forward.1} parent=0
    _
  %s16 = ssub.s32 1, %s14
  %s17 = scalar_select 0, %s16, %s14
  $region1: #{alphazero_forward.1} parent=0
    #allocation2 [shape = 'u8[491520]{0}', space=vmem, size = 0x78000, scoped, tag = 'input window, operand 1, single buffered']
    #allocation3 [shape = 's32[1]{0}', space=sflag, size = 0x4, scoped, tag = 'scoped memory for alphazero_forward.1']
    #allocation4 [shape = 'u8[319488]{0}', space=vmem, size = 0x4e000, scoped, tag = 'input window, operand 6, single buffered']
    #allocation5 [shape = 's32[1]{0}', space=sflag, size = 0x4, scoped, tag = 'scoped memory for alphazero_forward.1']
    %18 = vsyncpa [#allocation3], 0
    %19 = vsyncpa [#allocation5], 0
    // Predicated region
    $region2: #{alphazero_forward.1} parent=1 // pred_check
      _
    $region3: #{alphazero_forward.1} parent=1 // pred_check_branch
      %21 = sbr.rel (0) target = $region5
    $region4: #{alphazero_forward.1} parent=1 // pred_region
      _
    $region5: #{alphazero_forward.1} parent=1 // pred_fallthru
      _
    // Predicated region
    $region6: #{alphazero_forward.1} parent=1 // pred_check
      _
    $region7: #{alphazero_forward.1} parent=1 // pred_check_branch
      %23 = sbr.rel (0) target = $region9
    $region8: #{alphazero_forward.1} parent=1 // pred_region
      %25 = vsyncadd [#allocation3], 0
      %s26 = sshll.u32 %s1, 4
      %s27 = int_to_ptr.hbm [resolvable:$true] %s26
      %s28 = sshll.u32 [#allocation2], 4
      %s29 = int_to_ptr.vmem [resolvable:$true] %s28
      %34 = dma.hbm_to_vmem [thread:$0]  %s27, 15360, %s29, [#allocation3], 64, 64, 4
    $region9: #{alphazero_forward.1} parent=1 // pred_fallthru
      _
    // Predicated region
    $region10: #{alphazero_forward.1} parent=1 // pred_check
      _
    $region11: #{alphazero_forward.1} parent=1 // pred_check_branch
      %36 = sbr.rel (0) target = $region13
    $region12: #{alphazero_forward.1} parent=1 // pred_region
      _
    $region13: #{alphazero_forward.1} parent=1 // pred_fallthru
      _
    // Predicated region
    $region14: #{alphazero_forward.1} parent=1 // pred_check
      _
    $region15: #{alphazero_forward.1} parent=1 // pred_check_branch
      %38 = sbr.rel (0) target = $region17
    $region16: #{alphazero_forward.1} parent=1 // pred_region
      _
    $region17: #{alphazero_forward.1} parent=1 // pred_fallthru
      _
    // Predicated region
    $region18: #{alphazero_forward.1} parent=1 // pred_check
      _
    $region19: #{alphazero_forward.1} parent=1 // pred_check_branch
      %40 = sbr.rel (0) target = $region21
    $region20: #{alphazero_forward.1} parent=1 // pred_region
      _
    $region21: #{alphazero_forward.1} parent=1 // pred_fallthru
      _
    // Predicated region
    $region22: #{alphazero_forward.1} parent=1 // pred_check
      _
    $region23: #{alphazero_forward.1} parent=1 // pred_check_branch
      %42 = sbr.rel (0) target = $region25
    $region24: #{alphazero_forward.1} parent=1 // pred_region
      _
    $region25: #{alphazero_forward.1} parent=1 // pred_fallthru
      _
    // Predicated region
    $region26: #{alphazero_forward.1} parent=1 // pred_check
      _
    $region27: #{alphazero_forward.1} parent=1 // pred_check_branch
      %44 = sbr.rel (0) target = $region29
    $region28: #{alphazero_forward.1} parent=1 // pred_region
      %46 = vsyncadd [#allocation5], 0
      %s47 = sshll.u32 %s6, 4
      %s48 = int_to_ptr.hbm [resolvable:$true] %s47
      %s49 = sshll.u32 [#allocation4], 4
      %s50 = int_to_ptr.vmem [resolvable:$true] %s49
      %55 = dma.hbm_to_vmem [thread:$0]  %s48, 9984, %s50, [#allocation5], 256, 256, 16
    $region29: #{alphazero_forward.1} parent=1 // pred_fallthru
      _
    // Predicated region
    $region30: #{alphazero_forward.1} parent=1 // pred_check
      _
    $region31: #{alphazero_forward.1} parent=1 // pred_check_branch
      %57 = sbr.rel (0) target = $region33
    $region32: #{alphazero_forward.1} parent=1 // pred_region
      _
    $region33: #{alphazero_forward.1} parent=1 // pred_fallthru
      _
    // Predicated region
    $region34: #{alphazero_forward.1} parent=1 // pred_check
      _
    $region35: #{alphazero_forward.1} parent=1 // pred_check_branch
      %59 = sbr.rel (0) target = $region37
    $region36: #{alphazero_forward.1} parent=1 // pred_region
      _
    $region37: #{alphazero_forward.1} parent=1 // pred_fallthru
      _
    // Predicated region
    $region38: #{alphazero_forward.1} parent=1 // pred_check
      _
    $region39: #{alphazero_forward.1} parent=1 // pred_check_branch
      %61 = sbr.rel (0) target = $region41
    $region40: #{alphazero_forward.1} parent=1 // pred_region
      _
    $region41: #{alphazero_forward.1} parent=1 // pred_fallthru
      _
    // Predicated region
    $region42: #{alphazero_forward.1} parent=1 // pred_check
      _
    $region43: #{alphazero_forward.1} parent=1 // pred_check_branch
      %63 = sbr.rel (0) target = $region45
    $region44: #{alphazero_forward.1} parent=1 // pred_region
      _
    $region45: #{alphazero_forward.1} parent=1 // pred_fallthru
      _
    // Predicated region
    $region46: #{alphazero_forward.1} parent=1 // pred_check
      _
    $region47: #{alphazero_forward.1} parent=1 // pred_check_branch
      %65 = sbr.rel (0) target = $region49
    $region48: #{alphazero_forward.1} parent=1 // pred_region
      %67 = dma.done [#allocation3], 15360
    $region49: #{alphazero_forward.1} parent=1 // pred_fallthru
      _
    // Predicated region
    $region50: #{alphazero_forward.1} parent=1 // pred_check
      _
    $region51: #{alphazero_forward.1} parent=1 // pred_check_branch
      %69 = sbr.rel (0) target = $region53
    $region52: #{alphazero_forward.1} parent=1 // pred_region
      %71 = dma.done [#allocation5], 9984
    $region53: #{alphazero_forward.1} parent=1 // pred_fallthru
      _
    %v73 = vld [vmem:[%s3] sm:$0xff]
    %v74 = vld [vmem:[%s3 + $0x8] sm:$0xff]
    %v75 = vld [vmem:[%s3 + $0x10] sm:$0xff]
    %v76 = vld [vmem:[%s3 + $0x18] sm:$0xff]
    %v77 = vld [vmem:[%s3 + $0x20] sm:$0xff]
    %v78 = vld [vmem:[%s3 + $0x28] sm:$0xff]
    %v79 = vld [vmem:[%s3 + $0x30] sm:$0xff]
    %v80 = vld [vmem:[%s3 + $0x38] sm:$0xff]
    %v81 = vld [vmem:[%s3 + $0x40] sm:$0xff]
    %v82 = vld [vmem:[%s3 + $0x48] sm:$0xff]
    %v83 = vld [vmem:[%s3 + $0x50] sm:$0xff]
    %v84 = vld [vmem:[%s3 + $0x58] sm:$0xff]
    %v85 = vld [vmem:[%s3 + $0x60] sm:$0xff]
    %v86 = vld [vmem:[%s0] sm:$0xff]
    %v87 = vld [vmem:[%s0 + $0x8] sm:$0xff]
    %v88 = vld [vmem:[%s0 + $0x10] sm:$0xff]
    %v89 = vld [vmem:[%s0 + $0x18] sm:$0xff]
    %v90 = vld [vmem:[%s0 + $0x20] sm:$0xff]
    %v91 = vld [vmem:[%s0 + $0x28] sm:$0xff]
    %v92 = vld [vmem:[%s0 + $0x30] sm:$0xff]
    %v93 = vld [vmem:[%s0 + $0x38] sm:$0xff]
    %v94 = vld [vmem:[%s0 + $0x40] sm:$0xff]
    %v95 = vld [vmem:[%s0 + $0x48] sm:$0xff]
    %v96 = vld [vmem:[%s0 + $0x50] sm:$0xff]
    %v97 = vld [vmem:[%s0 + $0x58] sm:$0xff]
    %v98 = vld [vmem:[%s0 + $0x60] sm:$0xff]
    %v99 = vrot.slane %v86, 1
    %v100 = vrot.slane %v87, 1
    %v101 = vrot.slane %v88, 1
    %v102 = vrot.slane %v89, 1
    %v103 = vrot.slane %v90, 1
    %v104 = vrot.slane %v91, 1
    %v105 = vrot.slane %v92, 1
    %v106 = vrot.slane %v93, 1
    %v107 = vrot.slane %v94, 1
    %v108 = vrot.slane %v95, 1
    %v109 = vrot.slane %v96, 1
    %v110 = vrot.slane %v97, 1
    %v111 = vrot.slane %v98, 1
    %v112 = vlaneseq
    %v113 = vshrl.u32 %v112, 7
    %vm114 = vcmp.lt.s32.totalorder %v113, 7
    %v115 = vsel %vm114, %v110, %v111
    %v116 = vsel %vm114, %v109, %v110
    %v117 = vsel %vm114, %v108, %v109
    %v118 = vsel %vm114, %v107, %v108
    %v119 = vsel %vm114, %v106, %v107
    %v120 = vsel %vm114, %v105, %v106
    %v121 = vsel %vm114, %v104, %v105
    %v122 = vsel %vm114, %v103, %v104
    %v123 = vsel %vm114, %v102, %v103
    %v124 = vsel %vm114, %v101, %v102
    %v125 = vsel %vm114, %v100, %v101
    %v126 = vsel %vm114, %v99, %v100
    %v127 = vsel %vm114, %v111, %v99
    %128 = vrot.lane.b32.xlu0 %v127, 32
    %v129 = vpop.permute.xlu0 %128
    %130 = vrot.lane.b32.xlu0 %v126, 32
    %v131 = vpop.permute.xlu0 %130
    %132 = vrot.lane.b32.xlu0 %v125, 32
    %v133 = vpop.permute.xlu0 %132
    %134 = vrot.lane.b32.xlu0 %v124, 32
    %v135 = vpop.permute.xlu0 %134
    %136 = vrot.lane.b32.xlu0 %v123, 32
    %v137 = vpop.permute.xlu0 %136
    %138 = vrot.lane.b32.xlu0 %v122, 32
    %v139 = vpop.permute.xlu0 %138
    %140 = vrot.lane.b32.xlu0 %v121, 32
    %v141 = vpop.permute.xlu0 %140
    %142 = vrot.lane.b32.xlu0 %v120, 32
    %v143 = vpop.permute.xlu0 %142
    %144 = vrot.lane.b32.xlu0 %v119, 32
    %v145 = vpop.permute.xlu0 %144
    %146 = vrot.lane.b32.xlu0 %v118, 32
    %v147 = vpop.permute.xlu0 %146
    %148 = vrot.lane.b32.xlu0 %v117, 32
    %v149 = vpop.permute.xlu0 %148
    %150 = vrot.lane.b32.xlu0 %v116, 32
    %v151 = vpop.permute.xlu0 %150
    %152 = vrot.lane.b32.xlu0 %v115, 32
    %v153 = vpop.permute.xlu0 %152
    %v154 = vadd.f32 %v98, %v129
    %v155 = vadd.f32 %v86, %v131
    %v156 = vadd.f32 %v87, %v133
    %v157 = vadd.f32 %v88, %v135
    %v158 = vadd.f32 %v89, %v137
    %v159 = vadd.f32 %v90, %v139
    %v160 = vadd.f32 %v91, %v141
    %v161 = vadd.f32 %v92, %v143
    %v162 = vadd.f32 %v93, %v145
    %v163 = vadd.f32 %v94, %v147
    %v164 = vadd.f32 %v95, %v149
    %v165 = vadd.f32 %v96, %v151
    %v166 = vadd.f32 %v97, %v153
    %v167 = vrot.slane %v86, 2
    %v168 = vrot.slane %v87, 2
    %v169 = vrot.slane %v88, 2
    %v170 = vrot.slane %v89, 2
    %v171 = vrot.slane %v90, 2
    %v172 = vrot.slane %v91, 2
    %v173 = vrot.slane %v92, 2
    %v174 = vrot.slane %v93, 2
    %v175 = vrot.slane %v94, 2
    %v176 = vrot.slane %v95, 2
    %v177 = vrot.slane %v96, 2
    %v178 = vrot.slane %v97, 2
    %v179 = vrot.slane %v98, 2
    %vm180 = vcmp.lt.s32.totalorder %v113, 6
    %v181 = vsel %vm180, %v178, %v179
    %v182 = vsel %vm180, %v177, %v178
    %v183 = vsel %vm180, %v176, %v177
    %v184 = vsel %vm180, %v175, %v176
    %v185 = vsel %vm180, %v174, %v175
    %v186 = vsel %vm180, %v173, %v174
    %v187 = vsel %vm180, %v172, %v173
    %v188 = vsel %vm180, %v171, %v172
    %v189 = vsel %vm180, %v170, %v171
    %v190 = vsel %vm180, %v169, %v170
    %v191 = vsel %vm180, %v168, %v169
    %v192 = vsel %vm180, %v167, %v168
    %v193 = vsel %vm180, %v179, %v167
    %194 = vrot.lane.b32.xlu0 %v193, 64
    %v195 = vpop.permute.xlu0 %194
    %196 = vrot.lane.b32.xlu0 %v192, 64
    %v197 = vpop.permute.xlu0 %196
    %198 = vrot.lane.b32.xlu0 %v191, 64
    %v199 = vpop.permute.xlu0 %198
    %200 = vrot.lane.b32.xlu0 %v190, 64
    %v201 = vpop.permute.xlu0 %200
    %202 = vrot.lane.b32.xlu0 %v189, 64
    %v203 = vpop.permute.xlu0 %202
    %204 = vrot.lane.b32.xlu0 %v188, 64
    %v205 = vpop.permute.xlu0 %204
    %206 = vrot.lane.b32.xlu0 %v187, 64
    %v207 = vpop.permute.xlu0 %206
    %208 = vrot.lane.b32.xlu0 %v186, 64
    %v209 = vpop.permute.xlu0 %208
    %210 = vrot.lane.b32.xlu0 %v185, 64
    %v211 = vpop.permute.xlu0 %210
    %212 = vrot.lane.b32.xlu0 %v184, 64
    %v213 = vpop.permute.xlu0 %212
    %214 = vrot.lane.b32.xlu0 %v183, 64
    %v215 = vpop.permute.xlu0 %214
    %216 = vrot.lane.b32.xlu0 %v182, 64
    %v217 = vpop.permute.xlu0 %216
    %218 = vrot.lane.b32.xlu0 %v181, 64
    %v219 = vpop.permute.xlu0 %218
    %v220 = vadd.f32 %v154, %v195
    %v221 = vadd.f32 %v155, %v197
    %v222 = vadd.f32 %v156, %v199
    %v223 = vadd.f32 %v157, %v201
    %v224 = vadd.f32 %v158, %v203
    %v225 = vadd.f32 %v159, %v205
    %v226 = vadd.f32 %v160, %v207
    %v227 = vadd.f32 %v161, %v209
    %v228 = vadd.f32 %v162, %v211
    %v229 = vadd.f32 %v163, %v213
    %v230 = vadd.f32 %v164, %v215
    %v231 = vadd.f32 %v165, %v217
    %v232 = vadd.f32 %v166, %v219
    %v233 = vrot.slane %v86, 7
    %v234 = vrot.slane %v87, 7
    %v235 = vrot.slane %v88, 7
    %v236 = vrot.slane %v89, 7
    %v237 = vrot.slane %v90, 7
    %v238 = vrot.slane %v91, 7
    %v239 = vrot.slane %v92, 7
    %v240 = vrot.slane %v93, 7
    %v241 = vrot.slane %v94, 7
    %v242 = vrot.slane %v95, 7
    %v243 = vrot.slane %v96, 7
    %v244 = vrot.slane %v97, 7
    %v245 = vrot.slane %v98, 7
    %vm246 = vcmp.lt.s32.totalorder %v113, 1
    %v247 = vsel %vm246, %v244, %v245
    %v248 = vsel %vm246, %v243, %v244
    %v249 = vsel %vm246, %v242, %v243
    %v250 = vsel %vm246, %v241, %v242
    %v251 = vsel %vm246, %v240, %v241
    %v252 = vsel %vm246, %v239, %v240
    %v253 = vsel %vm246, %v238, %v239
    %v254 = vsel %vm246, %v237, %v238
    %v255 = vsel %vm246, %v236, %v237
    %v256 = vsel %vm246, %v235, %v236
    %v257 = vsel %vm246, %v234, %v235
    %v258 = vsel %vm246, %v233, %v234
    %v259 = vsel %vm246, %v245, %v233
    %260 = vrot.lane.b32.xlu0 %v259, 96
    %v261 = vpop.permute.xlu0 %260
    %262 = vrot.lane.b32.xlu0 %v258, 96
    %v263 = vpop.permute.xlu0 %262
    %264 = vrot.lane.b32.xlu0 %v257, 96
    %v265 = vpop.permute.xlu0 %264
    %266 = vrot.lane.b32.xlu0 %v256, 96
    %v267 = vpop.permute.xlu0 %266
    %268 = vrot.lane.b32.xlu0 %v255, 96
    %v269 = vpop.permute.xlu0 %268
    %270 = vrot.lane.b32.xlu0 %v254, 96
    %v271 = vpop.permute.xlu0 %270
    %272 = vrot.lane.b32.xlu0 %v253, 96
    %v273 = vpop.permute.xlu0 %272
    %274 = vrot.lane.b32.xlu0 %v252, 96
    %v275 = vpop.permute.xlu0 %274
    %276 = vrot.lane.b32.xlu0 %v251, 96
    %v277 = vpop.permute.xlu0 %276
    %278 = vrot.lane.b32.xlu0 %v250, 96
    %v279 = vpop.permute.xlu0 %278
    %280 = vrot.lane.b32.xlu0 %v249, 96
    %v281 = vpop.permute.xlu0 %280
    %282 = vrot.lane.b32.xlu0 %v248, 96
    %v283 = vpop.permute.xlu0 %282
    %284 = vrot.lane.b32.xlu0 %v247, 96
    %v285 = vpop.permute.xlu0 %284
    %v286 = vadd.f32 %v220, %v261
    %v287 = vadd.f32 %v221, %v263
    %v288 = vadd.f32 %v222, %v265
    %v289 = vadd.f32 %v223, %v267
    %v290 = vadd.f32 %v224, %v269
    %v291 = vadd.f32 %v225, %v271
    %v292 = vadd.f32 %v226, %v273
    %v293 = vadd.f32 %v227, %v275
    %v294 = vadd.f32 %v228, %v277
    %v295 = vadd.f32 %v229, %v279
    %v296 = vadd.f32 %v230, %v281
    %v297 = vadd.f32 %v231, %v283
    %v298 = vadd.f32 %v232, %v285
    %v299 = vpack.c.bf16 %v287, %v286
    %v300 = vpack.c.bf16 %v289, %v288
    %v301 = vpack.c.bf16 %v291, %v290
    %v302 = vpack.c.bf16 %v293, %v292
    %v303 = vpack.c.bf16 %v295, %v294
    %v304 = vpack.c.bf16 %v297, %v296
    %v305 = vpack.c.bf16 %v298, %v298
    %v306 = vld [vmem:[#allocation2] sm:$0xf]
    %v307 = vld [vmem:[#allocation2 + $0x4] sm:$0xf]
    %v308 = vld [vmem:[#allocation2 + $0x8] sm:$0xf]
    %v309 = vld [vmem:[#allocation2 + $0xc] sm:$0xf]
    %v310 = vld [vmem:[#allocation2 + $0x10] sm:$0xf]
    %v311 = vld [vmem:[#allocation2 + $0x14] sm:$0xf]
    %v312 = vld [vmem:[#allocation2 + $0x18] sm:$0xf]
    %v313 = vld [vmem:[#allocation2 + $0x1c] sm:$0xf]
    %v314 = vld [vmem:[#allocation2 + $0x20] sm:$0xf]
    %v315 = vld [vmem:[#allocation2 + $0x24] sm:$0xf]
    %v316 = vld [vmem:[#allocation2 + $0x28] sm:$0xf]
    %v317 = vld [vmem:[#allocation2 + $0x2c] sm:$0xf]
    %v318 = vld [vmem:[#allocation2 + $0x30] sm:$0xf]
    %v319 = vld [vmem:[#allocation2 + $0x34] sm:$0xf]
    %v320 = vld [vmem:[#allocation2 + $0x38] sm:$0xf]
    %v321 = vld [vmem:[#allocation2 + $0x3c] sm:$0xf]
    %v322 = vrot.slane %v86, 6
    %v323 = vrot.slane %v87, 6
    %v324 = vrot.slane %v88, 6
    %v325 = vrot.slane %v89, 6
    %v326 = vrot.slane %v90, 6
    %v327 = vrot.slane %v91, 6
    %v328 = vrot.slane %v92, 6
    %v329 = vrot.slane %v93, 6
    %v330 = vrot.slane %v94, 6
    %v331 = vrot.slane %v95, 6
    %v332 = vrot.slane %v96, 6
    %v333 = vrot.slane %v97, 6
    %v334 = vrot.slane %v98, 6
    %vm335 = vcmp.lt.s32.totalorder %v113, 2
    %v336 = vsel %vm335, %v333, %v334
    %v337 = vsel %vm335, %v332, %v333
    %v338 = vsel %vm335, %v331, %v332
    %v339 = vsel %vm335, %v330, %v331
    %v340 = vsel %vm335, %v329, %v330
    %v341 = vsel %vm335, %v328, %v329
    %v342 = vsel %vm335, %v327, %v328
    %v343 = vsel %vm335, %v326, %v327
    %v344 = vsel %vm335, %v325, %v326
    %v345 = vsel %vm335, %v324, %v325
    %v346 = vsel %vm335, %v323, %v324
    %v347 = vsel %vm335, %v322, %v323
    %v348 = vsel %vm335, %v334, %v322
    %349 = vrot.lane.b32.xlu0 %v347, 64
    %v350 = vpop.permute.xlu0 %349
    %351 = vrot.lane.b32.xlu0 %v346, 64
    %v352 = vpop.permute.xlu0 %351
    %353 = vrot.lane.b32.xlu0 %v345, 64
    %v354 = vpop.permute.xlu0 %353
    %355 = vrot.lane.b32.xlu0 %v344, 64
    %v356 = vpop.permute.xlu0 %355
    %357 = vrot.lane.b32.xlu0 %v343, 64
    %v358 = vpop.permute.xlu0 %357
    %359 = vrot.lane.b32.xlu0 %v342, 64
    %v360 = vpop.permute.xlu0 %359
    %361 = vrot.lane.b32.xlu0 %v341, 64
    %v362 = vpop.permute.xlu0 %361
    %363 = vrot.lane.b32.xlu0 %v340, 64
    %v364 = vpop.permute.xlu0 %363
    %365 = vrot.lane.b32.xlu0 %v339, 64
    %v366 = vpop.permute.xlu0 %365
    %367 = vrot.lane.b32.xlu0 %v338, 64
    %v368 = vpop.permute.xlu0 %367
    %369 = vrot.lane.b32.xlu0 %v337, 64
    %v370 = vpop.permute.xlu0 %369
    %371 = vrot.lane.b32.xlu0 %v336, 64
    %v372 = vpop.permute.xlu0 %371
    %373 = vrot.lane.b32.xlu0 %v348, 64
    %v374 = vpop.permute.xlu0 %373
    %v375 = vadd.f32 %v155, %v350
    %v376 = vadd.f32 %v156, %v352
    %v377 = vadd.f32 %v157, %v354
    %v378 = vadd.f32 %v158, %v356
    %v379 = vadd.f32 %v159, %v358
    %v380 = vadd.f32 %v160, %v360
    %v381 = vadd.f32 %v161, %v362
    %v382 = vadd.f32 %v162, %v364
    %v383 = vadd.f32 %v163, %v366
    %v384 = vadd.f32 %v164, %v368
    %v385 = vadd.f32 %v165, %v370
    %v386 = vadd.f32 %v166, %v372
    %v387 = vadd.f32 %v154, %v374
    %v388 = vadd.f32 %v375, %v263
    %v389 = vadd.f32 %v376, %v265
    %v390 = vadd.f32 %v377, %v267
    %v391 = vadd.f32 %v378, %v269
    %v392 = vadd.f32 %v379, %v271
    %v393 = vadd.f32 %v380, %v273
    %v394 = vadd.f32 %v381, %v275
    %v395 = vadd.f32 %v382, %v277
    %v396 = vadd.f32 %v383, %v279
    %v397 = vadd.f32 %v384, %v281
    %v398 = vadd.f32 %v385, %v283
    %v399 = vadd.f32 %v386, %v285
    %v400 = vadd.f32 %v387, %v261
    %v401 = vpack.c.bf16 %v389, %v388
    %v402 = vpack.c.bf16 %v391, %v390
    %v403 = vpack.c.bf16 %v393, %v392
    %v404 = vpack.c.bf16 %v395, %v394
    %v405 = vpack.c.bf16 %v397, %v396
    %v406 = vpack.c.bf16 %v399, %v398
    %v407 = vpack.c.bf16 %v400, %v400
    %s408 = scalar_lea.vmem [#allocation2], 64
    %v409 = vld [vmem:[%s408] sm:$0xf]
    %v410 = vld [vmem:[%s408 + $0x4] sm:$0xf]
    %v411 = vld [vmem:[%s408 + $0x8] sm:$0xf]
    %v412 = vld [vmem:[%s408 + $0xc] sm:$0xf]
    %v413 = vld [vmem:[%s408 + $0x10] sm:$0xf]
    %v414 = vld [vmem:[%s408 + $0x14] sm:$0xf]
    %v415 = vld [vmem:[%s408 + $0x18] sm:$0xf]
    %v416 = vld [vmem:[%s408 + $0x1c] sm:$0xf]
    %v417 = vld [vmem:[%s408 + $0x20] sm:$0xf]
    %v418 = vld [vmem:[%s408 + $0x24] sm:$0xf]
    %v419 = vld [vmem:[%s408 + $0x28] sm:$0xf]
    %v420 = vld [vmem:[%s408 + $0x2c] sm:$0xf]
    %v421 = vld [vmem:[%s408 + $0x30] sm:$0xf]
    %v422 = vld [vmem:[%s408 + $0x34] sm:$0xf]
    %v423 = vld [vmem:[%s408 + $0x38] sm:$0xf]
    %v424 = vld [vmem:[%s408 + $0x3c] sm:$0xf]
    %v441 = vunpack.c.l.b16 %v409
    %v442 = vunpack.c.l.b16 %v410
    %v443 = vunpack.c.l.b16 %v411
    %v444 = vunpack.c.l.b16 %v412
    %v445 = vunpack.c.l.b16 %v413
    %v446 = vunpack.c.l.b16 %v414
    %v447 = vunpack.c.l.b16 %v415
    %v448 = vunpack.c.l.b16 %v416
    %v449 = vunpack.c.l.b16 %v417
    %v450 = vunpack.c.l.b16 %v418
    %v451 = vunpack.c.l.b16 %v419
    %v452 = vunpack.c.l.b16 %v420
    %v453 = vunpack.c.l.b16 %v421
    %v454 = vunpack.c.l.b16 %v422
    %v455 = vunpack.c.l.b16 %v423
    %v456 = vunpack.c.l.b16 %v424
    %v457 = vpack.c.b16 %v442, %v441
    %v458 = vpack.c.b16 %v444, %v443
    %v459 = vpack.c.b16 %v446, %v445
    %v460 = vpack.c.b16 %v448, %v447
    %v461 = vpack.c.b16 %v450, %v449
    %v462 = vpack.c.b16 %v452, %v451
    %v463 = vpack.c.b16 %v454, %v453
    %v464 = vpack.c.b16 %v456, %v455
    %473 = vmatpush.bf16.msra.mxu0 %v464
    %474 = vmatpush.bf16.msra.mxu0 %v463
    %475 = vmatpush.bf16.msra.mxu0 %v462
    %476 = vmatpush.bf16.msra.mxu0 %v461
    %477 = vmatpush.bf16.msra.mxu0 %v460
    %478 = vmatpush.bf16.msra.mxu0 %v459
    %479 = vmatpush.bf16.msra.mxu0 %v458
    %480 = vmatpush.bf16.msra.mxu0 %v457
    %481 = vmatmul.bf16.gmra.mxu0 %v401
    %v482 = vpop.f32.mrf.mxu0
    %v483 = vadd.f32 0.0, %v482
    %v484 = vpop.f32.mrf.mxu0
    %v485 = vadd.f32 0.0, %v484
    %486 = vmatmul.bf16.gmra.mxu0 %v402
    %v487 = vpop.f32.mrf.mxu0
    %v488 = vadd.f32 0.0, %v487
    %v489 = vpop.f32.mrf.mxu0
    %v490 = vadd.f32 0.0, %v489
    %491 = vmatmul.bf16.gmra.mxu0 %v403
    %v492 = vpop.f32.mrf.mxu0
    %v493 = vadd.f32 0.0, %v492
    %v494 = vpop.f32.mrf.mxu0
    %v495 = vadd.f32 0.0, %v494
    %496 = vmatmul.bf16.gmra.mxu0 %v404
    %v497 = vpop.f32.mrf.mxu0
    %v498 = vadd.f32 0.0, %v497
    %v499 = vpop.f32.mrf.mxu0
    %v500 = vadd.f32 0.0, %v499
    %501 = vmatmul.bf16.gmra.mxu0 %v405
    %v502 = vpop.f32.mrf.mxu0
    %v503 = vadd.f32 0.0, %v502
    %v504 = vpop.f32.mrf.mxu0
    %v505 = vadd.f32 0.0, %v504
    %506 = vmatmul.bf16.gmra.mxu0 %v406
    %v507 = vpop.f32.mrf.mxu0
    %v508 = vadd.f32 0.0, %v507
    %v509 = vpop.f32.mrf.mxu0
    %v510 = vadd.f32 0.0, %v509
    %511 = vmatmul.bf16.gmra.mxu0 %v407
    %v512 = vpop.f32.mrf.mxu0
    %v513 = vadd.f32 0.0, %v512
    %v514 = vpop.f32.mrf.mxu0
    %515 = vdwg.mxu0
    %v516 = vpack.c.bf16 %v88, %v87
    %v517 = vpack.c.bf16 %v90, %v89
    %v518 = vpack.c.bf16 %v92, %v91
    %v519 = vpack.c.bf16 %v94, %v93
    %v520 = vpack.c.bf16 %v96, %v95
    %v521 = vpack.c.bf16 %v98, %v97
    %v522 = vpack.c.bf16 %v86, %v86
    %s523 = scalar_lea.vmem [#allocation2], 128
    %v524 = vld [vmem:[%s523] sm:$0xf]
    %v525 = vld [vmem:[%s523 + $0x4] sm:$0xf]
    %v526 = vld [vmem:[%s523 + $0x8] sm:$0xf]
    %v527 = vld [vmem:[%s523 + $0xc] sm:$0xf]
    %v528 = vld [vmem:[%s523 + $0x10] sm:$0xf]
    %v529 = vld [vmem:[%s523 + $0x14] sm:$0xf]
    %v530 = vld [vmem:[%s523 + $0x18] sm:$0xf]
    %v531 = vld [vmem:[%s523 + $0x1c] sm:$0xf]
    %v532 = vld [vmem:[%s523 + $0x20] sm:$0xf]
    %v533 = vld [vmem:[%s523 + $0x24] sm:$0xf]
    %v534 = vld [vmem:[%s523 + $0x28] sm:$0xf]
    %v535 = vld [vmem:[%s523 + $0x2c] sm:$0xf]
    %v536 = vld [vmem:[%s523 + $0x30] sm:$0xf]
    %v537 = vld [vmem:[%s523 + $0x34] sm:$0xf]
    %v538 = vld [vmem:[%s523 + $0x38] sm:$0xf]
    %v539 = vld [vmem:[%s523 + $0x3c] sm:$0xf]
    %v556 = vunpack.c.l.b16 %v524
    %v557 = vunpack.c.l.b16 %v525
    %v558 = vunpack.c.l.b16 %v526
    %v559 = vunpack.c.l.b16 %v527
    %v560 = vunpack.c.l.b16 %v528
    %v561 = vunpack.c.l.b16 %v529
    %v562 = vunpack.c.l.b16 %v530
    %v563 = vunpack.c.l.b16 %v531
    %v564 = vunpack.c.l.b16 %v532
    %v565 = vunpack.c.l.b16 %v533
    %v566 = vunpack.c.l.b16 %v534
    %v567 = vunpack.c.l.b16 %v535
    %v568 = vunpack.c.l.b16 %v536
    %v569 = vunpack.c.l.b16 %v537
    %v570 = vunpack.c.l.b16 %v538
    %v571 = vunpack.c.l.b16 %v539
    %v572 = vpack.c.b16 %v557, %v556
    %v573 = vpack.c.b16 %v559, %v558
    %v574 = vpack.c.b16 %v561, %v560
    %v575 = vpack.c.b16 %v563, %v562
    %v576 = vpack.c.b16 %v565, %v564
    %v577 = vpack.c.b16 %v567, %v566
    %v578 = vpack.c.b16 %v569, %v568
    %v579 = vpack.c.b16 %v571, %v570
    %588 = vmatpush.bf16.msra.mxu0 %v579
    %589 = vmatpush.bf16.msra.mxu0 %v578
    %590 = vmatpush.bf16.msra.mxu0 %v577
    %591 = vmatpush.bf16.msra.mxu0 %v576
    %592 = vmatpush.bf16.msra.mxu0 %v575
    %593 = vmatpush.bf16.msra.mxu0 %v574
    %594 = vmatpush.bf16.msra.mxu0 %v573
    %595 = vmatpush.bf16.msra.mxu0 %v572
    %596 = vmatmul.bf16.gmra.mxu0 %v516
    %v597 = vpop.f32.mrf.mxu0
    %v598 = vadd.f32 0.0, %v597
    %v599 = vpop.f32.mrf.mxu0
    %v600 = vadd.f32 0.0, %v599
    %601 = vmatmul.bf16.gmra.mxu0 %v517
    %v602 = vpop.f32.mrf.mxu0
    %v603 = vadd.f32 0.0, %v602
    %v604 = vpop.f32.mrf.mxu0
    %v605 = vadd.f32 0.0, %v604
    %606 = vmatmul.bf16.gmra.mxu0 %v518
    %v607 = vpop.f32.mrf.mxu0
    %v608 = vadd.f32 0.0, %v607
    %v609 = vpop.f32.mrf.mxu0
    %v610 = vadd.f32 0.0, %v609
    %611 = vmatmul.bf16.gmra.mxu0 %v519
    %v612 = vpop.f32.mrf.mxu0
    %v613 = vadd.f32 0.0, %v612
    %v614 = vpop.f32.mrf.mxu0
    %v615 = vadd.f32 0.0, %v614
    %616 = vmatmul.bf16.gmra.mxu0 %v520
    %v617 = vpop.f32.mrf.mxu0
    %v618 = vadd.f32 0.0, %v617
    %v619 = vpop.f32.mrf.mxu0
    %v620 = vadd.f32 0.0, %v619
    %621 = vmatmul.bf16.gmra.mxu0 %v521
    %v622 = vpop.f32.mrf.mxu0
    %v623 = vadd.f32 0.0, %v622
    %v624 = vpop.f32.mrf.mxu0
    %v625 = vadd.f32 0.0, %v624
    %626 = vmatmul.bf16.gmra.mxu0 %v522
    %v627 = vpop.f32.mrf.mxu0
    %v628 = vadd.f32 0.0, %v627
    %v629 = vpop.f32.mrf.mxu0
    %630 = vdwg.mxu0
    %v647 = vunpack.c.l.b16 %v306
    %v648 = vunpack.c.l.b16 %v307
    %v649 = vunpack.c.l.b16 %v308
    %v650 = vunpack.c.l.b16 %v309
    %v651 = vunpack.c.l.b16 %v310
    %v652 = vunpack.c.l.b16 %v311
    %v653 = vunpack.c.l.b16 %v312
    %v654 = vunpack.c.l.b16 %v313
    %v655 = vunpack.c.l.b16 %v314
    %v656 = vunpack.c.l.b16 %v315
    %v657 = vunpack.c.l.b16 %v316
    %v658 = vunpack.c.l.b16 %v317
    %v659 = vunpack.c.l.b16 %v318
    %v660 = vunpack.c.l.b16 %v319
    %v661 = vunpack.c.l.b16 %v320
    %v662 = vunpack.c.l.b16 %v321
    %v663 = vpack.c.b16 %v648, %v647
    %v664 = vpack.c.b16 %v650, %v649
    %v665 = vpack.c.b16 %v652, %v651
    %v666 = vpack.c.b16 %v654, %v653
    %v667 = vpack.c.b16 %v656, %v655
    %v668 = vpack.c.b16 %v658, %v657
    %v669 = vpack.c.b16 %v660, %v659
    %v670 = vpack.c.b16 %v662, %v661
    %679 = vmatpush.bf16.msra.mxu0 %v670
    %680 = vmatpush.bf16.msra.mxu0 %v669
    %681 = vmatpush.bf16.msra.mxu0 %v668
    %682 = vmatpush.bf16.msra.mxu0 %v667
    %683 = vmatpush.bf16.msra.mxu0 %v666
    %684 = vmatpush.bf16.msra.mxu0 %v665
    %685 = vmatpush.bf16.msra.mxu0 %v664
    %686 = vmatpush.bf16.msra.mxu0 %v663
    %687 = vmatmul.bf16.gmra.mxu0 %v299
    %v688 = vpop.f32.mrf.mxu0
    %v689 = vadd.f32 %v483, %v688
    %v690 = vpop.f32.mrf.mxu0
    %v691 = vadd.f32 %v485, %v690
    %692 = vmatmul.bf16.gmra.mxu0 %v300
    %v693 = vpop.f32.mrf.mxu0
    %v694 = vadd.f32 %v488, %v693
    %v695 = vpop.f32.mrf.mxu0
    %v696 = vadd.f32 %v490, %v695
    %697 = vmatmul.bf16.gmra.mxu0 %v301
    %v698 = vpop.f32.mrf.mxu0
    %v699 = vadd.f32 %v493, %v698
    %v700 = vpop.f32.mrf.mxu0
    %v701 = vadd.f32 %v495, %v700
    %702 = vmatmul.bf16.gmra.mxu0 %v302
    %v703 = vpop.f32.mrf.mxu0
    %v704 = vadd.f32 %v498, %v703
    %v705 = vpop.f32.mrf.mxu0
    %v706 = vadd.f32 %v500, %v705
    %707 = vmatmul.bf16.gmra.mxu0 %v303
    %v708 = vpop.f32.mrf.mxu0
    %v709 = vadd.f32 %v503, %v708
    %v710 = vpop.f32.mrf.mxu0
    %v711 = vadd.f32 %v505, %v710
    %712 = vmatmul.bf16.gmra.mxu0 %v304
    %v713 = vpop.f32.mrf.mxu0
    %v714 = vadd.f32 %v508, %v713
    %v715 = vpop.f32.mrf.mxu0
    %v716 = vadd.f32 %v510, %v715
    %717 = vmatmul.bf16.gmra.mxu0 %v305
    %v718 = vpop.f32.mrf.mxu0
    %v719 = vadd.f32 %v513, %v718
    %v720 = vpop.f32.mrf.mxu0
    %721 = vdwg.mxu0
    %v722 = vadd.f32 %v689, %v598
    %v723 = vadd.f32 %v691, %v600
    %v724 = vadd.f32 %v694, %v603
    %v725 = vadd.f32 %v696, %v605
    %v726 = vadd.f32 %v699, %v608
    %v727 = vadd.f32 %v701, %v610
    %v728 = vadd.f32 %v704, %v613
    %v729 = vadd.f32 %v706, %v615
    %v730 = vadd.f32 %v709, %v618
    %v731 = vadd.f32 %v711, %v620
    %v732 = vadd.f32 %v714, %v623
    %v733 = vadd.f32 %v716, %v625
    %v734 = vadd.f32 %v719, %v628
    %v735 = vld [vmem:[%s2] sm:$0x1]
    %v737 = vperm.slane %v735, 0
    %v739 = vadd.f32 %v722, %v737
    %v740 = vadd.f32 %v723, %v737
    %v741 = vadd.f32 %v724, %v737
    %v742 = vadd.f32 %v725, %v737
    %v743 = vadd.f32 %v726, %v737
    %v744 = vadd.f32 %v727, %v737
    %v745 = vadd.f32 %v728, %v737
    %v746 = vadd.f32 %v729, %v737
    %v747 = vadd.f32 %v730, %v737
    %v748 = vadd.f32 %v731, %v737
    %v749 = vadd.f32 %v732, %v737
    %v750 = vadd.f32 %v733, %v737
    %v751 = vadd.f32 %v734, %v737
    %v752 = vmax.f32 %v739, 0.0
    %v753 = vmax.f32 %v740, 0.0
    %v754 = vmax.f32 %v741, 0.0
    %v755 = vmax.f32 %v742, 0.0
    %v756 = vmax.f32 %v743, 0.0
    %v757 = vmax.f32 %v744, 0.0
    %v758 = vmax.f32 %v745, 0.0
    %v759 = vmax.f32 %v746, 0.0
    %v760 = vmax.f32 %v747, 0.0
    %v761 = vmax.f32 %v748, 0.0
    %v762 = vmax.f32 %v749, 0.0
    %v763 = vmax.f32 %v750, 0.0
    %v764 = vmax.f32 %v751, 0.0
    %v765 = vmul.f32 %v752, %v73
    %v766 = vmul.f32 %v753, %v74
    %v767 = vmul.f32 %v754, %v75
    %v768 = vmul.f32 %v755, %v76
    %v769 = vmul.f32 %v756, %v77
    %v770 = vmul.f32 %v757, %v78
    %v771 = vmul.f32 %v758, %v79
    %v772 = vmul.f32 %v759, %v80
    %v773 = vmul.f32 %v760, %v81
    %v774 = vmul.f32 %v761, %v82
    %v775 = vmul.f32 %v762, %v83
    %v776 = vmul.f32 %v763, %v84
    %v777 = vmul.f32 %v764, %v85
    %v778 = vrot.slane %v765, 1
    %v779 = vrot.slane %v766, 1
    %v780 = vrot.slane %v767, 1
    %v781 = vrot.slane %v768, 1
    %v782 = vrot.slane %v769, 1
    %v783 = vrot.slane %v770, 1
    %v784 = vrot.slane %v771, 1
    %v785 = vrot.slane %v772, 1
    %v786 = vrot.slane %v773, 1
    %v787 = vrot.slane %v774, 1
    %v788 = vrot.slane %v775, 1
    %v789 = vrot.slane %v776, 1
    %v790 = vrot.slane %v777, 1
    %v791 = vsel %vm114, %v789, %v790
    %v792 = vsel %vm114, %v788, %v789
    %v793 = vsel %vm114, %v787, %v788
    %v794 = vsel %vm114, %v786, %v787
    %v795 = vsel %vm114, %v785, %v786
    %v796 = vsel %vm114, %v784, %v785
    %v797 = vsel %vm114, %v783, %v784
    %v798 = vsel %vm114, %v782, %v783
    %v799 = vsel %vm114, %v781, %v782
    %v800 = vsel %vm114, %v780, %v781
    %v801 = vsel %vm114, %v779, %v780
    %v802 = vsel %vm114, %v778, %v779
    %v803 = vsel %vm114, %v790, %v778
    %804 = vrot.lane.b32.xlu0 %v803, 32
    %v805 = vpop.permute.xlu0 %804
    %806 = vrot.lane.b32.xlu0 %v802, 32
    %v807 = vpop.permute.xlu0 %806
    %808 = vrot.lane.b32.xlu0 %v801, 32
    %v809 = vpop.permute.xlu0 %808
    %810 = vrot.lane.b32.xlu0 %v800, 32
    %v811 = vpop.permute.xlu0 %810
    %812 = vrot.lane.b32.xlu0 %v799, 32
    %v813 = vpop.permute.xlu0 %812
    %814 = vrot.lane.b32.xlu0 %v798, 32
    %v815 = vpop.permute.xlu0 %814
    %816 = vrot.lane.b32.xlu0 %v797, 32
    %v817 = vpop.permute.xlu0 %816
    %818 = vrot.lane.b32.xlu0 %v796, 32
    %v819 = vpop.permute.xlu0 %818
    %820 = vrot.lane.b32.xlu0 %v795, 32
    %v821 = vpop.permute.xlu0 %820
    %822 = vrot.lane.b32.xlu0 %v794, 32
    %v823 = vpop.permute.xlu0 %822
    %824 = vrot.lane.b32.xlu0 %v793, 32
    %v825 = vpop.permute.xlu0 %824
    %826 = vrot.lane.b32.xlu0 %v792, 32
    %v827 = vpop.permute.xlu0 %826
    %828 = vrot.lane.b32.xlu0 %v791, 32
    %v829 = vpop.permute.xlu0 %828
    %v830 = vadd.f32 %v777, %v805
    %v831 = vadd.f32 %v765, %v807
    %v832 = vadd.f32 %v766, %v809
    %v833 = vadd.f32 %v767, %v811
    %v834 = vadd.f32 %v768, %v813
    %v835 = vadd.f32 %v769, %v815
    %v836 = vadd.f32 %v770, %v817
    %v837 = vadd.f32 %v771, %v819
    %v838 = vadd.f32 %v772, %v821
    %v839 = vadd.f32 %v773, %v823
    %v840 = vadd.f32 %v774, %v825
    %v841 = vadd.f32 %v775, %v827
    %v842 = vadd.f32 %v776, %v829
    %v843 = vrot.slane %v765, 2
    %v844 = vrot.slane %v766, 2
    %v845 = vrot.slane %v767, 2
    %v846 = vrot.slane %v768, 2
    %v847 = vrot.slane %v769, 2
    %v848 = vrot.slane %v770, 2
    %v849 = vrot.slane %v771, 2
    %v850 = vrot.slane %v772, 2
    %v851 = vrot.slane %v773, 2
    %v852 = vrot.slane %v774, 2
    %v853 = vrot.slane %v775, 2
    %v854 = vrot.slane %v776, 2
    %v855 = vrot.slane %v777, 2
    %v856 = vsel %vm180, %v854, %v855
    %v857 = vsel %vm180, %v853, %v854
    %v858 = vsel %vm180, %v852, %v853
    %v859 = vsel %vm180, %v851, %v852
    %v860 = vsel %vm180, %v850, %v851
    %v861 = vsel %vm180, %v849, %v850
    %v862 = vsel %vm180, %v848, %v849
    %v863 = vsel %vm180, %v847, %v848
    %v864 = vsel %vm180, %v846, %v847
    %v865 = vsel %vm180, %v845, %v846
    %v866 = vsel %vm180, %v844, %v845
    %v867 = vsel %vm180, %v843, %v844
    %v868 = vsel %vm180, %v855, %v843
    %869 = vrot.lane.b32.xlu0 %v868, 64
    %v870 = vpop.permute.xlu0 %869
    %871 = vrot.lane.b32.xlu0 %v867, 64
    %v872 = vpop.permute.xlu0 %871
    %873 = vrot.lane.b32.xlu0 %v866, 64
    %v874 = vpop.permute.xlu0 %873
    %875 = vrot.lane.b32.xlu0 %v865, 64
    %v876 = vpop.permute.xlu0 %875
    %877 = vrot.lane.b32.xlu0 %v864, 64
    %v878 = vpop.permute.xlu0 %877
    %879 = vrot.lane.b32.xlu0 %v863, 64
    %v880 = vpop.permute.xlu0 %879
    %881 = vrot.lane.b32.xlu0 %v862, 64
    %v882 = vpop.permute.xlu0 %881
    %883 = vrot.lane.b32.xlu0 %v861, 64
    %v884 = vpop.permute.xlu0 %883
    %885 = vrot.lane.b32.xlu0 %v860, 64
    %v886 = vpop.permute.xlu0 %885
    %887 = vrot.lane.b32.xlu0 %v859, 64
    %v888 = vpop.permute.xlu0 %887
    %889 = vrot.lane.b32.xlu0 %v858, 64
    %v890 = vpop.permute.xlu0 %889
    %891 = vrot.lane.b32.xlu0 %v857, 64
    %v892 = vpop.permute.xlu0 %891
    %893 = vrot.lane.b32.xlu0 %v856, 64
    %v894 = vpop.permute.xlu0 %893
    %v895 = vadd.f32 %v830, %v870
    %v896 = vadd.f32 %v831, %v872
    %v897 = vadd.f32 %v832, %v874
    %v898 = vadd.f32 %v833, %v876
    %v899 = vadd.f32 %v834, %v878
    %v900 = vadd.f32 %v835, %v880
    %v901 = vadd.f32 %v836, %v882
    %v902 = vadd.f32 %v837, %v884
    %v903 = vadd.f32 %v838, %v886
    %v904 = vadd.f32 %v839, %v888
    %v905 = vadd.f32 %v840, %v890
    %v906 = vadd.f32 %v841, %v892
    %v907 = vadd.f32 %v842, %v894
    %v908 = vrot.slane %v765, 7
    %v909 = vrot.slane %v766, 7
    %v910 = vrot.slane %v767, 7
    %v911 = vrot.slane %v768, 7
    %v912 = vrot.slane %v769, 7
    %v913 = vrot.slane %v770, 7
    %v914 = vrot.slane %v771, 7
    %v915 = vrot.slane %v772, 7
    %v916 = vrot.slane %v773, 7
    %v917 = vrot.slane %v774, 7
    %v918 = vrot.slane %v775, 7
    %v919 = vrot.slane %v776, 7
    %v920 = vrot.slane %v777, 7
    %v921 = vsel %vm246, %v919, %v920
    %v922 = vsel %vm246, %v918, %v919
    %v923 = vsel %vm246, %v917, %v918
    %v924 = vsel %vm246, %v916, %v917
    %v925 = vsel %vm246, %v915, %v916
    %v926 = vsel %vm246, %v914, %v915
    %v927 = vsel %vm246, %v913, %v914
    %v928 = vsel %vm246, %v912, %v913
    %v929 = vsel %vm246, %v911, %v912
    %v930 = vsel %vm246, %v910, %v911
    %v931 = vsel %vm246, %v909, %v910
    %v932 = vsel %vm246, %v908, %v909
    %v933 = vsel %vm246, %v920, %v908
    %934 = vrot.lane.b32.xlu0 %v933, 96
    %v935 = vpop.permute.xlu0 %934
    %936 = vrot.lane.b32.xlu0 %v932, 96
    %v937 = vpop.permute.xlu0 %936
    %938 = vrot.lane.b32.xlu0 %v931, 96
    %v939 = vpop.permute.xlu0 %938
    %940 = vrot.lane.b32.xlu0 %v930, 96
    %v941 = vpop.permute.xlu0 %940
    %942 = vrot.lane.b32.xlu0 %v929, 96
    %v943 = vpop.permute.xlu0 %942
    %944 = vrot.lane.b32.xlu0 %v928, 96
    %v945 = vpop.permute.xlu0 %944
    %946 = vrot.lane.b32.xlu0 %v927, 96
    %v947 = vpop.permute.xlu0 %946
    %948 = vrot.lane.b32.xlu0 %v926, 96
    %v949 = vpop.permute.xlu0 %948
    %950 = vrot.lane.b32.xlu0 %v925, 96
    %v951 = vpop.permute.xlu0 %950
    %952 = vrot.lane.b32.xlu0 %v924, 96
    %v953 = vpop.permute.xlu0 %952
    %954 = vrot.lane.b32.xlu0 %v923, 96
    %v955 = vpop.permute.xlu0 %954
    %956 = vrot.lane.b32.xlu0 %v922, 96
    %v957 = vpop.permute.xlu0 %956
    %958 = vrot.lane.b32.xlu0 %v921, 96
    %v959 = vpop.permute.xlu0 %958
    %v960 = vadd.f32 %v895, %v935
    %v961 = vadd.f32 %v896, %v937
    %v962 = vadd.f32 %v897, %v939
    %v963 = vadd.f32 %v898, %v941
    %v964 = vadd.f32 %v899, %v943
    %v965 = vadd.f32 %v900, %v945
    %v966 = vadd.f32 %v901, %v947
    %v967 = vadd.f32 %v902, %v949
    %v968 = vadd.f32 %v903, %v951
    %v969 = vadd.f32 %v904, %v953
    %v970 = vadd.f32 %v905, %v955
    %v971 = vadd.f32 %v906, %v957
    %v972 = vadd.f32 %v907, %v959
    %v973 = vpack.c.bf16 %v961, %v960
    %v974 = vpack.c.bf16 %v963, %v962
    %v975 = vpack.c.bf16 %v965, %v964
    %v976 = vpack.c.bf16 %v967, %v966
    %v977 = vpack.c.bf16 %v969, %v968
    %v978 = vpack.c.bf16 %v971, %v970
    %v979 = vpack.c.bf16 %v972, %v972
    %s980 = scalar_lea.vmem [#allocation2], 192
    %v981 = vld [vmem:[%s980] sm:$0xf]
    %v982 = vld [vmem:[%s980 + $0x4] sm:$0xf]
    %v983 = vld [vmem:[%s980 + $0x8] sm:$0xf]
    %v984 = vld [vmem:[%s980 + $0xc] sm:$0xf]
    %v985 = vld [vmem:[%s980 + $0x10] sm:$0xf]
    %v986 = vld [vmem:[%s980 + $0x14] sm:$0xf]
    %v987 = vld [vmem:[%s980 + $0x18] sm:$0xf]
    %v988 = vld [vmem:[%s980 + $0x1c] sm:$0xf]
    %v989 = vld [vmem:[%s980 + $0x20] sm:$0xf]
    %v990 = vld [vmem:[%s980 + $0x24] sm:$0xf]
    %v991 = vld [vmem:[%s980 + $0x28] sm:$0xf]
    %v992 = vld [vmem:[%s980 + $0x2c] sm:$0xf]
    %v993 = vld [vmem:[%s980 + $0x30] sm:$0xf]
    %v994 = vld [vmem:[%s980 + $0x34] sm:$0xf]
    %v995 = vld [vmem:[%s980 + $0x38] sm:$0xf]
    %v996 = vld [vmem:[%s980 + $0x3c] sm:$0xf]
    %v997 = vrot.slane %v765, 6
    %v998 = vrot.slane %v766, 6
    %v999 = vrot.slane %v767, 6
    %v1000 = vrot.slane %v768, 6
    %v1001 = vrot.slane %v769, 6
    %v1002 = vrot.slane %v770, 6
    %v1003 = vrot.slane %v771, 6
    %v1004 = vrot.slane %v772, 6
    %v1005 = vrot.slane %v773, 6
    %v1006 = vrot.slane %v774, 6
    %v1007 = vrot.slane %v775, 6
    %v1008 = vrot.slane %v776, 6
    %v1009 = vrot.slane %v777, 6
    %v1010 = vsel %vm335, %v1008, %v1009
    %v1011 = vsel %vm335, %v1007, %v1008
    %v1012 = vsel %vm335, %v1006, %v1007
    %v1013 = vsel %vm335, %v1005, %v1006
    %v1014 = vsel %vm335, %v1004, %v1005
    %v1015 = vsel %vm335, %v1003, %v1004
    %v1016 = vsel %vm335, %v1002, %v1003
    %v1017 = vsel %vm335, %v1001, %v1002
    %v1018 = vsel %vm335, %v1000, %v1001
    %v1019 = vsel %vm335, %v999, %v1000
    %v1020 = vsel %vm335, %v998, %v999
    %v1021 = vsel %vm335, %v997, %v998
    %v1022 = vsel %vm335, %v1009, %v997
    %1023 = vrot.lane.b32.xlu0 %v1021, 64
    %v1024 = vpop.permute.xlu0 %1023
    %1025 = vrot.lane.b32.xlu0 %v1020, 64
    %v1026 = vpop.permute.xlu0 %1025
    %1027 = vrot.lane.b32.xlu0 %v1019, 64
    %v1028 = vpop.permute.xlu0 %1027
    %1029 = vrot.lane.b32.xlu0 %v1018, 64
    %v1030 = vpop.permute.xlu0 %1029
    %1031 = vrot.lane.b32.xlu0 %v1017, 64
    %v1032 = vpop.permute.xlu0 %1031
    %1033 = vrot.lane.b32.xlu0 %v1016, 64
    %v1034 = vpop.permute.xlu0 %1033
    %1035 = vrot.lane.b32.xlu0 %v1015, 64
    %v1036 = vpop.permute.xlu0 %1035
    %1037 = vrot.lane.b32.xlu0 %v1014, 64
    %v1038 = vpop.permute.xlu0 %1037
    %1039 = vrot.lane.b32.xlu0 %v1013, 64
    %v1040 = vpop.permute.xlu0 %1039
    %1041 = vrot.lane.b32.xlu0 %v1012, 64
    %v1042 = vpop.permute.xlu0 %1041
    %1043 = vrot.lane.b32.xlu0 %v1011, 64
    %v1044 = vpop.permute.xlu0 %1043
    %1045 = vrot.lane.b32.xlu0 %v1010, 64
    %v1046 = vpop.permute.xlu0 %1045
    %1047 = vrot.lane.b32.xlu0 %v1022, 64
    %v1048 = vpop.permute.xlu0 %1047
    %v1049 = vadd.f32 %v831, %v1024
    %v1050 = vadd.f32 %v832, %v1026
    %v1051 = vadd.f32 %v833, %v1028
    %v1052 = vadd.f32 %v834, %v1030
    %v1053 = vadd.f32 %v835, %v1032
    %v1054 = vadd.f32 %v836, %v1034
    %v1055 = vadd.f32 %v837, %v1036
    %v1056 = vadd.f32 %v838, %v1038
    %v1057 = vadd.f32 %v839, %v1040
    %v1058 = vadd.f32 %v840, %v1042
    %v1059 = vadd.f32 %v841, %v1044
    %v1060 = vadd.f32 %v842, %v1046
    %v1061 = vadd.f32 %v830, %v1048
    %v1062 = vadd.f32 %v1049, %v937
    %v1063 = vadd.f32 %v1050, %v939
    %v1064 = vadd.f32 %v1051, %v941
    %v1065 = vadd.f32 %v1052, %v943
    %v1066 = vadd.f32 %v1053, %v945
    %v1067 = vadd.f32 %v1054, %v947
    %v1068 = vadd.f32 %v1055, %v949
    %v1069 = vadd.f32 %v1056, %v951
    %v1070 = vadd.f32 %v1057, %v953
    %v1071 = vadd.f32 %v1058, %v955
    %v1072 = vadd.f32 %v1059, %v957
    %v1073 = vadd.f32 %v1060, %v959
    %v1074 = vadd.f32 %v1061, %v935
    %v1075 = vpack.c.bf16 %v1063, %v1062
    %v1076 = vpack.c.bf16 %v1065, %v1064
    %v1077 = vpack.c.bf16 %v1067, %v1066
    %v1078 = vpack.c.bf16 %v1069, %v1068
    %v1079 = vpack.c.bf16 %v1071, %v1070
    %v1080 = vpack.c.bf16 %v1073, %v1072
    %v1081 = vpack.c.bf16 %v1074, %v1074
    %s1082 = scalar_lea.vmem [#allocation2], 256
    %v1083 = vld [vmem:[%s1082] sm:$0xf]
    %v1084 = vld [vmem:[%s1082 + $0x4] sm:$0xf]
    %v1085 = vld [vmem:[%s1082 + $0x8] sm:$0xf]
    %v1086 = vld [vmem:[%s1082 + $0xc] sm:$0xf]
    %v1087 = vld [vmem:[%s1082 + $0x10] sm:$0xf]
    %v1088 = vld [vmem:[%s1082 + $0x14] sm:$0xf]
    %v1089 = vld [vmem:[%s1082 + $0x18] sm:$0xf]
    %v1090 = vld [vmem:[%s1082 + $0x1c] sm:$0xf]
    %v1091 = vld [vmem:[%s1082 + $0x20] sm:$0xf]
    %v1092 = vld [vmem:[%s1082 + $0x24] sm:$0xf]
    %v1093 = vld [vmem:[%s1082 + $0x28] sm:$0xf]
    %v1094 = vld [vmem:[%s1082 + $0x2c] sm:$0xf]
    %v1095 = vld [vmem:[%s1082 + $0x30] sm:$0xf]
    %v1096 = vld [vmem:[%s1082 + $0x34] sm:$0xf]
    %v1097 = vld [vmem:[%s1082 + $0x38] sm:$0xf]
    %v1098 = vld [vmem:[%s1082 + $0x3c] sm:$0xf]
    %v1115 = vunpack.c.l.b16 %v1083
    %v1116 = vunpack.c.l.b16 %v1084
    %v1117 = vunpack.c.l.b16 %v1085
    %v1118 = vunpack.c.l.b16 %v1086
    %v1119 = vunpack.c.l.b16 %v1087
    %v1120 = vunpack.c.l.b16 %v1088
    %v1121 = vunpack.c.l.b16 %v1089
    %v1122 = vunpack.c.l.b16 %v1090
    %v1123 = vunpack.c.l.b16 %v1091
    %v1124 = vunpack.c.l.b16 %v1092
    %v1125 = vunpack.c.l.b16 %v1093
    %v1126 = vunpack.c.l.b16 %v1094
    %v1127 = vunpack.c.l.b16 %v1095
    %v1128 = vunpack.c.l.b16 %v1096
    %v1129 = vunpack.c.l.b16 %v1097
    %v1130 = vunpack.c.l.b16 %v1098
    %v1131 = vpack.c.b16 %v1116, %v1115
    %v1132 = vpack.c.b16 %v1118, %v1117
    %v1133 = vpack.c.b16 %v1120, %v1119
    %v1134 = vpack.c.b16 %v1122, %v1121
    %v1135 = vpack.c.b16 %v1124, %v1123
    %v1136 = vpack.c.b16 %v1126, %v1125
    %v1137 = vpack.c.b16 %v1128, %v1127
    %v1138 = vpack.c.b16 %v1130, %v1129
    %1147 = vmatpush.bf16.msra.mxu0 %v1138
    %1148 = vmatpush.bf16.msra.mxu0 %v1137
    %1149 = vmatpush.bf16.msra.mxu0 %v1136
    %1150 = vmatpush.bf16.msra.mxu0 %v1135
    %1151 = vmatpush.bf16.msra.mxu0 %v1134
    %1152 = vmatpush.bf16.msra.mxu0 %v1133
    %1153 = vmatpush.bf16.msra.mxu0 %v1132
    %1154 = vmatpush.bf16.msra.mxu0 %v1131
    %1155 = vmatmul.bf16.gmra.mxu0 %v1075
    %v1156 = vpop.f32.mrf.mxu0
    %v1157 = vadd.f32 0.0, %v1156
    %v1158 = vpop.f32.mrf.mxu0
    %v1159 = vadd.f32 0.0, %v1158
    %1160 = vmatmul.bf16.gmra.mxu0 %v1076
    %v1161 = vpop.f32.mrf.mxu0
    %v1162 = vadd.f32 0.0, %v1161
    %v1163 = vpop.f32.mrf.mxu0
    %v1164 = vadd.f32 0.0, %v1163
    %1165 = vmatmul.bf16.gmra.mxu0 %v1077
    %v1166 = vpop.f32.mrf.mxu0
    %v1167 = vadd.f32 0.0, %v1166
    %v1168 = vpop.f32.mrf.mxu0
    %v1169 = vadd.f32 0.0, %v1168
    %1170 = vmatmul.bf16.gmra.mxu0 %v1078
    %v1171 = vpop.f32.mrf.mxu0
    %v1172 = vadd.f32 0.0, %v1171
    %v1173 = vpop.f32.mrf.mxu0
    %v1174 = vadd.f32 0.0, %v1173
    %1175 = vmatmul.bf16.gmra.mxu0 %v1079
    %v1176 = vpop.f32.mrf.mxu0
    %v1177 = vadd.f32 0.0, %v1176
    %v1178 = vpop.f32.mrf.mxu0
    %v1179 = vadd.f32 0.0, %v1178
    %1180 = vmatmul.bf16.gmra.mxu0 %v1080
    %v1181 = vpop.f32.mrf.mxu0
    %v1182 = vadd.f32 0.0, %v1181
    %v1183 = vpop.f32.mrf.mxu0
    %v1184 = vadd.f32 0.0, %v1183
    %1185 = vmatmul.bf16.gmra.mxu0 %v1081
    %v1186 = vpop.f32.mrf.mxu0
    %v1187 = vadd.f32 0.0, %v1186
    %v1188 = vpop.f32.mrf.mxu0
    %1189 = vdwg.mxu0
    %v1190 = vpack.c.bf16 %v767, %v766
    %v1191 = vpack.c.bf16 %v769, %v768
    %v1192 = vpack.c.bf16 %v771, %v770
    %v1193 = vpack.c.bf16 %v773, %v772
    %v1194 = vpack.c.bf16 %v775, %v774
    %v1195 = vpack.c.bf16 %v777, %v776
    %v1196 = vpack.c.bf16 %v765, %v765
    %s1197 = scalar_lea.vmem [#allocation2], 320
    %v1198 = vld [vmem:[%s1197] sm:$0xf]
    %v1199 = vld [vmem:[%s1197 + $0x4] sm:$0xf]
    %v1200 = vld [vmem:[%s1197 + $0x8] sm:$0xf]
    %v1201 = vld [vmem:[%s1197 + $0xc] sm:$0xf]
    %v1202 = vld [vmem:[%s1197 + $0x10] sm:$0xf]
    %v1203 = vld [vmem:[%s1197 + $0x14] sm:$0xf]
    %v1204 = vld [vmem:[%s1197 + $0x18] sm:$0xf]
    %v1205 = vld [vmem:[%s1197 + $0x1c] sm:$0xf]
    %v1206 = vld [vmem:[%s1197 + $0x20] sm:$0xf]
    %v1207 = vld [vmem:[%s1197 + $0x24] sm:$0xf]
    %v1208 = vld [vmem:[%s1197 + $0x28] sm:$0xf]
    %v1209 = vld [vmem:[%s1197 + $0x2c] sm:$0xf]
    %v1210 = vld [vmem:[%s1197 + $0x30] sm:$0xf]
    %v1211 = vld [vmem:[%s1197 + $0x34] sm:$0xf]
    %v1212 = vld [vmem:[%s1197 + $0x38] sm:$0xf]
    %v1213 = vld [vmem:[%s1197 + $0x3c] sm:$0xf]
    %v1230 = vunpack.c.l.b16 %v1198
    %v1231 = vunpack.c.l.b16 %v1199
    %v1232 = vunpack.c.l.b16 %v1200
    %v1233 = vunpack.c.l.b16 %v1201
    %v1234 = vunpack.c.l.b16 %v1202
    %v1235 = vunpack.c.l.b16 %v1203
    %v1236 = vunpack.c.l.b16 %v1204
    %v1237 = vunpack.c.l.b16 %v1205
    %v1238 = vunpack.c.l.b16 %v1206
    %v1239 = vunpack.c.l.b16 %v1207
    %v1240 = vunpack.c.l.b16 %v1208
    %v1241 = vunpack.c.l.b16 %v1209
    %v1242 = vunpack.c.l.b16 %v1210
    %v1243 = vunpack.c.l.b16 %v1211
    %v1244 = vunpack.c.l.b16 %v1212
    %v1245 = vunpack.c.l.b16 %v1213
    %v1246 = vpack.c.b16 %v1231, %v1230
    %v1247 = vpack.c.b16 %v1233, %v1232
    %v1248 = vpack.c.b16 %v1235, %v1234
    %v1249 = vpack.c.b16 %v1237, %v1236
    %v1250 = vpack.c.b16 %v1239, %v1238
    %v1251 = vpack.c.b16 %v1241, %v1240
    %v1252 = vpack.c.b16 %v1243, %v1242
    %v1253 = vpack.c.b16 %v1245, %v1244
    %1262 = vmatpush.bf16.msra.mxu0 %v1253
    %1263 = vmatpush.bf16.msra.mxu0 %v1252
    %1264 = vmatpush.bf16.msra.mxu0 %v1251
    %1265 = vmatpush.bf16.msra.mxu0 %v1250
    %1266 = vmatpush.bf16.msra.mxu0 %v1249
    %1267 = vmatpush.bf16.msra.mxu0 %v1248
    %1268 = vmatpush.bf16.msra.mxu0 %v1247
    %1269 = vmatpush.bf16.msra.mxu0 %v1246
    %1270 = vmatmul.bf16.gmra.mxu0 %v1190
    %v1271 = vpop.f32.mrf.mxu0
    %v1272 = vadd.f32 0.0, %v1271
    %v1273 = vpop.f32.mrf.mxu0
    %v1274 = vadd.f32 0.0, %v1273
    %1275 = vmatmul.bf16.gmra.mxu0 %v1191
    %v1276 = vpop.f32.mrf.mxu0
    %v1277 = vadd.f32 0.0, %v1276
    %v1278 = vpop.f32.mrf.mxu0
    %v1279 = vadd.f32 0.0, %v1278
    %1280 = vmatmul.bf16.gmra.mxu0 %v1192
    %v1281 = vpop.f32.mrf.mxu0
    %v1282 = vadd.f32 0.0, %v1281
    %v1283 = vpop.f32.mrf.mxu0
    %v1284 = vadd.f32 0.0, %v1283
    %1285 = vmatmul.bf16.gmra.mxu0 %v1193
    %v1286 = vpop.f32.mrf.mxu0
    %v1287 = vadd.f32 0.0, %v1286
    %v1288 = vpop.f32.mrf.mxu0
    %v1289 = vadd.f32 0.0, %v1288
    %1290 = vmatmul.bf16.gmra.mxu0 %v1194
    %v1291 = vpop.f32.mrf.mxu0
    %v1292 = vadd.f32 0.0, %v1291
    %v1293 = vpop.f32.mrf.mxu0
    %v1294 = vadd.f32 0.0, %v1293
    %1295 = vmatmul.bf16.gmra.mxu0 %v1195
    %v1296 = vpop.f32.mrf.mxu0
    %v1297 = vadd.f32 0.0, %v1296
    %v1298 = vpop.f32.mrf.mxu0
    %v1299 = vadd.f32 0.0, %v1298
    %1300 = vmatmul.bf16.gmra.mxu0 %v1196
    %v1301 = vpop.f32.mrf.mxu0
    %v1302 = vadd.f32 0.0, %v1301
    %v1303 = vpop.f32.mrf.mxu0
    %1304 = vdwg.mxu0
    %v1321 = vunpack.c.l.b16 %v981
    %v1322 = vunpack.c.l.b16 %v982
    %v1323 = vunpack.c.l.b16 %v983
    %v1324 = vunpack.c.l.b16 %v984
    %v1325 = vunpack.c.l.b16 %v985
    %v1326 = vunpack.c.l.b16 %v986
    %v1327 = vunpack.c.l.b16 %v987
    %v1328 = vunpack.c.l.b16 %v988
    %v1329 = vunpack.c.l.b16 %v989
    %v1330 = vunpack.c.l.b16 %v990
    %v1331 = vunpack.c.l.b16 %v991
    %v1332 = vunpack.c.l.b16 %v992
    %v1333 = vunpack.c.l.b16 %v993
    %v1334 = vunpack.c.l.b16 %v994
    %v1335 = vunpack.c.l.b16 %v995
    %v1336 = vunpack.c.l.b16 %v996
    %v1337 = vpack.c.b16 %v1322, %v1321
    %v1338 = vpack.c.b16 %v1324, %v1323
    %v1339 = vpack.c.b16 %v1326, %v1325
    %v1340 = vpack.c.b16 %v1328, %v1327
    %v1341 = vpack.c.b16 %v1330, %v1329
    %v1342 = vpack.c.b16 %v1332, %v1331
    %v1343 = vpack.c.b16 %v1334, %v1333
    %v1344 = vpack.c.b16 %v1336, %v1335
    %1353 = vmatpush.bf16.msra.mxu0 %v1344
    %1354 = vmatpush.bf16.msra.mxu0 %v1343
    %1355 = vmatpush.bf16.msra.mxu0 %v1342
    %1356 = vmatpush.bf16.msra.mxu0 %v1341
    %1357 = vmatpush.bf16.msra.mxu0 %v1340
    %1358 = vmatpush.bf16.msra.mxu0 %v1339
    %1359 = vmatpush.bf16.msra.mxu0 %v1338
    %1360 = vmatpush.bf16.msra.mxu0 %v1337
    %1361 = vmatmul.bf16.gmra.mxu0 %v973
    %v1362 = vpop.f32.mrf.mxu0
    %v1363 = vadd.f32 %v1157, %v1362
    %v1364 = vpop.f32.mrf.mxu0
    %v1365 = vadd.f32 %v1159, %v1364
    %1366 = vmatmul.bf16.gmra.mxu0 %v974
    %v1367 = vpop.f32.mrf.mxu0
    %v1368 = vadd.f32 %v1162, %v1367
    %v1369 = vpop.f32.mrf.mxu0
    %v1370 = vadd.f32 %v1164, %v1369
    %1371 = vmatmul.bf16.gmra.mxu0 %v975
    %v1372 = vpop.f32.mrf.mxu0
    %v1373 = vadd.f32 %v1167, %v1372
    %v1374 = vpop.f32.mrf.mxu0
    %v1375 = vadd.f32 %v1169, %v1374
    %1376 = vmatmul.bf16.gmra.mxu0 %v976
    %v1377 = vpop.f32.mrf.mxu0
    %v1378 = vadd.f32 %v1172, %v1377
    %v1379 = vpop.f32.mrf.mxu0
    %v1380 = vadd.f32 %v1174, %v1379
    %1381 = vmatmul.bf16.gmra.mxu0 %v977
    %v1382 = vpop.f32.mrf.mxu0
    %v1383 = vadd.f32 %v1177, %v1382
    %v1384 = vpop.f32.mrf.mxu0
    %v1385 = vadd.f32 %v1179, %v1384
    %1386 = vmatmul.bf16.gmra.mxu0 %v978
    %v1387 = vpop.f32.mrf.mxu0
    %v1388 = vadd.f32 %v1182, %v1387
    %v1389 = vpop.f32.mrf.mxu0
    %v1390 = vadd.f32 %v1184, %v1389
    %1391 = vmatmul.bf16.gmra.mxu0 %v979
    %v1392 = vpop.f32.mrf.mxu0
    %v1393 = vadd.f32 %v1187, %v1392
    %v1394 = vpop.f32.mrf.mxu0
    %1395 = vdwg.mxu0
    %v1396 = vadd.f32 %v1363, %v1272
    %v1397 = vadd.f32 %v1365, %v1274
    %v1398 = vadd.f32 %v1368, %v1277
    %v1399 = vadd.f32 %v1370, %v1279
    %v1400 = vadd.f32 %v1373, %v1282
    %v1401 = vadd.f32 %v1375, %v1284
    %v1402 = vadd.f32 %v1378, %v1287
    %v1403 = vadd.f32 %v1380, %v1289
    %v1404 = vadd.f32 %v1383, %v1292
    %v1405 = vadd.f32 %v1385, %v1294
    %v1406 = vadd.f32 %v1388, %v1297
    %v1407 = vadd.f32 %v1390, %v1299
    %v1408 = vadd.f32 %v1393, %v1302
    %s1409 = scalar_lea.vmem %s2, 1
    %v1410 = vld [vmem:[%s1409] sm:$0x1]
    %v1412 = vperm.slane %v1410, 0
    %v1414 = vadd.f32 %v1396, %v1412
    %v1415 = vadd.f32 %v1397, %v1412
    %v1416 = vadd.f32 %v1398, %v1412
    %v1417 = vadd.f32 %v1399, %v1412
    %v1418 = vadd.f32 %v1400, %v1412
    %v1419 = vadd.f32 %v1401, %v1412
    %v1420 = vadd.f32 %v1402, %v1412
    %v1421 = vadd.f32 %v1403, %v1412
    %v1422 = vadd.f32 %v1404, %v1412
    %v1423 = vadd.f32 %v1405, %v1412
    %v1424 = vadd.f32 %v1406, %v1412
    %v1425 = vadd.f32 %v1407, %v1412
    %v1426 = vadd.f32 %v1408, %v1412
    %v1427 = vmax.f32 %v1414, 0.0
    %v1428 = vmax.f32 %v1415, 0.0
    %v1429 = vmax.f32 %v1416, 0.0
    %v1430 = vmax.f32 %v1417, 0.0
    %v1431 = vmax.f32 %v1418, 0.0
    %v1432 = vmax.f32 %v1419, 0.0
    %v1433 = vmax.f32 %v1420, 0.0
    %v1434 = vmax.f32 %v1421, 0.0
    %v1435 = vmax.f32 %v1422, 0.0
    %v1436 = vmax.f32 %v1423, 0.0
    %v1437 = vmax.f32 %v1424, 0.0
    %v1438 = vmax.f32 %v1425, 0.0
    %v1439 = vmax.f32 %v1426, 0.0
    %v1440 = vmul.f32 %v1427, %v73
    %v1441 = vmul.f32 %v1428, %v74
    %v1442 = vmul.f32 %v1429, %v75
    %v1443 = vmul.f32 %v1430, %v76
    %v1444 = vmul.f32 %v1431, %v77
    %v1445 = vmul.f32 %v1432, %v78
    %v1446 = vmul.f32 %v1433, %v79
    %v1447 = vmul.f32 %v1434, %v80
    %v1448 = vmul.f32 %v1435, %v81
    %v1449 = vmul.f32 %v1436, %v82
    %v1450 = vmul.f32 %v1437, %v83
    %v1451 = vmul.f32 %v1438, %v84
    %v1452 = vmul.f32 %v1439, %v85
    %v1453 = vrot.slane %v1440, 1
    %v1454 = vrot.slane %v1441, 1
    %v1455 = vrot.slane %v1442, 1
    %v1456 = vrot.slane %v1443, 1
    %v1457 = vrot.slane %v1444, 1
    %v1458 = vrot.slane %v1445, 1
    %v1459 = vrot.slane %v1446, 1
    %v1460 = vrot.slane %v1447, 1
    %v1461 = vrot.slane %v1448, 1
    %v1462 = vrot.slane %v1449, 1
    %v1463 = vrot.slane %v1450, 1
    %v1464 = vrot.slane %v1451, 1
    %v1465 = vrot.slane %v1452, 1
    %v1466 = vsel %vm114, %v1464, %v1465
    %v1467 = vsel %vm114, %v1463, %v1464
    %v1468 = vsel %vm114, %v1462, %v1463
    %v1469 = vsel %vm114, %v1461, %v1462
    %v1470 = vsel %vm114, %v1460, %v1461
    %v1471 = vsel %vm114, %v1459, %v1460
    %v1472 = vsel %vm114, %v1458, %v1459
    %v1473 = vsel %vm114, %v1457, %v1458
    %v1474 = vsel %vm114, %v1456, %v1457
    %v1475 = vsel %vm114, %v1455, %v1456
    %v1476 = vsel %vm114, %v1454, %v1455
    %v1477 = vsel %vm114, %v1453, %v1454
    %v1478 = vsel %vm114, %v1465, %v1453
    %1479 = vrot.lane.b32.xlu0 %v1478, 32
    %v1480 = vpop.permute.xlu0 %1479
    %1481 = vrot.lane.b32.xlu0 %v1477, 32
    %v1482 = vpop.permute.xlu0 %1481
    %1483 = vrot.lane.b32.xlu0 %v1476, 32
    %v1484 = vpop.permute.xlu0 %1483
    %1485 = vrot.lane.b32.xlu0 %v1475, 32
    %v1486 = vpop.permute.xlu0 %1485
    %1487 = vrot.lane.b32.xlu0 %v1474, 32
    %v1488 = vpop.permute.xlu0 %1487
    %1489 = vrot.lane.b32.xlu0 %v1473, 32
    %v1490 = vpop.permute.xlu0 %1489
    %1491 = vrot.lane.b32.xlu0 %v1472, 32
    %v1492 = vpop.permute.xlu0 %1491
    %1493 = vrot.lane.b32.xlu0 %v1471, 32
    %v1494 = vpop.permute.xlu0 %1493
    %1495 = vrot.lane.b32.xlu0 %v1470, 32
    %v1496 = vpop.permute.xlu0 %1495
    %1497 = vrot.lane.b32.xlu0 %v1469, 32
    %v1498 = vpop.permute.xlu0 %1497
    %1499 = vrot.lane.b32.xlu0 %v1468, 32
    %v1500 = vpop.permute.xlu0 %1499
    %1501 = vrot.lane.b32.xlu0 %v1467, 32
    %v1502 = vpop.permute.xlu0 %1501
    %1503 = vrot.lane.b32.xlu0 %v1466, 32
    %v1504 = vpop.permute.xlu0 %1503
    %v1505 = vadd.f32 %v1452, %v1480
    %v1506 = vadd.f32 %v1440, %v1482
    %v1507 = vadd.f32 %v1441, %v1484
    %v1508 = vadd.f32 %v1442, %v1486
    %v1509 = vadd.f32 %v1443, %v1488
    %v1510 = vadd.f32 %v1444, %v1490
    %v1511 = vadd.f32 %v1445, %v1492
    %v1512 = vadd.f32 %v1446, %v1494
    %v1513 = vadd.f32 %v1447, %v1496
    %v1514 = vadd.f32 %v1448, %v1498
    %v1515 = vadd.f32 %v1449, %v1500
    %v1516 = vadd.f32 %v1450, %v1502
    %v1517 = vadd.f32 %v1451, %v1504
    %v1518 = vrot.slane %v1440, 2
    %v1519 = vrot.slane %v1441, 2
    %v1520 = vrot.slane %v1442, 2
    %v1521 = vrot.slane %v1443, 2
    %v1522 = vrot.slane %v1444, 2
    %v1523 = vrot.slane %v1445, 2
    %v1524 = vrot.slane %v1446, 2
    %v1525 = vrot.slane %v1447, 2
    %v1526 = vrot.slane %v1448, 2
    %v1527 = vrot.slane %v1449, 2
    %v1528 = vrot.slane %v1450, 2
    %v1529 = vrot.slane %v1451, 2
    %v1530 = vrot.slane %v1452, 2
    %v1531 = vsel %vm180, %v1529, %v1530
    %v1532 = vsel %vm180, %v1528, %v1529
    %v1533 = vsel %vm180, %v1527, %v1528
    %v1534 = vsel %vm180, %v1526, %v1527
    %v1535 = vsel %vm180, %v1525, %v1526
    %v1536 = vsel %vm180, %v1524, %v1525
    %v1537 = vsel %vm180, %v1523, %v1524
    %v1538 = vsel %vm180, %v1522, %v1523
    %v1539 = vsel %vm180, %v1521, %v1522
    %v1540 = vsel %vm180, %v1520, %v1521
    %v1541 = vsel %vm180, %v1519, %v1520
    %v1542 = vsel %vm180, %v1518, %v1519
    %v1543 = vsel %vm180, %v1530, %v1518
    %1544 = vrot.lane.b32.xlu0 %v1543, 64
    %v1545 = vpop.permute.xlu0 %1544
    %1546 = vrot.lane.b32.xlu0 %v1542, 64
    %v1547 = vpop.permute.xlu0 %1546
    %1548 = vrot.lane.b32.xlu0 %v1541, 64
    %v1549 = vpop.permute.xlu0 %1548
    %1550 = vrot.lane.b32.xlu0 %v1540, 64
    %v1551 = vpop.permute.xlu0 %1550
    %1552 = vrot.lane.b32.xlu0 %v1539, 64
    %v1553 = vpop.permute.xlu0 %1552
    %1554 = vrot.lane.b32.xlu0 %v1538, 64
    %v1555 = vpop.permute.xlu0 %1554
    %1556 = vrot.lane.b32.xlu0 %v1537, 64
    %v1557 = vpop.permute.xlu0 %1556
    %1558 = vrot.lane.b32.xlu0 %v1536, 64
    %v1559 = vpop.permute.xlu0 %1558
    %1560 = vrot.lane.b32.xlu0 %v1535, 64
    %v1561 = vpop.permute.xlu0 %1560
    %1562 = vrot.lane.b32.xlu0 %v1534, 64
    %v1563 = vpop.permute.xlu0 %1562
    %1564 = vrot.lane.b32.xlu0 %v1533, 64
    %v1565 = vpop.permute.xlu0 %1564
    %1566 = vrot.lane.b32.xlu0 %v1532, 64
    %v1567 = vpop.permute.xlu0 %1566
    %1568 = vrot.lane.b32.xlu0 %v1531, 64
    %v1569 = vpop.permute.xlu0 %1568
    %v1570 = vadd.f32 %v1505, %v1545
    %v1571 = vadd.f32 %v1506, %v1547
    %v1572 = vadd.f32 %v1507, %v1549
    %v1573 = vadd.f32 %v1508, %v1551
    %v1574 = vadd.f32 %v1509, %v1553
    %v1575 = vadd.f32 %v1510, %v1555
    %v1576 = vadd.f32 %v1511, %v1557
    %v1577 = vadd.f32 %v1512, %v1559
    %v1578 = vadd.f32 %v1513, %v1561
    %v1579 = vadd.f32 %v1514, %v1563
    %v1580 = vadd.f32 %v1515, %v1565
    %v1581 = vadd.f32 %v1516, %v1567
    %v1582 = vadd.f32 %v1517, %v1569
    %v1583 = vrot.slane %v1440, 7
    %v1584 = vrot.slane %v1441, 7
    %v1585 = vrot.slane %v1442, 7
    %v1586 = vrot.slane %v1443, 7
    %v1587 = vrot.slane %v1444, 7
    %v1588 = vrot.slane %v1445, 7
    %v1589 = vrot.slane %v1446, 7
    %v1590 = vrot.slane %v1447, 7
    %v1591 = vrot.slane %v1448, 7
    %v1592 = vrot.slane %v1449, 7
    %v1593 = vrot.slane %v1450, 7
    %v1594 = vrot.slane %v1451, 7
    %v1595 = vrot.slane %v1452, 7
    %v1596 = vsel %vm246, %v1594, %v1595
    %v1597 = vsel %vm246, %v1593, %v1594
    %v1598 = vsel %vm246, %v1592, %v1593
    %v1599 = vsel %vm246, %v1591, %v1592
    %v1600 = vsel %vm246, %v1590, %v1591
    %v1601 = vsel %vm246, %v1589, %v1590
    %v1602 = vsel %vm246, %v1588, %v1589
    %v1603 = vsel %vm246, %v1587, %v1588
    %v1604 = vsel %vm246, %v1586, %v1587
    %v1605 = vsel %vm246, %v1585, %v1586
    %v1606 = vsel %vm246, %v1584, %v1585
    %v1607 = vsel %vm246, %v1583, %v1584
    %v1608 = vsel %vm246, %v1595, %v1583
    %1609 = vrot.lane.b32.xlu0 %v1608, 96
    %v1610 = vpop.permute.xlu0 %1609
    %1611 = vrot.lane.b32.xlu0 %v1607, 96
    %v1612 = vpop.permute.xlu0 %1611
    %1613 = vrot.lane.b32.xlu0 %v1606, 96
    %v1614 = vpop.permute.xlu0 %1613
    %1615 = vrot.lane.b32.xlu0 %v1605, 96
    %v1616 = vpop.permute.xlu0 %1615
    %1617 = vrot.lane.b32.xlu0 %v1604, 96
    %v1618 = vpop.permute.xlu0 %1617
    %1619 = vrot.lane.b32.xlu0 %v1603, 96
    %v1620 = vpop.permute.xlu0 %1619
    %1621 = vrot.lane.b32.xlu0 %v1602, 96
    %v1622 = vpop.permute.xlu0 %1621
    %1623 = vrot.lane.b32.xlu0 %v1601, 96
    %v1624 = vpop.permute.xlu0 %1623
    %1625 = vrot.lane.b32.xlu0 %v1600, 96
    %v1626 = vpop.permute.xlu0 %1625
    %1627 = vrot.lane.b32.xlu0 %v1599, 96
    %v1628 = vpop.permute.xlu0 %1627
    %1629 = vrot.lane.b32.xlu0 %v1598, 96
    %v1630 = vpop.permute.xlu0 %1629
    %1631 = vrot.lane.b32.xlu0 %v1597, 96
    %v1632 = vpop.permute.xlu0 %1631
    %1633 = vrot.lane.b32.xlu0 %v1596, 96
    %v1634 = vpop.permute.xlu0 %1633
    %v1635 = vadd.f32 %v1570, %v1610
    %v1636 = vadd.f32 %v1571, %v1612
    %v1637 = vadd.f32 %v1572, %v1614
    %v1638 = vadd.f32 %v1573, %v1616
    %v1639 = vadd.f32 %v1574, %v1618
    %v1640 = vadd.f32 %v1575, %v1620
    %v1641 = vadd.f32 %v1576, %v1622
    %v1642 = vadd.f32 %v1577, %v1624
    %v1643 = vadd.f32 %v1578, %v1626
    %v1644 = vadd.f32 %v1579, %v1628
    %v1645 = vadd.f32 %v1580, %v1630
    %v1646 = vadd.f32 %v1581, %v1632
    %v1647 = vadd.f32 %v1582, %v1634
    %v1648 = vpack.c.bf16 %v1636, %v1635
    %v1649 = vpack.c.bf16 %v1638, %v1637
    %v1650 = vpack.c.bf16 %v1640, %v1639
    %v1651 = vpack.c.bf16 %v1642, %v1641
    %v1652 = vpack.c.bf16 %v1644, %v1643
    %v1653 = vpack.c.bf16 %v1646, %v1645
    %v1654 = vpack.c.bf16 %v1647, %v1647
    %s1655 = scalar_lea.vmem [#allocation2], 384
    %v1656 = vld [vmem:[%s1655] sm:$0xf]
    %v1657 = vld [vmem:[%s1655 + $0x4] sm:$0xf]
    %v1658 = vld [vmem:[%s1655 + $0x8] sm:$0xf]
    %v1659 = vld [vmem:[%s1655 + $0xc] sm:$0xf]
    %v1660 = vld [vmem:[%s1655 + $0x10] sm:$0xf]
    %v1661 = vld [vmem:[%s1655 + $0x14] sm:$0xf]
    %v1662 = vld [vmem:[%s1655 + $0x18] sm:$0xf]
    %v1663 = vld [vmem:[%s1655 + $0x1c] sm:$0xf]
    %v1664 = vld [vmem:[%s1655 + $0x20] sm:$0xf]
    %v1665 = vld [vmem:[%s1655 + $0x24] sm:$0xf]
    %v1666 = vld [vmem:[%s1655 + $0x28] sm:$0xf]
    %v1667 = vld [vmem:[%s1655 + $0x2c] sm:$0xf]
    %v1668 = vld [vmem:[%s1655 + $0x30] sm:$0xf]
    %v1669 = vld [vmem:[%s1655 + $0x34] sm:$0xf]
    %v1670 = vld [vmem:[%s1655 + $0x38] sm:$0xf]
    %v1671 = vld [vmem:[%s1655 + $0x3c] sm:$0xf]
    %v1672 = vrot.slane %v1440, 6
    %v1673 = vrot.slane %v1441, 6
    %v1674 = vrot.slane %v1442, 6
    %v1675 = vrot.slane %v1443, 6
    %v1676 = vrot.slane %v1444, 6
    %v1677 = vrot.slane %v1445, 6
    %v1678 = vrot.slane %v1446, 6
    %v1679 = vrot.slane %v1447, 6
    %v1680 = vrot.slane %v1448, 6
    %v1681 = vrot.slane %v1449, 6
    %v1682 = vrot.slane %v1450, 6
    %v1683 = vrot.slane %v1451, 6
    %v1684 = vrot.slane %v1452, 6
    %v1685 = vsel %vm335, %v1683, %v1684
    %v1686 = vsel %vm335, %v1682, %v1683
    %v1687 = vsel %vm335, %v1681, %v1682
    %v1688 = vsel %vm335, %v1680, %v1681
    %v1689 = vsel %vm335, %v1679, %v1680
    %v1690 = vsel %vm335, %v1678, %v1679
    %v1691 = vsel %vm335, %v1677, %v1678
    %v1692 = vsel %vm335, %v1676, %v1677
    %v1693 = vsel %vm335, %v1675, %v1676
    %v1694 = vsel %vm335, %v1674, %v1675
    %v1695 = vsel %vm335, %v1673, %v1674
    %v1696 = vsel %vm335, %v1672, %v1673
    %v1697 = vsel %vm335, %v1684, %v1672
    %1698 = vrot.lane.b32.xlu0 %v1696, 64
    %v1699 = vpop.permute.xlu0 %1698
    %1700 = vrot.lane.b32.xlu0 %v1695, 64
    %v1701 = vpop.permute.xlu0 %1700
    %1702 = vrot.lane.b32.xlu0 %v1694, 64
    %v1703 = vpop.permute.xlu0 %1702
    %1704 = vrot.lane.b32.xlu0 %v1693, 64
    %v1705 = vpop.permute.xlu0 %1704
    %1706 = vrot.lane.b32.xlu0 %v1692, 64
    %v1707 = vpop.permute.xlu0 %1706
    %1708 = vrot.lane.b32.xlu0 %v1691, 64
    %v1709 = vpop.permute.xlu0 %1708
    %1710 = vrot.lane.b32.xlu0 %v1690, 64
    %v1711 = vpop.permute.xlu0 %1710
    %1712 = vrot.lane.b32.xlu0 %v1689, 64
    %v1713 = vpop.permute.xlu0 %1712
    %1714 = vrot.lane.b32.xlu0 %v1688, 64
    %v1715 = vpop.permute.xlu0 %1714
    %1716 = vrot.lane.b32.xlu0 %v1687, 64
    %v1717 = vpop.permute.xlu0 %1716
    %1718 = vrot.lane.b32.xlu0 %v1686, 64
    %v1719 = vpop.permute.xlu0 %1718
    %1720 = vrot.lane.b32.xlu0 %v1685, 64
    %v1721 = vpop.permute.xlu0 %1720
    %1722 = vrot.lane.b32.xlu0 %v1697, 64
    %v1723 = vpop.permute.xlu0 %1722
    %v1724 = vadd.f32 %v1506, %v1699
    %v1725 = vadd.f32 %v1507, %v1701
    %v1726 = vadd.f32 %v1508, %v1703
    %v1727 = vadd.f32 %v1509, %v1705
    %v1728 = vadd.f32 %v1510, %v1707
    %v1729 = vadd.f32 %v1511, %v1709
    %v1730 = vadd.f32 %v1512, %v1711
    %v1731 = vadd.f32 %v1513, %v1713
    %v1732 = vadd.f32 %v1514, %v1715
    %v1733 = vadd.f32 %v1515, %v1717
    %v1734 = vadd.f32 %v1516, %v1719
    %v1735 = vadd.f32 %v1517, %v1721
    %v1736 = vadd.f32 %v1505, %v1723
    %v1737 = vadd.f32 %v1724, %v1612
    %v1738 = vadd.f32 %v1725, %v1614
    %v1739 = vadd.f32 %v1726, %v1616
    %v1740 = vadd.f32 %v1727, %v1618
    %v1741 = vadd.f32 %v1728, %v1620
    %v1742 = vadd.f32 %v1729, %v1622
    %v1743 = vadd.f32 %v1730, %v1624
    %v1744 = vadd.f32 %v1731, %v1626
    %v1745 = vadd.f32 %v1732, %v1628
    %v1746 = vadd.f32 %v1733, %v1630
    %v1747 = vadd.f32 %v1734, %v1632
    %v1748 = vadd.f32 %v1735, %v1634
    %v1749 = vadd.f32 %v1736, %v1610
    %v1750 = vpack.c.bf16 %v1738, %v1737
    %v1751 = vpack.c.bf16 %v1740, %v1739
    %v1752 = vpack.c.bf16 %v1742, %v1741
    %v1753 = vpack.c.bf16 %v1744, %v1743
    %v1754 = vpack.c.bf16 %v1746, %v1745
    %v1755 = vpack.c.bf16 %v1748, %v1747
    %v1756 = vpack.c.bf16 %v1749, %v1749
    %s1757 = scalar_lea.vmem [#allocation2], 448
    %v1758 = vld [vmem:[%s1757] sm:$0xf]
    %v1759 = vld [vmem:[%s1757 + $0x4] sm:$0xf]
    %v1760 = vld [vmem:[%s1757 + $0x8] sm:$0xf]
    %v1761 = vld [vmem:[%s1757 + $0xc] sm:$0xf]
    %v1762 = vld [vmem:[%s1757 + $0x10] sm:$0xf]
    %v1763 = vld [vmem:[%s1757 + $0x14] sm:$0xf]
    %v1764 = vld [vmem:[%s1757 + $0x18] sm:$0xf]
    %v1765 = vld [vmem:[%s1757 + $0x1c] sm:$0xf]
    %v1766 = vld [vmem:[%s1757 + $0x20] sm:$0xf]
    %v1767 = vld [vmem:[%s1757 + $0x24] sm:$0xf]
    %v1768 = vld [vmem:[%s1757 + $0x28] sm:$0xf]
    %v1769 = vld [vmem:[%s1757 + $0x2c] sm:$0xf]
    %v1770 = vld [vmem:[%s1757 + $0x30] sm:$0xf]
    %v1771 = vld [vmem:[%s1757 + $0x34] sm:$0xf]
    %v1772 = vld [vmem:[%s1757 + $0x38] sm:$0xf]
    %v1773 = vld [vmem:[%s1757 + $0x3c] sm:$0xf]
    %v1790 = vunpack.c.l.b16 %v1758
    %v1791 = vunpack.c.l.b16 %v1759
    %v1792 = vunpack.c.l.b16 %v1760
    %v1793 = vunpack.c.l.b16 %v1761
    %v1794 = vunpack.c.l.b16 %v1762
    %v1795 = vunpack.c.l.b16 %v1763
    %v1796 = vunpack.c.l.b16 %v1764
    %v1797 = vunpack.c.l.b16 %v1765
    %v1798 = vunpack.c.l.b16 %v1766
    %v1799 = vunpack.c.l.b16 %v1767
    %v1800 = vunpack.c.l.b16 %v1768
    %v1801 = vunpack.c.l.b16 %v1769
    %v1802 = vunpack.c.l.b16 %v1770
    %v1803 = vunpack.c.l.b16 %v1771
    %v1804 = vunpack.c.l.b16 %v1772
    %v1805 = vunpack.c.l.b16 %v1773
    %v1806 = vpack.c.b16 %v1791, %v1790
    %v1807 = vpack.c.b16 %v1793, %v1792
    %v1808 = vpack.c.b16 %v1795, %v1794
    %v1809 = vpack.c.b16 %v1797, %v1796
    %v1810 = vpack.c.b16 %v1799, %v1798
    %v1811 = vpack.c.b16 %v1801, %v1800
    %v1812 = vpack.c.b16 %v1803, %v1802
    %v1813 = vpack.c.b16 %v1805, %v1804
    %1822 = vmatpush.bf16.msra.mxu0 %v1813
    %1823 = vmatpush.bf16.msra.mxu0 %v1812
    %1824 = vmatpush.bf16.msra.mxu0 %v1811
    %1825 = vmatpush.bf16.msra.mxu0 %v1810
    %1826 = vmatpush.bf16.msra.mxu0 %v1809
    %1827 = vmatpush.bf16.msra.mxu0 %v1808
    %1828 = vmatpush.bf16.msra.mxu0 %v1807
    %1829 = vmatpush.bf16.msra.mxu0 %v1806
    %1830 = vmatmul.bf16.gmra.mxu0 %v1750
    %v1831 = vpop.f32.mrf.mxu0
    %v1832 = vadd.f32 0.0, %v1831
    %v1833 = vpop.f32.mrf.mxu0
    %v1834 = vadd.f32 0.0, %v1833
    %1835 = vmatmul.bf16.gmra.mxu0 %v1751
    %v1836 = vpop.f32.mrf.mxu0
    %v1837 = vadd.f32 0.0, %v1836
    %v1838 = vpop.f32.mrf.mxu0
    %v1839 = vadd.f32 0.0, %v1838
    %1840 = vmatmul.bf16.gmra.mxu0 %v1752
    %v1841 = vpop.f32.mrf.mxu0
    %v1842 = vadd.f32 0.0, %v1841
    %v1843 = vpop.f32.mrf.mxu0
    %v1844 = vadd.f32 0.0, %v1843
    %1845 = vmatmul.bf16.gmra.mxu0 %v1753
    %v1846 = vpop.f32.mrf.mxu0
    %v1847 = vadd.f32 0.0, %v1846
    %v1848 = vpop.f32.mrf.mxu0
    %v1849 = vadd.f32 0.0, %v1848
    %1850 = vmatmul.bf16.gmra.mxu0 %v1754
    %v1851 = vpop.f32.mrf.mxu0
    %v1852 = vadd.f32 0.0, %v1851
    %v1853 = vpop.f32.mrf.mxu0
    %v1854 = vadd.f32 0.0, %v1853
    %1855 = vmatmul.bf16.gmra.mxu0 %v1755
    %v1856 = vpop.f32.mrf.mxu0
    %v1857 = vadd.f32 0.0, %v1856
    %v1858 = vpop.f32.mrf.mxu0
    %v1859 = vadd.f32 0.0, %v1858
    %1860 = vmatmul.bf16.gmra.mxu0 %v1756
    %v1861 = vpop.f32.mrf.mxu0
    %v1862 = vadd.f32 0.0, %v1861
    %v1863 = vpop.f32.mrf.mxu0
    %1864 = vdwg.mxu0
    %v1865 = vpack.c.bf16 %v1442, %v1441
    %v1866 = vpack.c.bf16 %v1444, %v1443
    %v1867 = vpack.c.bf16 %v1446, %v1445
    %v1868 = vpack.c.bf16 %v1448, %v1447
    %v1869 = vpack.c.bf16 %v1450, %v1449
    %v1870 = vpack.c.bf16 %v1452, %v1451
    %v1871 = vpack.c.bf16 %v1440, %v1440
    %s1872 = scalar_lea.vmem [#allocation2], 512
    %v1873 = vld [vmem:[%s1872] sm:$0xf]
    %v1874 = vld [vmem:[%s1872 + $0x4] sm:$0xf]
    %v1875 = vld [vmem:[%s1872 + $0x8] sm:$0xf]
    %v1876 = vld [vmem:[%s1872 + $0xc] sm:$0xf]
    %v1877 = vld [vmem:[%s1872 + $0x10] sm:$0xf]
    %v1878 = vld [vmem:[%s1872 + $0x14] sm:$0xf]
    %v1879 = vld [vmem:[%s1872 + $0x18] sm:$0xf]
    %v1880 = vld [vmem:[%s1872 + $0x1c] sm:$0xf]
    %v1881 = vld [vmem:[%s1872 + $0x20] sm:$0xf]
    %v1882 = vld [vmem:[%s1872 + $0x24] sm:$0xf]
    %v1883 = vld [vmem:[%s1872 + $0x28] sm:$0xf]
    %v1884 = vld [vmem:[%s1872 + $0x2c] sm:$0xf]
    %v1885 = vld [vmem:[%s1872 + $0x30] sm:$0xf]
    %v1886 = vld [vmem:[%s1872 + $0x34] sm:$0xf]
    %v1887 = vld [vmem:[%s1872 + $0x38] sm:$0xf]
    %v1888 = vld [vmem:[%s1872 + $0x3c] sm:$0xf]
    %v1905 = vunpack.c.l.b16 %v1873
    %v1906 = vunpack.c.l.b16 %v1874
    %v1907 = vunpack.c.l.b16 %v1875
    %v1908 = vunpack.c.l.b16 %v1876
    %v1909 = vunpack.c.l.b16 %v1877
    %v1910 = vunpack.c.l.b16 %v1878
    %v1911 = vunpack.c.l.b16 %v1879
    %v1912 = vunpack.c.l.b16 %v1880
    %v1913 = vunpack.c.l.b16 %v1881
    %v1914 = vunpack.c.l.b16 %v1882
    %v1915 = vunpack.c.l.b16 %v1883
    %v1916 = vunpack.c.l.b16 %v1884
    %v1917 = vunpack.c.l.b16 %v1885
    %v1918 = vunpack.c.l.b16 %v1886
    %v1919 = vunpack.c.l.b16 %v1887
    %v1920 = vunpack.c.l.b16 %v1888
    %v1921 = vpack.c.b16 %v1906, %v1905
    %v1922 = vpack.c.b16 %v1908, %v1907
    %v1923 = vpack.c.b16 %v1910, %v1909
    %v1924 = vpack.c.b16 %v1912, %v1911
    %v1925 = vpack.c.b16 %v1914, %v1913
    %v1926 = vpack.c.b16 %v1916, %v1915
    %v1927 = vpack.c.b16 %v1918, %v1917
    %v1928 = vpack.c.b16 %v1920, %v1919
    %1937 = vmatpush.bf16.msra.mxu0 %v1928
    %1938 = vmatpush.bf16.msra.mxu0 %v1927
    %1939 = vmatpush.bf16.msra.mxu0 %v1926
    %1940 = vmatpush.bf16.msra.mxu0 %v1925
    %1941 = vmatpush.bf16.msra.mxu0 %v1924
    %1942 = vmatpush.bf16.msra.mxu0 %v1923
    %1943 = vmatpush.bf16.msra.mxu0 %v1922
    %1944 = vmatpush.bf16.msra.mxu0 %v1921
    %1945 = vmatmul.bf16.gmra.mxu0 %v1865
    %v1946 = vpop.f32.mrf.mxu0
    %v1947 = vadd.f32 0.0, %v1946
    %v1948 = vpop.f32.mrf.mxu0
    %v1949 = vadd.f32 0.0, %v1948
    %1950 = vmatmul.bf16.gmra.mxu0 %v1866
    %v1951 = vpop.f32.mrf.mxu0
    %v1952 = vadd.f32 0.0, %v1951
    %v1953 = vpop.f32.mrf.mxu0
    %v1954 = vadd.f32 0.0, %v1953
    %1955 = vmatmul.bf16.gmra.mxu0 %v1867
    %v1956 = vpop.f32.mrf.mxu0
    %v1957 = vadd.f32 0.0, %v1956
    %v1958 = vpop.f32.mrf.mxu0
    %v1959 = vadd.f32 0.0, %v1958
    %1960 = vmatmul.bf16.gmra.mxu0 %v1868
    %v1961 = vpop.f32.mrf.mxu0
    %v1962 = vadd.f32 0.0, %v1961
    %v1963 = vpop.f32.mrf.mxu0
    %v1964 = vadd.f32 0.0, %v1963
    %1965 = vmatmul.bf16.gmra.mxu0 %v1869
    %v1966 = vpop.f32.mrf.mxu0
    %v1967 = vadd.f32 0.0, %v1966
    %v1968 = vpop.f32.mrf.mxu0
    %v1969 = vadd.f32 0.0, %v1968
    %1970 = vmatmul.bf16.gmra.mxu0 %v1870
    %v1971 = vpop.f32.mrf.mxu0
    %v1972 = vadd.f32 0.0, %v1971
    %v1973 = vpop.f32.mrf.mxu0
    %v1974 = vadd.f32 0.0, %v1973
    %1975 = vmatmul.bf16.gmra.mxu0 %v1871
    %v1976 = vpop.f32.mrf.mxu0
    %v1977 = vadd.f32 0.0, %v1976
    %v1978 = vpop.f32.mrf.mxu0
    %1979 = vdwg.mxu0
    %v1996 = vunpack.c.l.b16 %v1656
    %v1997 = vunpack.c.l.b16 %v1657
    %v1998 = vunpack.c.l.b16 %v1658
    %v1999 = vunpack.c.l.b16 %v1659
    %v2000 = vunpack.c.l.b16 %v1660
    %v2001 = vunpack.c.l.b16 %v1661
    %v2002 = vunpack.c.l.b16 %v1662
    %v2003 = vunpack.c.l.b16 %v1663
    %v2004 = vunpack.c.l.b16 %v1664
    %v2005 = vunpack.c.l.b16 %v1665
    %v2006 = vunpack.c.l.b16 %v1666
    %v2007 = vunpack.c.l.b16 %v1667
    %v2008 = vunpack.c.l.b16 %v1668
    %v2009 = vunpack.c.l.b16 %v1669
    %v2010 = vunpack.c.l.b16 %v1670
    %v2011 = vunpack.c.l.b16 %v1671
    %v2012 = vpack.c.b16 %v1997, %v1996
    %v2013 = vpack.c.b16 %v1999, %v1998
    %v2014 = vpack.c.b16 %v2001, %v2000
    %v2015 = vpack.c.b16 %v2003, %v2002
    %v2016 = vpack.c.b16 %v2005, %v2004
    %v2017 = vpack.c.b16 %v2007, %v2006
    %v2018 = vpack.c.b16 %v2009, %v2008
    %v2019 = vpack.c.b16 %v2011, %v2010
    %2028 = vmatpush.bf16.msra.mxu0 %v2019
    %2029 = vmatpush.bf16.msra.mxu0 %v2018
    %2030 = vmatpush.bf16.msra.mxu0 %v2017
    %2031 = vmatpush.bf16.msra.mxu0 %v2016
    %2032 = vmatpush.bf16.msra.mxu0 %v2015
    %2033 = vmatpush.bf16.msra.mxu0 %v2014
    %2034 = vmatpush.bf16.msra.mxu0 %v2013
    %2035 = vmatpush.bf16.msra.mxu0 %v2012
    %2036 = vmatmul.bf16.gmra.mxu0 %v1648
    %v2037 = vpop.f32.mrf.mxu0
    %v2038 = vadd.f32 %v1832, %v2037
    %v2039 = vpop.f32.mrf.mxu0
    %v2040 = vadd.f32 %v1834, %v2039
    %2041 = vmatmul.bf16.gmra.mxu0 %v1649
    %v2042 = vpop.f32.mrf.mxu0
    %v2043 = vadd.f32 %v1837, %v2042
    %v2044 = vpop.f32.mrf.mxu0
    %v2045 = vadd.f32 %v1839, %v2044
    %2046 = vmatmul.bf16.gmra.mxu0 %v1650
    %v2047 = vpop.f32.mrf.mxu0
    %v2048 = vadd.f32 %v1842, %v2047
    %v2049 = vpop.f32.mrf.mxu0
    %v2050 = vadd.f32 %v1844, %v2049
    %2051 = vmatmul.bf16.gmra.mxu0 %v1651
    %v2052 = vpop.f32.mrf.mxu0
    %v2053 = vadd.f32 %v1847, %v2052
    %v2054 = vpop.f32.mrf.mxu0
    %v2055 = vadd.f32 %v1849, %v2054
    %2056 = vmatmul.bf16.gmra.mxu0 %v1652
    %v2057 = vpop.f32.mrf.mxu0
    %v2058 = vadd.f32 %v1852, %v2057
    %v2059 = vpop.f32.mrf.mxu0
    %v2060 = vadd.f32 %v1854, %v2059
    %2061 = vmatmul.bf16.gmra.mxu0 %v1653
    %v2062 = vpop.f32.mrf.mxu0
    %v2063 = vadd.f32 %v1857, %v2062
    %v2064 = vpop.f32.mrf.mxu0
    %v2065 = vadd.f32 %v1859, %v2064
    %2066 = vmatmul.bf16.gmra.mxu0 %v1654
    %v2067 = vpop.f32.mrf.mxu0
    %v2068 = vadd.f32 %v1862, %v2067
    %v2069 = vpop.f32.mrf.mxu0
    %2070 = vdwg.mxu0
    %v2071 = vadd.f32 %v2038, %v1947
    %v2072 = vadd.f32 %v2040, %v1949
    %v2073 = vadd.f32 %v2043, %v1952
    %v2074 = vadd.f32 %v2045, %v1954
    %v2075 = vadd.f32 %v2048, %v1957
    %v2076 = vadd.f32 %v2050, %v1959
    %v2077 = vadd.f32 %v2053, %v1962
    %v2078 = vadd.f32 %v2055, %v1964
    %v2079 = vadd.f32 %v2058, %v1967
    %v2080 = vadd.f32 %v2060, %v1969
    %v2081 = vadd.f32 %v2063, %v1972
    %v2082 = vadd.f32 %v2065, %v1974
    %v2083 = vadd.f32 %v2068, %v1977
    %s2084 = scalar_lea.vmem %s2, 2
    %v2085 = vld [vmem:[%s2084] sm:$0x1]
    %v2087 = vperm.slane %v2085, 0
    %v2089 = vadd.f32 %v2071, %v2087
    %v2090 = vadd.f32 %v2072, %v2087
    %v2091 = vadd.f32 %v2073, %v2087
    %v2092 = vadd.f32 %v2074, %v2087
    %v2093 = vadd.f32 %v2075, %v2087
    %v2094 = vadd.f32 %v2076, %v2087
    %v2095 = vadd.f32 %v2077, %v2087
    %v2096 = vadd.f32 %v2078, %v2087
    %v2097 = vadd.f32 %v2079, %v2087
    %v2098 = vadd.f32 %v2080, %v2087
    %v2099 = vadd.f32 %v2081, %v2087
    %v2100 = vadd.f32 %v2082, %v2087
    %v2101 = vadd.f32 %v2083, %v2087
    %v2102 = vadd.f32 %v2089, %v765
    %v2103 = vadd.f32 %v2090, %v766
    %v2104 = vadd.f32 %v2091, %v767
    %v2105 = vadd.f32 %v2092, %v768
    %v2106 = vadd.f32 %v2093, %v769
    %v2107 = vadd.f32 %v2094, %v770
    %v2108 = vadd.f32 %v2095, %v771
    %v2109 = vadd.f32 %v2096, %v772
    %v2110 = vadd.f32 %v2097, %v773
    %v2111 = vadd.f32 %v2098, %v774
    %v2112 = vadd.f32 %v2099, %v775
    %v2113 = vadd.f32 %v2100, %v776
    %v2114 = vadd.f32 %v2101, %v777
    %v2115 = vmax.f32 %v2102, 0.0
    %v2116 = vmax.f32 %v2103, 0.0
    %v2117 = vmax.f32 %v2104, 0.0
    %v2118 = vmax.f32 %v2105, 0.0
    %v2119 = vmax.f32 %v2106, 0.0
    %v2120 = vmax.f32 %v2107, 0.0
    %v2121 = vmax.f32 %v2108, 0.0
    %v2122 = vmax.f32 %v2109, 0.0
    %v2123 = vmax.f32 %v2110, 0.0
    %v2124 = vmax.f32 %v2111, 0.0
    %v2125 = vmax.f32 %v2112, 0.0
    %v2126 = vmax.f32 %v2113, 0.0
    %v2127 = vmax.f32 %v2114, 0.0
    %v2128 = vmul.f32 %v2115, %v73
    %v2129 = vmul.f32 %v2116, %v74
    %v2130 = vmul.f32 %v2117, %v75
    %v2131 = vmul.f32 %v2118, %v76
    %v2132 = vmul.f32 %v2119, %v77
    %v2133 = vmul.f32 %v2120, %v78
    %v2134 = vmul.f32 %v2121, %v79
    %v2135 = vmul.f32 %v2122, %v80
    %v2136 = vmul.f32 %v2123, %v81
    %v2137 = vmul.f32 %v2124, %v82
    %v2138 = vmul.f32 %v2125, %v83
    %v2139 = vmul.f32 %v2126, %v84
    %v2140 = vmul.f32 %v2127, %v85
    %v2141 = vrot.slane %v2128, 1
    %v2142 = vrot.slane %v2129, 1
    %v2143 = vrot.slane %v2130, 1
    %v2144 = vrot.slane %v2131, 1
    %v2145 = vrot.slane %v2132, 1
    %v2146 = vrot.slane %v2133, 1
    %v2147 = vrot.slane %v2134, 1
    %v2148 = vrot.slane %v2135, 1
    %v2149 = vrot.slane %v2136, 1
    %v2150 = vrot.slane %v2137, 1
    %v2151 = vrot.slane %v2138, 1
    %v2152 = vrot.slane %v2139, 1
    %v2153 = vrot.slane %v2140, 1
    %v2154 = vsel %vm114, %v2152, %v2153
    %v2155 = vsel %vm114, %v2151, %v2152
    %v2156 = vsel %vm114, %v2150, %v2151
    %v2157 = vsel %vm114, %v2149, %v2150
    %v2158 = vsel %vm114, %v2148, %v2149
    %v2159 = vsel %vm114, %v2147, %v2148
    %v2160 = vsel %vm114, %v2146, %v2147
    %v2161 = vsel %vm114, %v2145, %v2146
    %v2162 = vsel %vm114, %v2144, %v2145
    %v2163 = vsel %vm114, %v2143, %v2144
    %v2164 = vsel %vm114, %v2142, %v2143
    %v2165 = vsel %vm114, %v2141, %v2142
    %v2166 = vsel %vm114, %v2153, %v2141
    %2167 = vrot.lane.b32.xlu0 %v2166, 32
    %v2168 = vpop.permute.xlu0 %2167
    %2169 = vrot.lane.b32.xlu0 %v2165, 32
    %v2170 = vpop.permute.xlu0 %2169
    %2171 = vrot.lane.b32.xlu0 %v2164, 32
    %v2172 = vpop.permute.xlu0 %2171
    %2173 = vrot.lane.b32.xlu0 %v2163, 32
    %v2174 = vpop.permute.xlu0 %2173
    %2175 = vrot.lane.b32.xlu0 %v2162, 32
    %v2176 = vpop.permute.xlu0 %2175
    %2177 = vrot.lane.b32.xlu0 %v2161, 32
    %v2178 = vpop.permute.xlu0 %2177
    %2179 = vrot.lane.b32.xlu0 %v2160, 32
    %v2180 = vpop.permute.xlu0 %2179
    %2181 = vrot.lane.b32.xlu0 %v2159, 32
    %v2182 = vpop.permute.xlu0 %2181
    %2183 = vrot.lane.b32.xlu0 %v2158, 32
    %v2184 = vpop.permute.xlu0 %2183
    %2185 = vrot.lane.b32.xlu0 %v2157, 32
    %v2186 = vpop.permute.xlu0 %2185
    %2187 = vrot.lane.b32.xlu0 %v2156, 32
    %v2188 = vpop.permute.xlu0 %2187
    %2189 = vrot.lane.b32.xlu0 %v2155, 32
    %v2190 = vpop.permute.xlu0 %2189
    %2191 = vrot.lane.b32.xlu0 %v2154, 32
    %v2192 = vpop.permute.xlu0 %2191
    %v2193 = vadd.f32 %v2140, %v2168
    %v2194 = vadd.f32 %v2128, %v2170
    %v2195 = vadd.f32 %v2129, %v2172
    %v2196 = vadd.f32 %v2130, %v2174
    %v2197 = vadd.f32 %v2131, %v2176
    %v2198 = vadd.f32 %v2132, %v2178
    %v2199 = vadd.f32 %v2133, %v2180
    %v2200 = vadd.f32 %v2134, %v2182
    %v2201 = vadd.f32 %v2135, %v2184
    %v2202 = vadd.f32 %v2136, %v2186
    %v2203 = vadd.f32 %v2137, %v2188
    %v2204 = vadd.f32 %v2138, %v2190
    %v2205 = vadd.f32 %v2139, %v2192
    %v2206 = vrot.slane %v2128, 2
    %v2207 = vrot.slane %v2129, 2
    %v2208 = vrot.slane %v2130, 2
    %v2209 = vrot.slane %v2131, 2
    %v2210 = vrot.slane %v2132, 2
    %v2211 = vrot.slane %v2133, 2
    %v2212 = vrot.slane %v2134, 2
    %v2213 = vrot.slane %v2135, 2
    %v2214 = vrot.slane %v2136, 2
    %v2215 = vrot.slane %v2137, 2
    %v2216 = vrot.slane %v2138, 2
    %v2217 = vrot.slane %v2139, 2
    %v2218 = vrot.slane %v2140, 2
    %v2219 = vsel %vm180, %v2217, %v2218
    %v2220 = vsel %vm180, %v2216, %v2217
    %v2221 = vsel %vm180, %v2215, %v2216
    %v2222 = vsel %vm180, %v2214, %v2215
    %v2223 = vsel %vm180, %v2213, %v2214
    %v2224 = vsel %vm180, %v2212, %v2213
    %v2225 = vsel %vm180, %v2211, %v2212
    %v2226 = vsel %vm180, %v2210, %v2211
    %v2227 = vsel %vm180, %v2209, %v2210
    %v2228 = vsel %vm180, %v2208, %v2209
    %v2229 = vsel %vm180, %v2207, %v2208
    %v2230 = vsel %vm180, %v2206, %v2207
    %v2231 = vsel %vm180, %v2218, %v2206
    %2232 = vrot.lane.b32.xlu0 %v2231, 64
    %v2233 = vpop.permute.xlu0 %2232
    %2234 = vrot.lane.b32.xlu0 %v2230, 64
    %v2235 = vpop.permute.xlu0 %2234
    %2236 = vrot.lane.b32.xlu0 %v2229, 64
    %v2237 = vpop.permute.xlu0 %2236
    %2238 = vrot.lane.b32.xlu0 %v2228, 64
    %v2239 = vpop.permute.xlu0 %2238
    %2240 = vrot.lane.b32.xlu0 %v2227, 64
    %v2241 = vpop.permute.xlu0 %2240
    %2242 = vrot.lane.b32.xlu0 %v2226, 64
    %v2243 = vpop.permute.xlu0 %2242
    %2244 = vrot.lane.b32.xlu0 %v2225, 64
    %v2245 = vpop.permute.xlu0 %2244
    %2246 = vrot.lane.b32.xlu0 %v2224, 64
    %v2247 = vpop.permute.xlu0 %2246
    %2248 = vrot.lane.b32.xlu0 %v2223, 64
    %v2249 = vpop.permute.xlu0 %2248
    %2250 = vrot.lane.b32.xlu0 %v2222, 64
    %v2251 = vpop.permute.xlu0 %2250
    %2252 = vrot.lane.b32.xlu0 %v2221, 64
    %v2253 = vpop.permute.xlu0 %2252
    %2254 = vrot.lane.b32.xlu0 %v2220, 64
    %v2255 = vpop.permute.xlu0 %2254
    %2256 = vrot.lane.b32.xlu0 %v2219, 64
    %v2257 = vpop.permute.xlu0 %2256
    %v2258 = vadd.f32 %v2193, %v2233
    %v2259 = vadd.f32 %v2194, %v2235
    %v2260 = vadd.f32 %v2195, %v2237
    %v2261 = vadd.f32 %v2196, %v2239
    %v2262 = vadd.f32 %v2197, %v2241
    %v2263 = vadd.f32 %v2198, %v2243
    %v2264 = vadd.f32 %v2199, %v2245
    %v2265 = vadd.f32 %v2200, %v2247
    %v2266 = vadd.f32 %v2201, %v2249
    %v2267 = vadd.f32 %v2202, %v2251
    %v2268 = vadd.f32 %v2203, %v2253
    %v2269 = vadd.f32 %v2204, %v2255
    %v2270 = vadd.f32 %v2205, %v2257
    %v2271 = vrot.slane %v2128, 7
    %v2272 = vrot.slane %v2129, 7
    %v2273 = vrot.slane %v2130, 7
    %v2274 = vrot.slane %v2131, 7
    %v2275 = vrot.slane %v2132, 7
    %v2276 = vrot.slane %v2133, 7
    %v2277 = vrot.slane %v2134, 7
    %v2278 = vrot.slane %v2135, 7
    %v2279 = vrot.slane %v2136, 7
    %v2280 = vrot.slane %v2137, 7
    %v2281 = vrot.slane %v2138, 7
    %v2282 = vrot.slane %v2139, 7
    %v2283 = vrot.slane %v2140, 7
    %v2284 = vsel %vm246, %v2282, %v2283
    %v2285 = vsel %vm246, %v2281, %v2282
    %v2286 = vsel %vm246, %v2280, %v2281
    %v2287 = vsel %vm246, %v2279, %v2280
    %v2288 = vsel %vm246, %v2278, %v2279
    %v2289 = vsel %vm246, %v2277, %v2278
    %v2290 = vsel %vm246, %v2276, %v2277
    %v2291 = vsel %vm246, %v2275, %v2276
    %v2292 = vsel %vm246, %v2274, %v2275
    %v2293 = vsel %vm246, %v2273, %v2274
    %v2294 = vsel %vm246, %v2272, %v2273
    %v2295 = vsel %vm246, %v2271, %v2272
    %v2296 = vsel %vm246, %v2283, %v2271
    %2297 = vrot.lane.b32.xlu0 %v2296, 96
    %v2298 = vpop.permute.xlu0 %2297
    %2299 = vrot.lane.b32.xlu0 %v2295, 96
    %v2300 = vpop.permute.xlu0 %2299
    %2301 = vrot.lane.b32.xlu0 %v2294, 96
    %v2302 = vpop.permute.xlu0 %2301
    %2303 = vrot.lane.b32.xlu0 %v2293, 96
    %v2304 = vpop.permute.xlu0 %2303
    %2305 = vrot.lane.b32.xlu0 %v2292, 96
    %v2306 = vpop.permute.xlu0 %2305
    %2307 = vrot.lane.b32.xlu0 %v2291, 96
    %v2308 = vpop.permute.xlu0 %2307
    %2309 = vrot.lane.b32.xlu0 %v2290, 96
    %v2310 = vpop.permute.xlu0 %2309
    %2311 = vrot.lane.b32.xlu0 %v2289, 96
    %v2312 = vpop.permute.xlu0 %2311
    %2313 = vrot.lane.b32.xlu0 %v2288, 96
    %v2314 = vpop.permute.xlu0 %2313
    %2315 = vrot.lane.b32.xlu0 %v2287, 96
    %v2316 = vpop.permute.xlu0 %2315
    %2317 = vrot.lane.b32.xlu0 %v2286, 96
    %v2318 = vpop.permute.xlu0 %2317
    %2319 = vrot.lane.b32.xlu0 %v2285, 96
    %v2320 = vpop.permute.xlu0 %2319
    %2321 = vrot.lane.b32.xlu0 %v2284, 96
    %v2322 = vpop.permute.xlu0 %2321
    %v2323 = vadd.f32 %v2258, %v2298
    %v2324 = vadd.f32 %v2259, %v2300
    %v2325 = vadd.f32 %v2260, %v2302
    %v2326 = vadd.f32 %v2261, %v2304
    %v2327 = vadd.f32 %v2262, %v2306
    %v2328 = vadd.f32 %v2263, %v2308
    %v2329 = vadd.f32 %v2264, %v2310
    %v2330 = vadd.f32 %v2265, %v2312
    %v2331 = vadd.f32 %v2266, %v2314
    %v2332 = vadd.f32 %v2267, %v2316
    %v2333 = vadd.f32 %v2268, %v2318
    %v2334 = vadd.f32 %v2269, %v2320
    %v2335 = vadd.f32 %v2270, %v2322
    %v2336 = vpack.c.bf16 %v2324, %v2323
    %v2337 = vpack.c.bf16 %v2326, %v2325
    %v2338 = vpack.c.bf16 %v2328, %v2327
    %v2339 = vpack.c.bf16 %v2330, %v2329
    %v2340 = vpack.c.bf16 %v2332, %v2331
    %v2341 = vpack.c.bf16 %v2334, %v2333
    %v2342 = vpack.c.bf16 %v2335, %v2335
    %s2343 = scalar_lea.vmem [#allocation2], 576
    %v2344 = vld [vmem:[%s2343] sm:$0xf]
    %v2345 = vld [vmem:[%s2343 + $0x4] sm:$0xf]
    %v2346 = vld [vmem:[%s2343 + $0x8] sm:$0xf]
    %v2347 = vld [vmem:[%s2343 + $0xc] sm:$0xf]
    %v2348 = vld [vmem:[%s2343 + $0x10] sm:$0xf]
    %v2349 = vld [vmem:[%s2343 + $0x14] sm:$0xf]
    %v2350 = vld [vmem:[%s2343 + $0x18] sm:$0xf]
    %v2351 = vld [vmem:[%s2343 + $0x1c] sm:$0xf]
    %v2352 = vld [vmem:[%s2343 + $0x20] sm:$0xf]
    %v2353 = vld [vmem:[%s2343 + $0x24] sm:$0xf]
    %v2354 = vld [vmem:[%s2343 + $0x28] sm:$0xf]
    %v2355 = vld [vmem:[%s2343 + $0x2c] sm:$0xf]
    %v2356 = vld [vmem:[%s2343 + $0x30] sm:$0xf]
    %v2357 = vld [vmem:[%s2343 + $0x34] sm:$0xf]
    %v2358 = vld [vmem:[%s2343 + $0x38] sm:$0xf]
    %v2359 = vld [vmem:[%s2343 + $0x3c] sm:$0xf]
    %v2360 = vrot.slane %v2128, 6
    %v2361 = vrot.slane %v2129, 6
    %v2362 = vrot.slane %v2130, 6
    %v2363 = vrot.slane %v2131, 6
    %v2364 = vrot.slane %v2132, 6
    %v2365 = vrot.slane %v2133, 6
    %v2366 = vrot.slane %v2134, 6
    %v2367 = vrot.slane %v2135, 6
    %v2368 = vrot.slane %v2136, 6
    %v2369 = vrot.slane %v2137, 6
    %v2370 = vrot.slane %v2138, 6
    %v2371 = vrot.slane %v2139, 6
    %v2372 = vrot.slane %v2140, 6
    %v2373 = vsel %vm335, %v2371, %v2372
    %v2374 = vsel %vm335, %v2370, %v2371
    %v2375 = vsel %vm335, %v2369, %v2370
    %v2376 = vsel %vm335, %v2368, %v2369
    %v2377 = vsel %vm335, %v2367, %v2368
    %v2378 = vsel %vm335, %v2366, %v2367
    %v2379 = vsel %vm335, %v2365, %v2366
    %v2380 = vsel %vm335, %v2364, %v2365
    %v2381 = vsel %vm335, %v2363, %v2364
    %v2382 = vsel %vm335, %v2362, %v2363
    %v2383 = vsel %vm335, %v2361, %v2362
    %v2384 = vsel %vm335, %v2360, %v2361
    %v2385 = vsel %vm335, %v2372, %v2360
    %2386 = vrot.lane.b32.xlu0 %v2384, 64
    %v2387 = vpop.permute.xlu0 %2386
    %2388 = vrot.lane.b32.xlu0 %v2383, 64
    %v2389 = vpop.permute.xlu0 %2388
    %2390 = vrot.lane.b32.xlu0 %v2382, 64
    %v2391 = vpop.permute.xlu0 %2390
    %2392 = vrot.lane.b32.xlu0 %v2381, 64
    %v2393 = vpop.permute.xlu0 %2392
    %2394 = vrot.lane.b32.xlu0 %v2380, 64
    %v2395 = vpop.permute.xlu0 %2394
    %2396 = vrot.lane.b32.xlu0 %v2379, 64
    %v2397 = vpop.permute.xlu0 %2396
    %2398 = vrot.lane.b32.xlu0 %v2378, 64
    %v2399 = vpop.permute.xlu0 %2398
    %2400 = vrot.lane.b32.xlu0 %v2377, 64
    %v2401 = vpop.permute.xlu0 %2400
    %2402 = vrot.lane.b32.xlu0 %v2376, 64
    %v2403 = vpop.permute.xlu0 %2402
    %2404 = vrot.lane.b32.xlu0 %v2375, 64
    %v2405 = vpop.permute.xlu0 %2404
    %2406 = vrot.lane.b32.xlu0 %v2374, 64
    %v2407 = vpop.permute.xlu0 %2406
    %2408 = vrot.lane.b32.xlu0 %v2373, 64
    %v2409 = vpop.permute.xlu0 %2408
    %2410 = vrot.lane.b32.xlu0 %v2385, 64
    %v2411 = vpop.permute.xlu0 %2410
    %v2412 = vadd.f32 %v2194, %v2387
    %v2413 = vadd.f32 %v2195, %v2389
    %v2414 = vadd.f32 %v2196, %v2391
    %v2415 = vadd.f32 %v2197, %v2393
    %v2416 = vadd.f32 %v2198, %v2395
    %v2417 = vadd.f32 %v2199, %v2397
    %v2418 = vadd.f32 %v2200, %v2399
    %v2419 = vadd.f32 %v2201, %v2401
    %v2420 = vadd.f32 %v2202, %v2403
    %v2421 = vadd.f32 %v2203, %v2405
    %v2422 = vadd.f32 %v2204, %v2407
    %v2423 = vadd.f32 %v2205, %v2409
    %v2424 = vadd.f32 %v2193, %v2411
    %v2425 = vadd.f32 %v2412, %v2300
    %v2426 = vadd.f32 %v2413, %v2302
    %v2427 = vadd.f32 %v2414, %v2304
    %v2428 = vadd.f32 %v2415, %v2306
    %v2429 = vadd.f32 %v2416, %v2308
    %v2430 = vadd.f32 %v2417, %v2310
    %v2431 = vadd.f32 %v2418, %v2312
    %v2432 = vadd.f32 %v2419, %v2314
    %v2433 = vadd.f32 %v2420, %v2316
    %v2434 = vadd.f32 %v2421, %v2318
    %v2435 = vadd.f32 %v2422, %v2320
    %v2436 = vadd.f32 %v2423, %v2322
    %v2437 = vadd.f32 %v2424, %v2298
    %v2438 = vpack.c.bf16 %v2426, %v2425
    %v2439 = vpack.c.bf16 %v2428, %v2427
    %v2440 = vpack.c.bf16 %v2430, %v2429
    %v2441 = vpack.c.bf16 %v2432, %v2431
    %v2442 = vpack.c.bf16 %v2434, %v2433
    %v2443 = vpack.c.bf16 %v2436, %v2435
    %v2444 = vpack.c.bf16 %v2437, %v2437
    %s2445 = scalar_lea.vmem [#allocation2], 640
    %v2446 = vld [vmem:[%s2445] sm:$0xf]
    %v2447 = vld [vmem:[%s2445 + $0x4] sm:$0xf]
    %v2448 = vld [vmem:[%s2445 + $0x8] sm:$0xf]
    %v2449 = vld [vmem:[%s2445 + $0xc] sm:$0xf]
    %v2450 = vld [vmem:[%s2445 + $0x10] sm:$0xf]
    %v2451 = vld [vmem:[%s2445 + $0x14] sm:$0xf]
    %v2452 = vld [vmem:[%s2445 + $0x18] sm:$0xf]
    %v2453 = vld [vmem:[%s2445 + $0x1c] sm:$0xf]
    %v2454 = vld [vmem:[%s2445 + $0x20] sm:$0xf]
    %v2455 = vld [vmem:[%s2445 + $0x24] sm:$0xf]
    %v2456 = vld [vmem:[%s2445 + $0x28] sm:$0xf]
    %v2457 = vld [vmem:[%s2445 + $0x2c] sm:$0xf]
    %v2458 = vld [vmem:[%s2445 + $0x30] sm:$0xf]
    %v2459 = vld [vmem:[%s2445 + $0x34] sm:$0xf]
    %v2460 = vld [vmem:[%s2445 + $0x38] sm:$0xf]
    %v2461 = vld [vmem:[%s2445 + $0x3c] sm:$0xf]
    %v2478 = vunpack.c.l.b16 %v2446
    %v2479 = vunpack.c.l.b16 %v2447
    %v2480 = vunpack.c.l.b16 %v2448
    %v2481 = vunpack.c.l.b16 %v2449
    %v2482 = vunpack.c.l.b16 %v2450
    %v2483 = vunpack.c.l.b16 %v2451
    %v2484 = vunpack.c.l.b16 %v2452
    %v2485 = vunpack.c.l.b16 %v2453
    %v2486 = vunpack.c.l.b16 %v2454
    %v2487 = vunpack.c.l.b16 %v2455
    %v2488 = vunpack.c.l.b16 %v2456
    %v2489 = vunpack.c.l.b16 %v2457
    %v2490 = vunpack.c.l.b16 %v2458
    %v2491 = vunpack.c.l.b16 %v2459
    %v2492 = vunpack.c.l.b16 %v2460
    %v2493 = vunpack.c.l.b16 %v2461
    %v2494 = vpack.c.b16 %v2479, %v2478
    %v2495 = vpack.c.b16 %v2481, %v2480
    %v2496 = vpack.c.b16 %v2483, %v2482
    %v2497 = vpack.c.b16 %v2485, %v2484
    %v2498 = vpack.c.b16 %v2487, %v2486
    %v2499 = vpack.c.b16 %v2489, %v2488
    %v2500 = vpack.c.b16 %v2491, %v2490
    %v2501 = vpack.c.b16 %v2493, %v2492
    %2510 = vmatpush.bf16.msra.mxu0 %v2501
    %2511 = vmatpush.bf16.msra.mxu0 %v2500
    %2512 = vmatpush.bf16.msra.mxu0 %v2499
    %2513 = vmatpush.bf16.msra.mxu0 %v2498
    %2514 = vmatpush.bf16.msra.mxu0 %v2497
    %2515 = vmatpush.bf16.msra.mxu0 %v2496
    %2516 = vmatpush.bf16.msra.mxu0 %v2495
    %2517 = vmatpush.bf16.msra.mxu0 %v2494
    %2518 = vmatmul.bf16.gmra.mxu0 %v2438
    %v2519 = vpop.f32.mrf.mxu0
    %v2520 = vadd.f32 0.0, %v2519
    %v2521 = vpop.f32.mrf.mxu0
    %v2522 = vadd.f32 0.0, %v2521
    %2523 = vmatmul.bf16.gmra.mxu0 %v2439
    %v2524 = vpop.f32.mrf.mxu0
    %v2525 = vadd.f32 0.0, %v2524
    %v2526 = vpop.f32.mrf.mxu0
    %v2527 = vadd.f32 0.0, %v2526
    %2528 = vmatmul.bf16.gmra.mxu0 %v2440
    %v2529 = vpop.f32.mrf.mxu0
    %v2530 = vadd.f32 0.0, %v2529
    %v2531 = vpop.f32.mrf.mxu0
    %v2532 = vadd.f32 0.0, %v2531
    %2533 = vmatmul.bf16.gmra.mxu0 %v2441
    %v2534 = vpop.f32.mrf.mxu0
    %v2535 = vadd.f32 0.0, %v2534
    %v2536 = vpop.f32.mrf.mxu0
    %v2537 = vadd.f32 0.0, %v2536
    %2538 = vmatmul.bf16.gmra.mxu0 %v2442
    %v2539 = vpop.f32.mrf.mxu0
    %v2540 = vadd.f32 0.0, %v2539
    %v2541 = vpop.f32.mrf.mxu0
    %v2542 = vadd.f32 0.0, %v2541
    %2543 = vmatmul.bf16.gmra.mxu0 %v2443
    %v2544 = vpop.f32.mrf.mxu0
    %v2545 = vadd.f32 0.0, %v2544
    %v2546 = vpop.f32.mrf.mxu0
    %v2547 = vadd.f32 0.0, %v2546
    %2548 = vmatmul.bf16.gmra.mxu0 %v2444
    %v2549 = vpop.f32.mrf.mxu0
    %v2550 = vadd.f32 0.0, %v2549
    %v2551 = vpop.f32.mrf.mxu0
    %2552 = vdwg.mxu0
    %v2553 = vpack.c.bf16 %v2130, %v2129
    %v2554 = vpack.c.bf16 %v2132, %v2131
    %v2555 = vpack.c.bf16 %v2134, %v2133
    %v2556 = vpack.c.bf16 %v2136, %v2135
    %v2557 = vpack.c.bf16 %v2138, %v2137
    %v2558 = vpack.c.bf16 %v2140, %v2139
    %v2559 = vpack.c.bf16 %v2128, %v2128
    %s2560 = scalar_lea.vmem [#allocation2], 704
    %v2561 = vld [vmem:[%s2560] sm:$0xf]
    %v2562 = vld [vmem:[%s2560 + $0x4] sm:$0xf]
    %v2563 = vld [vmem:[%s2560 + $0x8] sm:$0xf]
    %v2564 = vld [vmem:[%s2560 + $0xc] sm:$0xf]
    %v2565 = vld [vmem:[%s2560 + $0x10] sm:$0xf]
    %v2566 = vld [vmem:[%s2560 + $0x14] sm:$0xf]
    %v2567 = vld [vmem:[%s2560 + $0x18] sm:$0xf]
    %v2568 = vld [vmem:[%s2560 + $0x1c] sm:$0xf]
    %v2569 = vld [vmem:[%s2560 + $0x20] sm:$0xf]
    %v2570 = vld [vmem:[%s2560 + $0x24] sm:$0xf]
    %v2571 = vld [vmem:[%s2560 + $0x28] sm:$0xf]
    %v2572 = vld [vmem:[%s2560 + $0x2c] sm:$0xf]
    %v2573 = vld [vmem:[%s2560 + $0x30] sm:$0xf]
    %v2574 = vld [vmem:[%s2560 + $0x34] sm:$0xf]
    %v2575 = vld [vmem:[%s2560 + $0x38] sm:$0xf]
    %v2576 = vld [vmem:[%s2560 + $0x3c] sm:$0xf]
    %v2593 = vunpack.c.l.b16 %v2561
    %v2594 = vunpack.c.l.b16 %v2562
    %v2595 = vunpack.c.l.b16 %v2563
    %v2596 = vunpack.c.l.b16 %v2564
    %v2597 = vunpack.c.l.b16 %v2565
    %v2598 = vunpack.c.l.b16 %v2566
    %v2599 = vunpack.c.l.b16 %v2567
    %v2600 = vunpack.c.l.b16 %v2568
    %v2601 = vunpack.c.l.b16 %v2569
    %v2602 = vunpack.c.l.b16 %v2570
    %v2603 = vunpack.c.l.b16 %v2571
    %v2604 = vunpack.c.l.b16 %v2572
    %v2605 = vunpack.c.l.b16 %v2573
    %v2606 = vunpack.c.l.b16 %v2574
    %v2607 = vunpack.c.l.b16 %v2575
    %v2608 = vunpack.c.l.b16 %v2576
    %v2609 = vpack.c.b16 %v2594, %v2593
    %v2610 = vpack.c.b16 %v2596, %v2595
    %v2611 = vpack.c.b16 %v2598, %v2597
    %v2612 = vpack.c.b16 %v2600, %v2599
    %v2613 = vpack.c.b16 %v2602, %v2601
    %v2614 = vpack.c.b16 %v2604, %v2603
    %v2615 = vpack.c.b16 %v2606, %v2605
    %v2616 = vpack.c.b16 %v2608, %v2607
    %2625 = vmatpush.bf16.msra.mxu0 %v2616
    %2626 = vmatpush.bf16.msra.mxu0 %v2615
    %2627 = vmatpush.bf16.msra.mxu0 %v2614
    %2628 = vmatpush.bf16.msra.mxu0 %v2613
    %2629 = vmatpush.bf16.msra.mxu0 %v2612
    %2630 = vmatpush.bf16.msra.mxu0 %v2611
    %2631 = vmatpush.bf16.msra.mxu0 %v2610
    %2632 = vmatpush.bf16.msra.mxu0 %v2609
    %2633 = vmatmul.bf16.gmra.mxu0 %v2553
    %v2634 = vpop.f32.mrf.mxu0
    %v2635 = vadd.f32 0.0, %v2634
    %v2636 = vpop.f32.mrf.mxu0
    %v2637 = vadd.f32 0.0, %v2636
    %2638 = vmatmul.bf16.gmra.mxu0 %v2554
    %v2639 = vpop.f32.mrf.mxu0
    %v2640 = vadd.f32 0.0, %v2639
    %v2641 = vpop.f32.mrf.mxu0
    %v2642 = vadd.f32 0.0, %v2641
    %2643 = vmatmul.bf16.gmra.mxu0 %v2555
    %v2644 = vpop.f32.mrf.mxu0
    %v2645 = vadd.f32 0.0, %v2644
    %v2646 = vpop.f32.mrf.mxu0
    %v2647 = vadd.f32 0.0, %v2646
    %2648 = vmatmul.bf16.gmra.mxu0 %v2556
    %v2649 = vpop.f32.mrf.mxu0
    %v2650 = vadd.f32 0.0, %v2649
    %v2651 = vpop.f32.mrf.mxu0
    %v2652 = vadd.f32 0.0, %v2651
    %2653 = vmatmul.bf16.gmra.mxu0 %v2557
    %v2654 = vpop.f32.mrf.mxu0
    %v2655 = vadd.f32 0.0, %v2654
    %v2656 = vpop.f32.mrf.mxu0
    %v2657 = vadd.f32 0.0, %v2656
    %2658 = vmatmul.bf16.gmra.mxu0 %v2558
    %v2659 = vpop.f32.mrf.mxu0
    %v2660 = vadd.f32 0.0, %v2659
    %v2661 = vpop.f32.mrf.mxu0
    %v2662 = vadd.f32 0.0, %v2661
    %2663 = vmatmul.bf16.gmra.mxu0 %v2559
    %v2664 = vpop.f32.mrf.mxu0
    %v2665 = vadd.f32 0.0, %v2664
    %v2666 = vpop.f32.mrf.mxu0
    %2667 = vdwg.mxu0
    %v2684 = vunpack.c.l.b16 %v2344
    %v2685 = vunpack.c.l.b16 %v2345
    %v2686 = vunpack.c.l.b16 %v2346
    %v2687 = vunpack.c.l.b16 %v2347
    %v2688 = vunpack.c.l.b16 %v2348
    %v2689 = vunpack.c.l.b16 %v2349
    %v2690 = vunpack.c.l.b16 %v2350
    %v2691 = vunpack.c.l.b16 %v2351
    %v2692 = vunpack.c.l.b16 %v2352
    %v2693 = vunpack.c.l.b16 %v2353
    %v2694 = vunpack.c.l.b16 %v2354
    %v2695 = vunpack.c.l.b16 %v2355
    %v2696 = vunpack.c.l.b16 %v2356
    %v2697 = vunpack.c.l.b16 %v2357
    %v2698 = vunpack.c.l.b16 %v2358
    %v2699 = vunpack.c.l.b16 %v2359
    %v2700 = vpack.c.b16 %v2685, %v2684
    %v2701 = vpack.c.b16 %v2687, %v2686
    %v2702 = vpack.c.b16 %v2689, %v2688
    %v2703 = vpack.c.b16 %v2691, %v2690
    %v2704 = vpack.c.b16 %v2693, %v2692
    %v2705 = vpack.c.b16 %v2695, %v2694
    %v2706 = vpack.c.b16 %v2697, %v2696
    %v2707 = vpack.c.b16 %v2699, %v2698
    %2716 = vmatpush.bf16.msra.mxu0 %v2707
    %2717 = vmatpush.bf16.msra.mxu0 %v2706
    %2718 = vmatpush.bf16.msra.mxu0 %v2705
    %2719 = vmatpush.bf16.msra.mxu0 %v2704
    %2720 = vmatpush.bf16.msra.mxu0 %v2703
    %2721 = vmatpush.bf16.msra.mxu0 %v2702
    %2722 = vmatpush.bf16.msra.mxu0 %v2701
    %2723 = vmatpush.bf16.msra.mxu0 %v2700
    %2724 = vmatmul.bf16.gmra.mxu0 %v2336
    %v2725 = vpop.f32.mrf.mxu0
    %v2726 = vadd.f32 %v2520, %v2725
    %v2727 = vpop.f32.mrf.mxu0
    %v2728 = vadd.f32 %v2522, %v2727
    %2729 = vmatmul.bf16.gmra.mxu0 %v2337
    %v2730 = vpop.f32.mrf.mxu0
    %v2731 = vadd.f32 %v2525, %v2730
    %v2732 = vpop.f32.mrf.mxu0
    %v2733 = vadd.f32 %v2527, %v2732
    %2734 = vmatmul.bf16.gmra.mxu0 %v2338
    %v2735 = vpop.f32.mrf.mxu0
    %v2736 = vadd.f32 %v2530, %v2735
    %v2737 = vpop.f32.mrf.mxu0
    %v2738 = vadd.f32 %v2532, %v2737
    %2739 = vmatmul.bf16.gmra.mxu0 %v2339
    %v2740 = vpop.f32.mrf.mxu0
    %v2741 = vadd.f32 %v2535, %v2740
    %v2742 = vpop.f32.mrf.mxu0
    %v2743 = vadd.f32 %v2537, %v2742
    %2744 = vmatmul.bf16.gmra.mxu0 %v2340
    %v2745 = vpop.f32.mrf.mxu0
    %v2746 = vadd.f32 %v2540, %v2745
    %v2747 = vpop.f32.mrf.mxu0
    %v2748 = vadd.f32 %v2542, %v2747
    %2749 = vmatmul.bf16.gmra.mxu0 %v2341
    %v2750 = vpop.f32.mrf.mxu0
    %v2751 = vadd.f32 %v2545, %v2750
    %v2752 = vpop.f32.mrf.mxu0
    %v2753 = vadd.f32 %v2547, %v2752
    %2754 = vmatmul.bf16.gmra.mxu0 %v2342
    %v2755 = vpop.f32.mrf.mxu0
    %v2756 = vadd.f32 %v2550, %v2755
    %v2757 = vpop.f32.mrf.mxu0
    %2758 = vdwg.mxu0
    %v2759 = vadd.f32 %v2726, %v2635
    %v2760 = vadd.f32 %v2728, %v2637
    %v2761 = vadd.f32 %v2731, %v2640
    %v2762 = vadd.f32 %v2733, %v2642
    %v2763 = vadd.f32 %v2736, %v2645
    %v2764 = vadd.f32 %v2738, %v2647
    %v2765 = vadd.f32 %v2741, %v2650
    %v2766 = vadd.f32 %v2743, %v2652
    %v2767 = vadd.f32 %v2746, %v2655
    %v2768 = vadd.f32 %v2748, %v2657
    %v2769 = vadd.f32 %v2751, %v2660
    %v2770 = vadd.f32 %v2753, %v2662
    %v2771 = vadd.f32 %v2756, %v2665
    %s2772 = scalar_lea.vmem %s2, 3
    %v2773 = vld [vmem:[%s2772] sm:$0x1]
    %v2775 = vperm.slane %v2773, 0
    %v2777 = vadd.f32 %v2759, %v2775
    %v2778 = vadd.f32 %v2760, %v2775
    %v2779 = vadd.f32 %v2761, %v2775
    %v2780 = vadd.f32 %v2762, %v2775
    %v2781 = vadd.f32 %v2763, %v2775
    %v2782 = vadd.f32 %v2764, %v2775
    %v2783 = vadd.f32 %v2765, %v2775
    %v2784 = vadd.f32 %v2766, %v2775
    %v2785 = vadd.f32 %v2767, %v2775
    %v2786 = vadd.f32 %v2768, %v2775
    %v2787 = vadd.f32 %v2769, %v2775
    %v2788 = vadd.f32 %v2770, %v2775
    %v2789 = vadd.f32 %v2771, %v2775
    %v2790 = vmax.f32 %v2777, 0.0
    %v2791 = vmax.f32 %v2778, 0.0
    %v2792 = vmax.f32 %v2779, 0.0
    %v2793 = vmax.f32 %v2780, 0.0
    %v2794 = vmax.f32 %v2781, 0.0
    %v2795 = vmax.f32 %v2782, 0.0
    %v2796 = vmax.f32 %v2783, 0.0
    %v2797 = vmax.f32 %v2784, 0.0
    %v2798 = vmax.f32 %v2785, 0.0
    %v2799 = vmax.f32 %v2786, 0.0
    %v2800 = vmax.f32 %v2787, 0.0
    %v2801 = vmax.f32 %v2788, 0.0
    %v2802 = vmax.f32 %v2789, 0.0
    %v2803 = vmul.f32 %v2790, %v73
    %v2804 = vmul.f32 %v2791, %v74
    %v2805 = vmul.f32 %v2792, %v75
    %v2806 = vmul.f32 %v2793, %v76
    %v2807 = vmul.f32 %v2794, %v77
    %v2808 = vmul.f32 %v2795, %v78
    %v2809 = vmul.f32 %v2796, %v79
    %v2810 = vmul.f32 %v2797, %v80
    %v2811 = vmul.f32 %v2798, %v81
    %v2812 = vmul.f32 %v2799, %v82
    %v2813 = vmul.f32 %v2800, %v83
    %v2814 = vmul.f32 %v2801, %v84
    %v2815 = vmul.f32 %v2802, %v85
    %v2816 = vrot.slane %v2803, 1
    %v2817 = vrot.slane %v2804, 1
    %v2818 = vrot.slane %v2805, 1
    %v2819 = vrot.slane %v2806, 1
    %v2820 = vrot.slane %v2807, 1
    %v2821 = vrot.slane %v2808, 1
    %v2822 = vrot.slane %v2809, 1
    %v2823 = vrot.slane %v2810, 1
    %v2824 = vrot.slane %v2811, 1
    %v2825 = vrot.slane %v2812, 1
    %v2826 = vrot.slane %v2813, 1
    %v2827 = vrot.slane %v2814, 1
    %v2828 = vrot.slane %v2815, 1
    %v2829 = vsel %vm114, %v2827, %v2828
    %v2830 = vsel %vm114, %v2826, %v2827
    %v2831 = vsel %vm114, %v2825, %v2826
    %v2832 = vsel %vm114, %v2824, %v2825
    %v2833 = vsel %vm114, %v2823, %v2824
    %v2834 = vsel %vm114, %v2822, %v2823
    %v2835 = vsel %vm114, %v2821, %v2822
    %v2836 = vsel %vm114, %v2820, %v2821
    %v2837 = vsel %vm114, %v2819, %v2820
    %v2838 = vsel %vm114, %v2818, %v2819
    %v2839 = vsel %vm114, %v2817, %v2818
    %v2840 = vsel %vm114, %v2816, %v2817
    %v2841 = vsel %vm114, %v2828, %v2816
    %2842 = vrot.lane.b32.xlu0 %v2841, 32
    %v2843 = vpop.permute.xlu0 %2842
    %2844 = vrot.lane.b32.xlu0 %v2840, 32
    %v2845 = vpop.permute.xlu0 %2844
    %2846 = vrot.lane.b32.xlu0 %v2839, 32
    %v2847 = vpop.permute.xlu0 %2846
    %2848 = vrot.lane.b32.xlu0 %v2838, 32
    %v2849 = vpop.permute.xlu0 %2848
    %2850 = vrot.lane.b32.xlu0 %v2837, 32
    %v2851 = vpop.permute.xlu0 %2850
    %2852 = vrot.lane.b32.xlu0 %v2836, 32
    %v2853 = vpop.permute.xlu0 %2852
    %2854 = vrot.lane.b32.xlu0 %v2835, 32
    %v2855 = vpop.permute.xlu0 %2854
    %2856 = vrot.lane.b32.xlu0 %v2834, 32
    %v2857 = vpop.permute.xlu0 %2856
    %2858 = vrot.lane.b32.xlu0 %v2833, 32
    %v2859 = vpop.permute.xlu0 %2858
    %2860 = vrot.lane.b32.xlu0 %v2832, 32
    %v2861 = vpop.permute.xlu0 %2860
    %2862 = vrot.lane.b32.xlu0 %v2831, 32
    %v2863 = vpop.permute.xlu0 %2862
    %2864 = vrot.lane.b32.xlu0 %v2830, 32
    %v2865 = vpop.permute.xlu0 %2864
    %2866 = vrot.lane.b32.xlu0 %v2829, 32
    %v2867 = vpop.permute.xlu0 %2866
    %v2868 = vadd.f32 %v2815, %v2843
    %v2869 = vadd.f32 %v2803, %v2845
    %v2870 = vadd.f32 %v2804, %v2847
    %v2871 = vadd.f32 %v2805, %v2849
    %v2872 = vadd.f32 %v2806, %v2851
    %v2873 = vadd.f32 %v2807, %v2853
    %v2874 = vadd.f32 %v2808, %v2855
    %v2875 = vadd.f32 %v2809, %v2857
    %v2876 = vadd.f32 %v2810, %v2859
    %v2877 = vadd.f32 %v2811, %v2861
    %v2878 = vadd.f32 %v2812, %v2863
    %v2879 = vadd.f32 %v2813, %v2865
    %v2880 = vadd.f32 %v2814, %v2867
    %v2881 = vrot.slane %v2803, 2
    %v2882 = vrot.slane %v2804, 2
    %v2883 = vrot.slane %v2805, 2
    %v2884 = vrot.slane %v2806, 2
    %v2885 = vrot.slane %v2807, 2
    %v2886 = vrot.slane %v2808, 2
    %v2887 = vrot.slane %v2809, 2
    %v2888 = vrot.slane %v2810, 2
    %v2889 = vrot.slane %v2811, 2
    %v2890 = vrot.slane %v2812, 2
    %v2891 = vrot.slane %v2813, 2
    %v2892 = vrot.slane %v2814, 2
    %v2893 = vrot.slane %v2815, 2
    %v2894 = vsel %vm180, %v2892, %v2893
    %v2895 = vsel %vm180, %v2891, %v2892
    %v2896 = vsel %vm180, %v2890, %v2891
    %v2897 = vsel %vm180, %v2889, %v2890
    %v2898 = vsel %vm180, %v2888, %v2889
    %v2899 = vsel %vm180, %v2887, %v2888
    %v2900 = vsel %vm180, %v2886, %v2887
    %v2901 = vsel %vm180, %v2885, %v2886
    %v2902 = vsel %vm180, %v2884, %v2885
    %v2903 = vsel %vm180, %v2883, %v2884
    %v2904 = vsel %vm180, %v2882, %v2883
    %v2905 = vsel %vm180, %v2881, %v2882
    %v2906 = vsel %vm180, %v2893, %v2881
    %2907 = vrot.lane.b32.xlu0 %v2906, 64
    %v2908 = vpop.permute.xlu0 %2907
    %2909 = vrot.lane.b32.xlu0 %v2905, 64
    %v2910 = vpop.permute.xlu0 %2909
    %2911 = vrot.lane.b32.xlu0 %v2904, 64
    %v2912 = vpop.permute.xlu0 %2911
    %2913 = vrot.lane.b32.xlu0 %v2903, 64
    %v2914 = vpop.permute.xlu0 %2913
    %2915 = vrot.lane.b32.xlu0 %v2902, 64
    %v2916 = vpop.permute.xlu0 %2915
    %2917 = vrot.lane.b32.xlu0 %v2901, 64
    %v2918 = vpop.permute.xlu0 %2917
    %2919 = vrot.lane.b32.xlu0 %v2900, 64
    %v2920 = vpop.permute.xlu0 %2919
    %2921 = vrot.lane.b32.xlu0 %v2899, 64
    %v2922 = vpop.permute.xlu0 %2921
    %2923 = vrot.lane.b32.xlu0 %v2898, 64
    %v2924 = vpop.permute.xlu0 %2923
    %2925 = vrot.lane.b32.xlu0 %v2897, 64
    %v2926 = vpop.permute.xlu0 %2925
    %2927 = vrot.lane.b32.xlu0 %v2896, 64
    %v2928 = vpop.permute.xlu0 %2927
    %2929 = vrot.lane.b32.xlu0 %v2895, 64
    %v2930 = vpop.permute.xlu0 %2929
    %2931 = vrot.lane.b32.xlu0 %v2894, 64
    %v2932 = vpop.permute.xlu0 %2931
    %v2933 = vadd.f32 %v2868, %v2908
    %v2934 = vadd.f32 %v2869, %v2910
    %v2935 = vadd.f32 %v2870, %v2912
    %v2936 = vadd.f32 %v2871, %v2914
    %v2937 = vadd.f32 %v2872, %v2916
    %v2938 = vadd.f32 %v2873, %v2918
    %v2939 = vadd.f32 %v2874, %v2920
    %v2940 = vadd.f32 %v2875, %v2922
    %v2941 = vadd.f32 %v2876, %v2924
    %v2942 = vadd.f32 %v2877, %v2926
    %v2943 = vadd.f32 %v2878, %v2928
    %v2944 = vadd.f32 %v2879, %v2930
    %v2945 = vadd.f32 %v2880, %v2932
    %v2946 = vrot.slane %v2803, 7
    %v2947 = vrot.slane %v2804, 7
    %v2948 = vrot.slane %v2805, 7
    %v2949 = vrot.slane %v2806, 7
    %v2950 = vrot.slane %v2807, 7
    %v2951 = vrot.slane %v2808, 7
    %v2952 = vrot.slane %v2809, 7
    %v2953 = vrot.slane %v2810, 7
    %v2954 = vrot.slane %v2811, 7
    %v2955 = vrot.slane %v2812, 7
    %v2956 = vrot.slane %v2813, 7
    %v2957 = vrot.slane %v2814, 7
    %v2958 = vrot.slane %v2815, 7
    %v2959 = vsel %vm246, %v2957, %v2958
    %v2960 = vsel %vm246, %v2956, %v2957
    %v2961 = vsel %vm246, %v2955, %v2956
    %v2962 = vsel %vm246, %v2954, %v2955
    %v2963 = vsel %vm246, %v2953, %v2954
    %v2964 = vsel %vm246, %v2952, %v2953
    %v2965 = vsel %vm246, %v2951, %v2952
    %v2966 = vsel %vm246, %v2950, %v2951
    %v2967 = vsel %vm246, %v2949, %v2950
    %v2968 = vsel %vm246, %v2948, %v2949
    %v2969 = vsel %vm246, %v2947, %v2948
    %v2970 = vsel %vm246, %v2946, %v2947
    %v2971 = vsel %vm246, %v2958, %v2946
    %2972 = vrot.lane.b32.xlu0 %v2971, 96
    %v2973 = vpop.permute.xlu0 %2972
    %2974 = vrot.lane.b32.xlu0 %v2970, 96
    %v2975 = vpop.permute.xlu0 %2974
    %2976 = vrot.lane.b32.xlu0 %v2969, 96
    %v2977 = vpop.permute.xlu0 %2976
    %2978 = vrot.lane.b32.xlu0 %v2968, 96
    %v2979 = vpop.permute.xlu0 %2978
    %2980 = vrot.lane.b32.xlu0 %v2967, 96
    %v2981 = vpop.permute.xlu0 %2980
    %2982 = vrot.lane.b32.xlu0 %v2966, 96
    %v2983 = vpop.permute.xlu0 %2982
    %2984 = vrot.lane.b32.xlu0 %v2965, 96
    %v2985 = vpop.permute.xlu0 %2984
    %2986 = vrot.lane.b32.xlu0 %v2964, 96
    %v2987 = vpop.permute.xlu0 %2986
    %2988 = vrot.lane.b32.xlu0 %v2963, 96
    %v2989 = vpop.permute.xlu0 %2988
    %2990 = vrot.lane.b32.xlu0 %v2962, 96
    %v2991 = vpop.permute.xlu0 %2990
    %2992 = vrot.lane.b32.xlu0 %v2961, 96
    %v2993 = vpop.permute.xlu0 %2992
    %2994 = vrot.lane.b32.xlu0 %v2960, 96
    %v2995 = vpop.permute.xlu0 %2994
    %2996 = vrot.lane.b32.xlu0 %v2959, 96
    %v2997 = vpop.permute.xlu0 %2996
    %v2998 = vadd.f32 %v2933, %v2973
    %v2999 = vadd.f32 %v2934, %v2975
    %v3000 = vadd.f32 %v2935, %v2977
    %v3001 = vadd.f32 %v2936, %v2979
    %v3002 = vadd.f32 %v2937, %v2981
    %v3003 = vadd.f32 %v2938, %v2983
    %v3004 = vadd.f32 %v2939, %v2985
    %v3005 = vadd.f32 %v2940, %v2987
    %v3006 = vadd.f32 %v2941, %v2989
    %v3007 = vadd.f32 %v2942, %v2991
    %v3008 = vadd.f32 %v2943, %v2993
    %v3009 = vadd.f32 %v2944, %v2995
    %v3010 = vadd.f32 %v2945, %v2997
    %v3011 = vpack.c.bf16 %v2999, %v2998
    %v3012 = vpack.c.bf16 %v3001, %v3000
    %v3013 = vpack.c.bf16 %v3003, %v3002
    %v3014 = vpack.c.bf16 %v3005, %v3004
    %v3015 = vpack.c.bf16 %v3007, %v3006
    %v3016 = vpack.c.bf16 %v3009, %v3008
    %v3017 = vpack.c.bf16 %v3010, %v3010
    %s3018 = scalar_lea.vmem [#allocation2], 768
    %v3019 = vld [vmem:[%s3018] sm:$0xf]
    %v3020 = vld [vmem:[%s3018 + $0x4] sm:$0xf]
    %v3021 = vld [vmem:[%s3018 + $0x8] sm:$0xf]
    %v3022 = vld [vmem:[%s3018 + $0xc] sm:$0xf]
    %v3023 = vld [vmem:[%s3018 + $0x10] sm:$0xf]
    %v3024 = vld [vmem:[%s3018 + $0x14] sm:$0xf]
    %v3025 = vld [vmem:[%s3018 + $0x18] sm:$0xf]
    %v3026 = vld [vmem:[%s3018 + $0x1c] sm:$0xf]
    %v3027 = vld [vmem:[%s3018 + $0x20] sm:$0xf]
    %v3028 = vld [vmem:[%s3018 + $0x24] sm:$0xf]
    %v3029 = vld [vmem:[%s3018 + $0x28] sm:$0xf]
    %v3030 = vld [vmem:[%s3018 + $0x2c] sm:$0xf]
    %v3031 = vld [vmem:[%s3018 + $0x30] sm:$0xf]
    %v3032 = vld [vmem:[%s3018 + $0x34] sm:$0xf]
    %v3033 = vld [vmem:[%s3018 + $0x38] sm:$0xf]
    %v3034 = vld [vmem:[%s3018 + $0x3c] sm:$0xf]
    %v3035 = vrot.slane %v2803, 6
    %v3036 = vrot.slane %v2804, 6
    %v3037 = vrot.slane %v2805, 6
    %v3038 = vrot.slane %v2806, 6
    %v3039 = vrot.slane %v2807, 6
    %v3040 = vrot.slane %v2808, 6
    %v3041 = vrot.slane %v2809, 6
    %v3042 = vrot.slane %v2810, 6
    %v3043 = vrot.slane %v2811, 6
    %v3044 = vrot.slane %v2812, 6
    %v3045 = vrot.slane %v2813, 6
    %v3046 = vrot.slane %v2814, 6
    %v3047 = vrot.slane %v2815, 6
    %v3048 = vsel %vm335, %v3046, %v3047
    %v3049 = vsel %vm335, %v3045, %v3046
    %v3050 = vsel %vm335, %v3044, %v3045
    %v3051 = vsel %vm335, %v3043, %v3044
    %v3052 = vsel %vm335, %v3042, %v3043
    %v3053 = vsel %vm335, %v3041, %v3042
    %v3054 = vsel %vm335, %v3040, %v3041
    %v3055 = vsel %vm335, %v3039, %v3040
    %v3056 = vsel %vm335, %v3038, %v3039
    %v3057 = vsel %vm335, %v3037, %v3038
    %v3058 = vsel %vm335, %v3036, %v3037
    %v3059 = vsel %vm335, %v3035, %v3036
    %v3060 = vsel %vm335, %v3047, %v3035
    %3061 = vrot.lane.b32.xlu0 %v3059, 64
    %v3062 = vpop.permute.xlu0 %3061
    %3063 = vrot.lane.b32.xlu0 %v3058, 64
    %v3064 = vpop.permute.xlu0 %3063
    %3065 = vrot.lane.b32.xlu0 %v3057, 64
    %v3066 = vpop.permute.xlu0 %3065
    %3067 = vrot.lane.b32.xlu0 %v3056, 64
    %v3068 = vpop.permute.xlu0 %3067
    %3069 = vrot.lane.b32.xlu0 %v3055, 64
    %v3070 = vpop.permute.xlu0 %3069
    %3071 = vrot.lane.b32.xlu0 %v3054, 64
    %v3072 = vpop.permute.xlu0 %3071
    %3073 = vrot.lane.b32.xlu0 %v3053, 64
    %v3074 = vpop.permute.xlu0 %3073
    %3075 = vrot.lane.b32.xlu0 %v3052, 64
    %v3076 = vpop.permute.xlu0 %3075
    %3077 = vrot.lane.b32.xlu0 %v3051, 64
    %v3078 = vpop.permute.xlu0 %3077
    %3079 = vrot.lane.b32.xlu0 %v3050, 64
    %v3080 = vpop.permute.xlu0 %3079
    %3081 = vrot.lane.b32.xlu0 %v3049, 64
    %v3082 = vpop.permute.xlu0 %3081
    %3083 = vrot.lane.b32.xlu0 %v3048, 64
    %v3084 = vpop.permute.xlu0 %3083
    %3085 = vrot.lane.b32.xlu0 %v3060, 64
    %v3086 = vpop.permute.xlu0 %3085
    %v3087 = vadd.f32 %v2869, %v3062
    %v3088 = vadd.f32 %v2870, %v3064
    %v3089 = vadd.f32 %v2871, %v3066
    %v3090 = vadd.f32 %v2872, %v3068
    %v3091 = vadd.f32 %v2873, %v3070
    %v3092 = vadd.f32 %v2874, %v3072
    %v3093 = vadd.f32 %v2875, %v3074
    %v3094 = vadd.f32 %v2876, %v3076
    %v3095 = vadd.f32 %v2877, %v3078
    %v3096 = vadd.f32 %v2878, %v3080
    %v3097 = vadd.f32 %v2879, %v3082
    %v3098 = vadd.f32 %v2880, %v3084
    %v3099 = vadd.f32 %v2868, %v3086
    %v3100 = vadd.f32 %v3087, %v2975
    %v3101 = vadd.f32 %v3088, %v2977
    %v3102 = vadd.f32 %v3089, %v2979
    %v3103 = vadd.f32 %v3090, %v2981
    %v3104 = vadd.f32 %v3091, %v2983
    %v3105 = vadd.f32 %v3092, %v2985
    %v3106 = vadd.f32 %v3093, %v2987
    %v3107 = vadd.f32 %v3094, %v2989
    %v3108 = vadd.f32 %v3095, %v2991
    %v3109 = vadd.f32 %v3096, %v2993
    %v3110 = vadd.f32 %v3097, %v2995
    %v3111 = vadd.f32 %v3098, %v2997
    %v3112 = vadd.f32 %v3099, %v2973
    %v3113 = vpack.c.bf16 %v3101, %v3100
    %v3114 = vpack.c.bf16 %v3103, %v3102
    %v3115 = vpack.c.bf16 %v3105, %v3104
    %v3116 = vpack.c.bf16 %v3107, %v3106
    %v3117 = vpack.c.bf16 %v3109, %v3108
    %v3118 = vpack.c.bf16 %v3111, %v3110
    %v3119 = vpack.c.bf16 %v3112, %v3112
    %s3120 = scalar_lea.vmem [#allocation2], 832
    %v3121 = vld [vmem:[%s3120] sm:$0xf]
    %v3122 = vld [vmem:[%s3120 + $0x4] sm:$0xf]
    %v3123 = vld [vmem:[%s3120 + $0x8] sm:$0xf]
    %v3124 = vld [vmem:[%s3120 + $0xc] sm:$0xf]
    %v3125 = vld [vmem:[%s3120 + $0x10] sm:$0xf]
    %v3126 = vld [vmem:[%s3120 + $0x14] sm:$0xf]
    %v3127 = vld [vmem:[%s3120 + $0x18] sm:$0xf]
    %v3128 = vld [vmem:[%s3120 + $0x1c] sm:$0xf]
    %v3129 = vld [vmem:[%s3120 + $0x20] sm:$0xf]
    %v3130 = vld [vmem:[%s3120 + $0x24] sm:$0xf]
    %v3131 = vld [vmem:[%s3120 + $0x28] sm:$0xf]
    %v3132 = vld [vmem:[%s3120 + $0x2c] sm:$0xf]
    %v3133 = vld [vmem:[%s3120 + $0x30] sm:$0xf]
    %v3134 = vld [vmem:[%s3120 + $0x34] sm:$0xf]
    %v3135 = vld [vmem:[%s3120 + $0x38] sm:$0xf]
    %v3136 = vld [vmem:[%s3120 + $0x3c] sm:$0xf]
    %v3153 = vunpack.c.l.b16 %v3121
    %v3154 = vunpack.c.l.b16 %v3122
    %v3155 = vunpack.c.l.b16 %v3123
    %v3156 = vunpack.c.l.b16 %v3124
    %v3157 = vunpack.c.l.b16 %v3125
    %v3158 = vunpack.c.l.b16 %v3126
    %v3159 = vunpack.c.l.b16 %v3127
    %v3160 = vunpack.c.l.b16 %v3128
    %v3161 = vunpack.c.l.b16 %v3129
    %v3162 = vunpack.c.l.b16 %v3130
    %v3163 = vunpack.c.l.b16 %v3131
    %v3164 = vunpack.c.l.b16 %v3132
    %v3165 = vunpack.c.l.b16 %v3133
    %v3166 = vunpack.c.l.b16 %v3134
    %v3167 = vunpack.c.l.b16 %v3135
    %v3168 = vunpack.c.l.b16 %v3136
    %v3169 = vpack.c.b16 %v3154, %v3153
    %v3170 = vpack.c.b16 %v3156, %v3155
    %v3171 = vpack.c.b16 %v3158, %v3157
    %v3172 = vpack.c.b16 %v3160, %v3159
    %v3173 = vpack.c.b16 %v3162, %v3161
    %v3174 = vpack.c.b16 %v3164, %v3163
    %v3175 = vpack.c.b16 %v3166, %v3165
    %v3176 = vpack.c.b16 %v3168, %v3167
    %3185 = vmatpush.bf16.msra.mxu0 %v3176
    %3186 = vmatpush.bf16.msra.mxu0 %v3175
    %3187 = vmatpush.bf16.msra.mxu0 %v3174
    %3188 = vmatpush.bf16.msra.mxu0 %v3173
    %3189 = vmatpush.bf16.msra.mxu0 %v3172
    %3190 = vmatpush.bf16.msra.mxu0 %v3171
    %3191 = vmatpush.bf16.msra.mxu0 %v3170
    %3192 = vmatpush.bf16.msra.mxu0 %v3169
    %3193 = vmatmul.bf16.gmra.mxu0 %v3113
    %v3194 = vpop.f32.mrf.mxu0
    %v3195 = vadd.f32 0.0, %v3194
    %v3196 = vpop.f32.mrf.mxu0
    %v3197 = vadd.f32 0.0, %v3196
    %3198 = vmatmul.bf16.gmra.mxu0 %v3114
    %v3199 = vpop.f32.mrf.mxu0
    %v3200 = vadd.f32 0.0, %v3199
    %v3201 = vpop.f32.mrf.mxu0
    %v3202 = vadd.f32 0.0, %v3201
    %3203 = vmatmul.bf16.gmra.mxu0 %v3115
    %v3204 = vpop.f32.mrf.mxu0
    %v3205 = vadd.f32 0.0, %v3204
    %v3206 = vpop.f32.mrf.mxu0
    %v3207 = vadd.f32 0.0, %v3206
    %3208 = vmatmul.bf16.gmra.mxu0 %v3116
    %v3209 = vpop.f32.mrf.mxu0
    %v3210 = vadd.f32 0.0, %v3209
    %v3211 = vpop.f32.mrf.mxu0
    %v3212 = vadd.f32 0.0, %v3211
    %3213 = vmatmul.bf16.gmra.mxu0 %v3117
    %v3214 = vpop.f32.mrf.mxu0
    %v3215 = vadd.f32 0.0, %v3214
    %v3216 = vpop.f32.mrf.mxu0
    %v3217 = vadd.f32 0.0, %v3216
    %3218 = vmatmul.bf16.gmra.mxu0 %v3118
    %v3219 = vpop.f32.mrf.mxu0
    %v3220 = vadd.f32 0.0, %v3219
    %v3221 = vpop.f32.mrf.mxu0
    %v3222 = vadd.f32 0.0, %v3221
    %3223 = vmatmul.bf16.gmra.mxu0 %v3119
    %v3224 = vpop.f32.mrf.mxu0
    %v3225 = vadd.f32 0.0, %v3224
    %v3226 = vpop.f32.mrf.mxu0
    %3227 = vdwg.mxu0
    %v3228 = vpack.c.bf16 %v2805, %v2804
    %v3229 = vpack.c.bf16 %v2807, %v2806
    %v3230 = vpack.c.bf16 %v2809, %v2808
    %v3231 = vpack.c.bf16 %v2811, %v2810
    %v3232 = vpack.c.bf16 %v2813, %v2812
    %v3233 = vpack.c.bf16 %v2815, %v2814
    %v3234 = vpack.c.bf16 %v2803, %v2803
    %s3235 = scalar_lea.vmem [#allocation2], 896
    %v3236 = vld [vmem:[%s3235] sm:$0xf]
    %v3237 = vld [vmem:[%s3235 + $0x4] sm:$0xf]
    %v3238 = vld [vmem:[%s3235 + $0x8] sm:$0xf]
    %v3239 = vld [vmem:[%s3235 + $0xc] sm:$0xf]
    %v3240 = vld [vmem:[%s3235 + $0x10] sm:$0xf]
    %v3241 = vld [vmem:[%s3235 + $0x14] sm:$0xf]
    %v3242 = vld [vmem:[%s3235 + $0x18] sm:$0xf]
    %v3243 = vld [vmem:[%s3235 + $0x1c] sm:$0xf]
    %v3244 = vld [vmem:[%s3235 + $0x20] sm:$0xf]
    %v3245 = vld [vmem:[%s3235 + $0x24] sm:$0xf]
    %v3246 = vld [vmem:[%s3235 + $0x28] sm:$0xf]
    %v3247 = vld [vmem:[%s3235 + $0x2c] sm:$0xf]
    %v3248 = vld [vmem:[%s3235 + $0x30] sm:$0xf]
    %v3249 = vld [vmem:[%s3235 + $0x34] sm:$0xf]
    %v3250 = vld [vmem:[%s3235 + $0x38] sm:$0xf]
    %v3251 = vld [vmem:[%s3235 + $0x3c] sm:$0xf]
    %v3268 = vunpack.c.l.b16 %v3236
    %v3269 = vunpack.c.l.b16 %v3237
    %v3270 = vunpack.c.l.b16 %v3238
    %v3271 = vunpack.c.l.b16 %v3239
    %v3272 = vunpack.c.l.b16 %v3240
    %v3273 = vunpack.c.l.b16 %v3241
    %v3274 = vunpack.c.l.b16 %v3242
    %v3275 = vunpack.c.l.b16 %v3243
    %v3276 = vunpack.c.l.b16 %v3244
    %v3277 = vunpack.c.l.b16 %v3245
    %v3278 = vunpack.c.l.b16 %v3246
    %v3279 = vunpack.c.l.b16 %v3247
    %v3280 = vunpack.c.l.b16 %v3248
    %v3281 = vunpack.c.l.b16 %v3249
    %v3282 = vunpack.c.l.b16 %v3250
    %v3283 = vunpack.c.l.b16 %v3251
    %v3284 = vpack.c.b16 %v3269, %v3268
    %v3285 = vpack.c.b16 %v3271, %v3270
    %v3286 = vpack.c.b16 %v3273, %v3272
    %v3287 = vpack.c.b16 %v3275, %v3274
    %v3288 = vpack.c.b16 %v3277, %v3276
    %v3289 = vpack.c.b16 %v3279, %v3278
    %v3290 = vpack.c.b16 %v3281, %v3280
    %v3291 = vpack.c.b16 %v3283, %v3282
    %3300 = vmatpush.bf16.msra.mxu0 %v3291
    %3301 = vmatpush.bf16.msra.mxu0 %v3290
    %3302 = vmatpush.bf16.msra.mxu0 %v3289
    %3303 = vmatpush.bf16.msra.mxu0 %v3288
    %3304 = vmatpush.bf16.msra.mxu0 %v3287
    %3305 = vmatpush.bf16.msra.mxu0 %v3286
    %3306 = vmatpush.bf16.msra.mxu0 %v3285
    %3307 = vmatpush.bf16.msra.mxu0 %v3284
    %3308 = vmatmul.bf16.gmra.mxu0 %v3228
    %v3309 = vpop.f32.mrf.mxu0
    %v3310 = vadd.f32 0.0, %v3309
    %v3311 = vpop.f32.mrf.mxu0
    %v3312 = vadd.f32 0.0, %v3311
    %3313 = vmatmul.bf16.gmra.mxu0 %v3229
    %v3314 = vpop.f32.mrf.mxu0
    %v3315 = vadd.f32 0.0, %v3314
    %v3316 = vpop.f32.mrf.mxu0
    %v3317 = vadd.f32 0.0, %v3316
    %3318 = vmatmul.bf16.gmra.mxu0 %v3230
    %v3319 = vpop.f32.mrf.mxu0
    %v3320 = vadd.f32 0.0, %v3319
    %v3321 = vpop.f32.mrf.mxu0
    %v3322 = vadd.f32 0.0, %v3321
    %3323 = vmatmul.bf16.gmra.mxu0 %v3231
    %v3324 = vpop.f32.mrf.mxu0
    %v3325 = vadd.f32 0.0, %v3324
    %v3326 = vpop.f32.mrf.mxu0
    %v3327 = vadd.f32 0.0, %v3326
    %3328 = vmatmul.bf16.gmra.mxu0 %v3232
    %v3329 = vpop.f32.mrf.mxu0
    %v3330 = vadd.f32 0.0, %v3329
    %v3331 = vpop.f32.mrf.mxu0
    %v3332 = vadd.f32 0.0, %v3331
    %3333 = vmatmul.bf16.gmra.mxu0 %v3233
    %v3334 = vpop.f32.mrf.mxu0
    %v3335 = vadd.f32 0.0, %v3334
    %v3336 = vpop.f32.mrf.mxu0
    %v3337 = vadd.f32 0.0, %v3336
    %3338 = vmatmul.bf16.gmra.mxu0 %v3234
    %v3339 = vpop.f32.mrf.mxu0
    %v3340 = vadd.f32 0.0, %v3339
    %v3341 = vpop.f32.mrf.mxu0
    %3342 = vdwg.mxu0
    %v3359 = vunpack.c.l.b16 %v3019
    %v3360 = vunpack.c.l.b16 %v3020
    %v3361 = vunpack.c.l.b16 %v3021
    %v3362 = vunpack.c.l.b16 %v3022
    %v3363 = vunpack.c.l.b16 %v3023
    %v3364 = vunpack.c.l.b16 %v3024
    %v3365 = vunpack.c.l.b16 %v3025
    %v3366 = vunpack.c.l.b16 %v3026
    %v3367 = vunpack.c.l.b16 %v3027
    %v3368 = vunpack.c.l.b16 %v3028
    %v3369 = vunpack.c.l.b16 %v3029
    %v3370 = vunpack.c.l.b16 %v3030
    %v3371 = vunpack.c.l.b16 %v3031
    %v3372 = vunpack.c.l.b16 %v3032
    %v3373 = vunpack.c.l.b16 %v3033
    %v3374 = vunpack.c.l.b16 %v3034
    %v3375 = vpack.c.b16 %v3360, %v3359
    %v3376 = vpack.c.b16 %v3362, %v3361
    %v3377 = vpack.c.b16 %v3364, %v3363
    %v3378 = vpack.c.b16 %v3366, %v3365
    %v3379 = vpack.c.b16 %v3368, %v3367
    %v3380 = vpack.c.b16 %v3370, %v3369
    %v3381 = vpack.c.b16 %v3372, %v3371
    %v3382 = vpack.c.b16 %v3374, %v3373
    %3391 = vmatpush.bf16.msra.mxu0 %v3382
    %3392 = vmatpush.bf16.msra.mxu0 %v3381
    %3393 = vmatpush.bf16.msra.mxu0 %v3380
    %3394 = vmatpush.bf16.msra.mxu0 %v3379
    %3395 = vmatpush.bf16.msra.mxu0 %v3378
    %3396 = vmatpush.bf16.msra.mxu0 %v3377
    %3397 = vmatpush.bf16.msra.mxu0 %v3376
    %3398 = vmatpush.bf16.msra.mxu0 %v3375
    %3399 = vmatmul.bf16.gmra.mxu0 %v3011
    %v3400 = vpop.f32.mrf.mxu0
    %v3401 = vadd.f32 %v3195, %v3400
    %v3402 = vpop.f32.mrf.mxu0
    %v3403 = vadd.f32 %v3197, %v3402
    %3404 = vmatmul.bf16.gmra.mxu0 %v3012
    %v3405 = vpop.f32.mrf.mxu0
    %v3406 = vadd.f32 %v3200, %v3405
    %v3407 = vpop.f32.mrf.mxu0
    %v3408 = vadd.f32 %v3202, %v3407
    %3409 = vmatmul.bf16.gmra.mxu0 %v3013
    %v3410 = vpop.f32.mrf.mxu0
    %v3411 = vadd.f32 %v3205, %v3410
    %v3412 = vpop.f32.mrf.mxu0
    %v3413 = vadd.f32 %v3207, %v3412
    %3414 = vmatmul.bf16.gmra.mxu0 %v3014
    %v3415 = vpop.f32.mrf.mxu0
    %v3416 = vadd.f32 %v3210, %v3415
    %v3417 = vpop.f32.mrf.mxu0
    %v3418 = vadd.f32 %v3212, %v3417
    %3419 = vmatmul.bf16.gmra.mxu0 %v3015
    %v3420 = vpop.f32.mrf.mxu0
    %v3421 = vadd.f32 %v3215, %v3420
    %v3422 = vpop.f32.mrf.mxu0
    %v3423 = vadd.f32 %v3217, %v3422
    %3424 = vmatmul.bf16.gmra.mxu0 %v3016
    %v3425 = vpop.f32.mrf.mxu0
    %v3426 = vadd.f32 %v3220, %v3425
    %v3427 = vpop.f32.mrf.mxu0
    %v3428 = vadd.f32 %v3222, %v3427
    %3429 = vmatmul.bf16.gmra.mxu0 %v3017
    %v3430 = vpop.f32.mrf.mxu0
    %v3431 = vadd.f32 %v3225, %v3430
    %v3432 = vpop.f32.mrf.mxu0
    %3433 = vdwg.mxu0
    %v3434 = vadd.f32 %v3401, %v3310
    %v3435 = vadd.f32 %v3403, %v3312
    %v3436 = vadd.f32 %v3406, %v3315
    %v3437 = vadd.f32 %v3408, %v3317
    %v3438 = vadd.f32 %v3411, %v3320
    %v3439 = vadd.f32 %v3413, %v3322
    %v3440 = vadd.f32 %v3416, %v3325
    %v3441 = vadd.f32 %v3418, %v3327
    %v3442 = vadd.f32 %v3421, %v3330
    %v3443 = vadd.f32 %v3423, %v3332
    %v3444 = vadd.f32 %v3426, %v3335
    %v3445 = vadd.f32 %v3428, %v3337
    %v3446 = vadd.f32 %v3431, %v3340
    %s3447 = scalar_lea.vmem %s2, 4
    %v3448 = vld [vmem:[%s3447] sm:$0x1]
    %v3450 = vperm.slane %v3448, 0
    %v3452 = vadd.f32 %v3434, %v3450
    %v3453 = vadd.f32 %v3435, %v3450
    %v3454 = vadd.f32 %v3436, %v3450
    %v3455 = vadd.f32 %v3437, %v3450
    %v3456 = vadd.f32 %v3438, %v3450
    %v3457 = vadd.f32 %v3439, %v3450
    %v3458 = vadd.f32 %v3440, %v3450
    %v3459 = vadd.f32 %v3441, %v3450
    %v3460 = vadd.f32 %v3442, %v3450
    %v3461 = vadd.f32 %v3443, %v3450
    %v3462 = vadd.f32 %v3444, %v3450
    %v3463 = vadd.f32 %v3445, %v3450
    %v3464 = vadd.f32 %v3446, %v3450
    %v3465 = vadd.f32 %v3452, %v2128
    %v3466 = vadd.f32 %v3453, %v2129
    %v3467 = vadd.f32 %v3454, %v2130
    %v3468 = vadd.f32 %v3455, %v2131
    %v3469 = vadd.f32 %v3456, %v2132
    %v3470 = vadd.f32 %v3457, %v2133
    %v3471 = vadd.f32 %v3458, %v2134
    %v3472 = vadd.f32 %v3459, %v2135
    %v3473 = vadd.f32 %v3460, %v2136
    %v3474 = vadd.f32 %v3461, %v2137
    %v3475 = vadd.f32 %v3462, %v2138
    %v3476 = vadd.f32 %v3463, %v2139
    %v3477 = vadd.f32 %v3464, %v2140
    %v3478 = vmax.f32 %v3465, 0.0
    %v3479 = vmax.f32 %v3466, 0.0
    %v3480 = vmax.f32 %v3467, 0.0
    %v3481 = vmax.f32 %v3468, 0.0
    %v3482 = vmax.f32 %v3469, 0.0
    %v3483 = vmax.f32 %v3470, 0.0
    %v3484 = vmax.f32 %v3471, 0.0
    %v3485 = vmax.f32 %v3472, 0.0
    %v3486 = vmax.f32 %v3473, 0.0
    %v3487 = vmax.f32 %v3474, 0.0
    %v3488 = vmax.f32 %v3475, 0.0
    %v3489 = vmax.f32 %v3476, 0.0
    %v3490 = vmax.f32 %v3477, 0.0
    %v3491 = vmul.f32 %v3478, %v73
    %v3492 = vmul.f32 %v3479, %v74
    %v3493 = vmul.f32 %v3480, %v75
    %v3494 = vmul.f32 %v3481, %v76
    %v3495 = vmul.f32 %v3482, %v77
    %v3496 = vmul.f32 %v3483, %v78
    %v3497 = vmul.f32 %v3484, %v79
    %v3498 = vmul.f32 %v3485, %v80
    %v3499 = vmul.f32 %v3486, %v81
    %v3500 = vmul.f32 %v3487, %v82
    %v3501 = vmul.f32 %v3488, %v83
    %v3502 = vmul.f32 %v3489, %v84
    %v3503 = vmul.f32 %v3490, %v85
    %v3504 = vpack.c.bf16 %v3492, %v3491
    %v3505 = vpack.c.bf16 %v3494, %v3493
    %v3506 = vpack.c.bf16 %v3496, %v3495
    %v3507 = vpack.c.bf16 %v3498, %v3497
    %v3508 = vpack.c.bf16 %v3500, %v3499
    %v3509 = vpack.c.bf16 %v3502, %v3501
    %v3510 = vpack.c.bf16 %v3503, %v3503
    %v3511 = vld [vmem:[%s4] sm:$0xf]
    %v3512 = vld [vmem:[%s4 + $0x4] sm:$0xf]
    %v3513 = vld [vmem:[%s4 + $0x8] sm:$0xf]
    %v3514 = vld [vmem:[%s4 + $0xc] sm:$0xf]
    %v3515 = vld [vmem:[%s4 + $0x10] sm:$0xf]
    %v3516 = vld [vmem:[%s4 + $0x14] sm:$0xf]
    %v3517 = vld [vmem:[%s4 + $0x18] sm:$0xf]
    %v3518 = vld [vmem:[%s4 + $0x1c] sm:$0xf]
    %v3519 = vld [vmem:[%s4 + $0x20] sm:$0xf]
    %v3520 = vld [vmem:[%s4 + $0x24] sm:$0xf]
    %v3521 = vld [vmem:[%s4 + $0x28] sm:$0xf]
    %v3522 = vld [vmem:[%s4 + $0x2c] sm:$0xf]
    %v3523 = vld [vmem:[%s4 + $0x30] sm:$0xf]
    %v3524 = vld [vmem:[%s4 + $0x34] sm:$0xf]
    %v3525 = vld [vmem:[%s4 + $0x38] sm:$0xf]
    %v3526 = vld [vmem:[%s4 + $0x3c] sm:$0xf]
    %v3527 = vld [vmem:[%s5] sm:$0x1]
    %v3529 = vperm.slane %v3527, 0
    %v3547 = vunpack.c.l.b16 %v3511
    %v3548 = vunpack.c.l.b16 %v3512
    %v3549 = vunpack.c.l.b16 %v3513
    %v3550 = vunpack.c.l.b16 %v3514
    %v3551 = vunpack.c.l.b16 %v3515
    %v3552 = vunpack.c.l.b16 %v3516
    %v3553 = vunpack.c.l.b16 %v3517
    %v3554 = vunpack.c.l.b16 %v3518
    %v3555 = vunpack.c.l.b16 %v3519
    %v3556 = vunpack.c.l.b16 %v3520
    %v3557 = vunpack.c.l.b16 %v3521
    %v3558 = vunpack.c.l.b16 %v3522
    %v3559 = vunpack.c.l.b16 %v3523
    %v3560 = vunpack.c.l.b16 %v3524
    %v3561 = vunpack.c.l.b16 %v3525
    %v3562 = vunpack.c.l.b16 %v3526
    %v3563 = vpack.c.b16 %v3548, %v3547
    %v3564 = vpack.c.b16 %v3550, %v3549
    %v3565 = vpack.c.b16 %v3552, %v3551
    %v3566 = vpack.c.b16 %v3554, %v3553
    %v3567 = vpack.c.b16 %v3556, %v3555
    %v3568 = vpack.c.b16 %v3558, %v3557
    %v3569 = vpack.c.b16 %v3560, %v3559
    %v3570 = vpack.c.b16 %v3562, %v3561
    %3579 = vmatpush.bf16.msra.mxu0 %v3570
    %3580 = vmatpush.bf16.msra.mxu0 %v3569
    %3581 = vmatpush.bf16.msra.mxu0 %v3568
    %3582 = vmatpush.bf16.msra.mxu0 %v3567
    %3583 = vmatpush.bf16.msra.mxu0 %v3566
    %3584 = vmatpush.bf16.msra.mxu0 %v3565
    %3585 = vmatpush.bf16.msra.mxu0 %v3564
    %3586 = vmatpush.bf16.msra.mxu0 %v3563
    %3587 = vmatmul.bf16.gmra.mxu0 %v3504
    %v3588 = vpop.f32.mrf.mxu0
    %v3589 = vadd.f32 %v3529, %v3588
    %v3590 = vpop.f32.mrf.mxu0
    %v3591 = vadd.f32 %v3529, %v3590
    %3592 = vmatmul.bf16.gmra.mxu0 %v3505
    %v3593 = vpop.f32.mrf.mxu0
    %v3594 = vadd.f32 %v3529, %v3593
    %v3595 = vpop.f32.mrf.mxu0
    %v3596 = vadd.f32 %v3529, %v3595
    %3597 = vmatmul.bf16.gmra.mxu0 %v3506
    %v3598 = vpop.f32.mrf.mxu0
    %v3599 = vadd.f32 %v3529, %v3598
    %v3600 = vpop.f32.mrf.mxu0
    %v3601 = vadd.f32 %v3529, %v3600
    %3602 = vmatmul.bf16.gmra.mxu0 %v3507
    %v3603 = vpop.f32.mrf.mxu0
    %v3604 = vadd.f32 %v3529, %v3603
    %v3605 = vpop.f32.mrf.mxu0
    %v3606 = vadd.f32 %v3529, %v3605
    %3607 = vmatmul.bf16.gmra.mxu0 %v3508
    %v3608 = vpop.f32.mrf.mxu0
    %v3609 = vadd.f32 %v3529, %v3608
    %v3610 = vpop.f32.mrf.mxu0
    %v3611 = vadd.f32 %v3529, %v3610
    %3612 = vmatmul.bf16.gmra.mxu0 %v3509
    %v3613 = vpop.f32.mrf.mxu0
    %v3614 = vadd.f32 %v3529, %v3613
    %v3615 = vpop.f32.mrf.mxu0
    %v3616 = vadd.f32 %v3529, %v3615
    %3617 = vmatmul.bf16.gmra.mxu0 %v3510
    %v3618 = vpop.f32.mrf.mxu0
    %v3619 = vadd.f32 %v3529, %v3618
    %v3620 = vpop.f32.mrf.mxu0
    %3621 = vdwg.mxu0
    %v3622 = vmax.f32 %v3589, 0.0
    %v3623 = vmax.f32 %v3591, 0.0
    %v3624 = vmax.f32 %v3594, 0.0
    %v3625 = vmax.f32 %v3596, 0.0
    %v3626 = vmax.f32 %v3599, 0.0
    %v3627 = vmax.f32 %v3601, 0.0
    %v3628 = vmax.f32 %v3604, 0.0
    %v3629 = vmax.f32 %v3606, 0.0
    %v3630 = vmax.f32 %v3609, 0.0
    %v3631 = vmax.f32 %v3611, 0.0
    %v3632 = vmax.f32 %v3614, 0.0
    %v3633 = vmax.f32 %v3616, 0.0
    %v3634 = vmax.f32 %v3619, 0.0
    %v3635 = vld [vmem:[#allocation4] sm:$0xff]
    %v3636 = vld [vmem:[#allocation4 + $0x8] sm:$0xff]
    %v3637 = vld [vmem:[#allocation4 + $0x10] sm:$0xff]
    %v3638 = vld [vmem:[#allocation4 + $0x18] sm:$0xff]
    %v3639 = vld [vmem:[#allocation4 + $0x20] sm:$0xff]
    %v3640 = vld [vmem:[#allocation4 + $0x28] sm:$0xff]
    %v3641 = vld [vmem:[#allocation4 + $0x30] sm:$0xff]
    %v3642 = vld [vmem:[#allocation4 + $0x38] sm:$0xff]
    %v3643 = vld [vmem:[#allocation4 + $0x40] sm:$0xff]
    %v3644 = vld [vmem:[#allocation4 + $0x48] sm:$0xff]
    %v3645 = vld [vmem:[#allocation4 + $0x50] sm:$0xff]
    %v3646 = vld [vmem:[#allocation4 + $0x58] sm:$0xff]
    %v3647 = vld [vmem:[#allocation4 + $0x60] sm:$0xff]
    %v3648 = vld [vmem:[#allocation4 + $0x68] sm:$0xff]
    %v3649 = vld [vmem:[#allocation4 + $0x70] sm:$0xff]
    %v3650 = vld [vmem:[#allocation4 + $0x78] sm:$0xff]
    %v3651 = vld [vmem:[#allocation4 + $0x80] sm:$0xff]
    %v3652 = vld [vmem:[#allocation4 + $0x88] sm:$0xff]
    %v3653 = vld [vmem:[#allocation4 + $0x90] sm:$0xff]
    %v3654 = vld [vmem:[#allocation4 + $0x98] sm:$0xff]
    %v3655 = vld [vmem:[#allocation4 + $0xa0] sm:$0xff]
    %v3656 = vld [vmem:[#allocation4 + $0xa8] sm:$0xff]
    %v3657 = vld [vmem:[#allocation4 + $0xb0] sm:$0xff]
    %v3658 = vld [vmem:[#allocation4 + $0xb8] sm:$0xff]
    %v3659 = vld [vmem:[#allocation4 + $0xc0] sm:$0xff]
    %v3660 = vld [vmem:[#allocation4 + $0xc8] sm:$0xff]
    %3662 = vset.pattern.permute.xlu0 0
    %3663 = vperm.xlu0 %3662, %v3622
    %v3664 = vpop.permute.xlu0 %3663
    %3667 = vset.pattern.permute.xlu0 0
    %3668 = vperm.xlu0 %3667, %v3623
    %v3669 = vpop.permute.xlu0 %3668
    %3672 = vset.pattern.permute.xlu0 0
    %3673 = vperm.xlu0 %3672, %v3624
    %v3674 = vpop.permute.xlu0 %3673
    %3677 = vset.pattern.permute.xlu0 0
    %3678 = vperm.xlu0 %3677, %v3625
    %v3679 = vpop.permute.xlu0 %3678
    %3682 = vset.pattern.permute.xlu0 0
    %3683 = vperm.xlu0 %3682, %v3626
    %v3684 = vpop.permute.xlu0 %3683
    %3687 = vset.pattern.permute.xlu0 0
    %3688 = vperm.xlu0 %3687, %v3627
    %v3689 = vpop.permute.xlu0 %3688
    %3692 = vset.pattern.permute.xlu0 0
    %3693 = vperm.xlu0 %3692, %v3628
    %v3694 = vpop.permute.xlu0 %3693
    %3697 = vset.pattern.permute.xlu0 0
    %3698 = vperm.xlu0 %3697, %v3629
    %v3699 = vpop.permute.xlu0 %3698
    %3702 = vset.pattern.permute.xlu0 0
    %3703 = vperm.xlu0 %3702, %v3630
    %v3704 = vpop.permute.xlu0 %3703
    %3707 = vset.pattern.permute.xlu0 0
    %3708 = vperm.xlu0 %3707, %v3631
    %v3709 = vpop.permute.xlu0 %3708
    %3712 = vset.pattern.permute.xlu0 0
    %3713 = vperm.xlu0 %3712, %v3632
    %v3714 = vpop.permute.xlu0 %3713
    %3717 = vset.pattern.permute.xlu0 0
    %3718 = vperm.xlu0 %3717, %v3633
    %v3719 = vpop.permute.xlu0 %3718
    %3722 = vset.pattern.permute.xlu0 0
    %3723 = vperm.xlu0 %3722, %v3634
    %v3724 = vpop.permute.xlu0 %3723
    %v3726 = vmul.f32 %v3664, %v3635
    %v3727 = vmul.f32 %v3664, %v3636
    %v3728 = vmul.f32 %v3669, %v3637
    %v3729 = vmul.f32 %v3669, %v3638
    %v3730 = vmul.f32 %v3674, %v3639
    %v3731 = vmul.f32 %v3674, %v3640
    %v3732 = vmul.f32 %v3679, %v3641
    %v3733 = vmul.f32 %v3679, %v3642
    %v3734 = vmul.f32 %v3684, %v3643
    %v3735 = vmul.f32 %v3684, %v3644
    %v3736 = vmul.f32 %v3689, %v3645
    %v3737 = vmul.f32 %v3689, %v3646
    %v3738 = vmul.f32 %v3694, %v3647
    %v3739 = vmul.f32 %v3694, %v3648
    %v3740 = vmul.f32 %v3699, %v3649
    %v3741 = vmul.f32 %v3699, %v3650
    %v3742 = vmul.f32 %v3704, %v3651
    %v3743 = vmul.f32 %v3704, %v3652
    %v3744 = vmul.f32 %v3709, %v3653
    %v3745 = vmul.f32 %v3709, %v3654
    %v3746 = vmul.f32 %v3714, %v3655
    %v3747 = vmul.f32 %v3714, %v3656
    %v3748 = vmul.f32 %v3719, %v3657
    %v3749 = vmul.f32 %v3719, %v3658
    %v3750 = vmul.f32 %v3724, %v3659
    %v3751 = vmul.f32 %v3724, %v3660
    %s3752 = scalar_lea.vmem [#allocation4], 208
    %v3753 = vld [vmem:[%s3752] sm:$0xff]
    %v3754 = vld [vmem:[%s3752 + $0x8] sm:$0xff]
    %v3755 = vld [vmem:[%s3752 + $0x10] sm:$0xff]
    %v3756 = vld [vmem:[%s3752 + $0x18] sm:$0xff]
    %v3757 = vld [vmem:[%s3752 + $0x20] sm:$0xff]
    %v3758 = vld [vmem:[%s3752 + $0x28] sm:$0xff]
    %v3759 = vld [vmem:[%s3752 + $0x30] sm:$0xff]
    %v3760 = vld [vmem:[%s3752 + $0x38] sm:$0xff]
    %v3761 = vld [vmem:[%s3752 + $0x40] sm:$0xff]
    %v3762 = vld [vmem:[%s3752 + $0x48] sm:$0xff]
    %v3763 = vld [vmem:[%s3752 + $0x50] sm:$0xff]
    %v3764 = vld [vmem:[%s3752 + $0x58] sm:$0xff]
    %v3765 = vld [vmem:[%s3752 + $0x60] sm:$0xff]
    %v3766 = vld [vmem:[%s3752 + $0x68] sm:$0xff]
    %v3767 = vld [vmem:[%s3752 + $0x70] sm:$0xff]
    %v3768 = vld [vmem:[%s3752 + $0x78] sm:$0xff]
    %v3769 = vld [vmem:[%s3752 + $0x80] sm:$0xff]
    %v3770 = vld [vmem:[%s3752 + $0x88] sm:$0xff]
    %v3771 = vld [vmem:[%s3752 + $0x90] sm:$0xff]
    %v3772 = vld [vmem:[%s3752 + $0x98] sm:$0xff]
    %v3773 = vld [vmem:[%s3752 + $0xa0] sm:$0xff]
    %v3774 = vld [vmem:[%s3752 + $0xa8] sm:$0xff]
    %v3775 = vld [vmem:[%s3752 + $0xb0] sm:$0xff]
    %v3776 = vld [vmem:[%s3752 + $0xb8] sm:$0xff]
    %v3777 = vld [vmem:[%s3752 + $0xc0] sm:$0xff]
    %v3778 = vld [vmem:[%s3752 + $0xc8] sm:$0xff]
    %3779 = vset.pattern.permute.xlu0 1
    %3780 = vperm.xlu0 %3779, %v3622
    %v3781 = vpop.permute.xlu0 %3780
    %3783 = vset.pattern.permute.xlu0 1
    %3784 = vperm.xlu0 %3783, %v3623
    %v3785 = vpop.permute.xlu0 %3784
    %3787 = vset.pattern.permute.xlu0 1
    %3788 = vperm.xlu0 %3787, %v3624
    %v3789 = vpop.permute.xlu0 %3788
    %3791 = vset.pattern.permute.xlu0 1
    %3792 = vperm.xlu0 %3791, %v3625
    %v3793 = vpop.permute.xlu0 %3792
    %3795 = vset.pattern.permute.xlu0 1
    %3796 = vperm.xlu0 %3795, %v3626
    %v3797 = vpop.permute.xlu0 %3796
    %3799 = vset.pattern.permute.xlu0 1
    %3800 = vperm.xlu0 %3799, %v3627
    %v3801 = vpop.permute.xlu0 %3800
    %3803 = vset.pattern.permute.xlu0 1
    %3804 = vperm.xlu0 %3803, %v3628
    %v3805 = vpop.permute.xlu0 %3804
    %3807 = vset.pattern.permute.xlu0 1
    %3808 = vperm.xlu0 %3807, %v3629
    %v3809 = vpop.permute.xlu0 %3808
    %3811 = vset.pattern.permute.xlu0 1
    %3812 = vperm.xlu0 %3811, %v3630
    %v3813 = vpop.permute.xlu0 %3812
    %3815 = vset.pattern.permute.xlu0 1
    %3816 = vperm.xlu0 %3815, %v3631
    %v3817 = vpop.permute.xlu0 %3816
    %3819 = vset.pattern.permute.xlu0 1
    %3820 = vperm.xlu0 %3819, %v3632
    %v3821 = vpop.permute.xlu0 %3820
    %3823 = vset.pattern.permute.xlu0 1
    %3824 = vperm.xlu0 %3823, %v3633
    %v3825 = vpop.permute.xlu0 %3824
    %3827 = vset.pattern.permute.xlu0 1
    %3828 = vperm.xlu0 %3827, %v3634
    %v3829 = vpop.permute.xlu0 %3828
    %v3831 = vmul.f32 %v3781, %v3753
    %v3832 = vmul.f32 %v3781, %v3754
    %v3833 = vmul.f32 %v3785, %v3755
    %v3834 = vmul.f32 %v3785, %v3756
    %v3835 = vmul.f32 %v3789, %v3757
    %v3836 = vmul.f32 %v3789, %v3758
    %v3837 = vmul.f32 %v3793, %v3759
    %v3838 = vmul.f32 %v3793, %v3760
    %v3839 = vmul.f32 %v3797, %v3761
    %v3840 = vmul.f32 %v3797, %v3762
    %v3841 = vmul.f32 %v3801, %v3763
    %v3842 = vmul.f32 %v3801, %v3764
    %v3843 = vmul.f32 %v3805, %v3765
    %v3844 = vmul.f32 %v3805, %v3766
    %v3845 = vmul.f32 %v3809, %v3767
    %v3846 = vmul.f32 %v3809, %v3768
    %v3847 = vmul.f32 %v3813, %v3769
    %v3848 = vmul.f32 %v3813, %v3770
    %v3849 = vmul.f32 %v3817, %v3771
    %v3850 = vmul.f32 %v3817, %v3772
    %v3851 = vmul.f32 %v3821, %v3773
    %v3852 = vmul.f32 %v3821, %v3774
    %v3853 = vmul.f32 %v3825, %v3775
    %v3854 = vmul.f32 %v3825, %v3776
    %v3855 = vmul.f32 %v3829, %v3777
    %v3856 = vmul.f32 %v3829, %v3778
    %v3857 = vadd.f32 %v3726, %v3831
    %v3858 = vadd.f32 %v3727, %v3832
    %v3859 = vadd.f32 %v3728, %v3833
    %v3860 = vadd.f32 %v3729, %v3834
    %v3861 = vadd.f32 %v3730, %v3835
    %v3862 = vadd.f32 %v3731, %v3836
    %v3863 = vadd.f32 %v3732, %v3837
    %v3864 = vadd.f32 %v3733, %v3838
    %v3865 = vadd.f32 %v3734, %v3839
    %v3866 = vadd.f32 %v3735, %v3840
    %v3867 = vadd.f32 %v3736, %v3841
    %v3868 = vadd.f32 %v3737, %v3842
    %v3869 = vadd.f32 %v3738, %v3843
    %v3870 = vadd.f32 %v3739, %v3844
    %v3871 = vadd.f32 %v3740, %v3845
    %v3872 = vadd.f32 %v3741, %v3846
    %v3873 = vadd.f32 %v3742, %v3847
    %v3874 = vadd.f32 %v3743, %v3848
    %v3875 = vadd.f32 %v3744, %v3849
    %v3876 = vadd.f32 %v3745, %v3850
    %v3877 = vadd.f32 %v3746, %v3851
    %v3878 = vadd.f32 %v3747, %v3852
    %v3879 = vadd.f32 %v3748, %v3853
    %v3880 = vadd.f32 %v3749, %v3854
    %v3881 = vadd.f32 %v3750, %v3855
    %v3882 = vadd.f32 %v3751, %v3856
    %s3883 = scalar_lea.vmem [#allocation4], 416
    %v3884 = vld [vmem:[%s3883] sm:$0xff]
    %v3885 = vld [vmem:[%s3883 + $0x8] sm:$0xff]
    %v3886 = vld [vmem:[%s3883 + $0x10] sm:$0xff]
    %v3887 = vld [vmem:[%s3883 + $0x18] sm:$0xff]
    %v3888 = vld [vmem:[%s3883 + $0x20] sm:$0xff]
    %v3889 = vld [vmem:[%s3883 + $0x28] sm:$0xff]
    %v3890 = vld [vmem:[%s3883 + $0x30] sm:$0xff]
    %v3891 = vld [vmem:[%s3883 + $0x38] sm:$0xff]
    %v3892 = vld [vmem:[%s3883 + $0x40] sm:$0xff]
    %v3893 = vld [vmem:[%s3883 + $0x48] sm:$0xff]
    %v3894 = vld [vmem:[%s3883 + $0x50] sm:$0xff]
    %v3895 = vld [vmem:[%s3883 + $0x58] sm:$0xff]
    %v3896 = vld [vmem:[%s3883 + $0x60] sm:$0xff]
    %v3897 = vld [vmem:[%s3883 + $0x68] sm:$0xff]
    %v3898 = vld [vmem:[%s3883 + $0x70] sm:$0xff]
    %v3899 = vld [vmem:[%s3883 + $0x78] sm:$0xff]
    %v3900 = vld [vmem:[%s3883 + $0x80] sm:$0xff]
    %v3901 = vld [vmem:[%s3883 + $0x88] sm:$0xff]
    %v3902 = vld [vmem:[%s3883 + $0x90] sm:$0xff]
    %v3903 = vld [vmem:[%s3883 + $0x98] sm:$0xff]
    %v3904 = vld [vmem:[%s3883 + $0xa0] sm:$0xff]
    %v3905 = vld [vmem:[%s3883 + $0xa8] sm:$0xff]
    %v3906 = vld [vmem:[%s3883 + $0xb0] sm:$0xff]
    %v3907 = vld [vmem:[%s3883 + $0xb8] sm:$0xff]
    %v3908 = vld [vmem:[%s3883 + $0xc0] sm:$0xff]
    %v3909 = vld [vmem:[%s3883 + $0xc8] sm:$0xff]
    %3910 = vset.pattern.permute.xlu0 2
    %3911 = vperm.xlu0 %3910, %v3622
    %v3912 = vpop.permute.xlu0 %3911
    %3914 = vset.pattern.permute.xlu0 2
    %3915 = vperm.xlu0 %3914, %v3623
    %v3916 = vpop.permute.xlu0 %3915
    %3918 = vset.pattern.permute.xlu0 2
    %3919 = vperm.xlu0 %3918, %v3624
    %v3920 = vpop.permute.xlu0 %3919
    %3922 = vset.pattern.permute.xlu0 2
    %3923 = vperm.xlu0 %3922, %v3625
    %v3924 = vpop.permute.xlu0 %3923
    %3926 = vset.pattern.permute.xlu0 2
    %3927 = vperm.xlu0 %3926, %v3626
    %v3928 = vpop.permute.xlu0 %3927
    %3930 = vset.pattern.permute.xlu0 2
    %3931 = vperm.xlu0 %3930, %v3627
    %v3932 = vpop.permute.xlu0 %3931
    %3934 = vset.pattern.permute.xlu0 2
    %3935 = vperm.xlu0 %3934, %v3628
    %v3936 = vpop.permute.xlu0 %3935
    %3938 = vset.pattern.permute.xlu0 2
    %3939 = vperm.xlu0 %3938, %v3629
    %v3940 = vpop.permute.xlu0 %3939
    %3942 = vset.pattern.permute.xlu0 2
    %3943 = vperm.xlu0 %3942, %v3630
    %v3944 = vpop.permute.xlu0 %3943
    %3946 = vset.pattern.permute.xlu0 2
    %3947 = vperm.xlu0 %3946, %v3631
    %v3948 = vpop.permute.xlu0 %3947
    %3950 = vset.pattern.permute.xlu0 2
    %3951 = vperm.xlu0 %3950, %v3632
    %v3952 = vpop.permute.xlu0 %3951
    %3954 = vset.pattern.permute.xlu0 2
    %3955 = vperm.xlu0 %3954, %v3633
    %v3956 = vpop.permute.xlu0 %3955
    %3958 = vset.pattern.permute.xlu0 2
    %3959 = vperm.xlu0 %3958, %v3634
    %v3960 = vpop.permute.xlu0 %3959
    %v3962 = vmul.f32 %v3912, %v3884
    %v3963 = vmul.f32 %v3912, %v3885
    %v3964 = vmul.f32 %v3916, %v3886
    %v3965 = vmul.f32 %v3916, %v3887
    %v3966 = vmul.f32 %v3920, %v3888
    %v3967 = vmul.f32 %v3920, %v3889
    %v3968 = vmul.f32 %v3924, %v3890
    %v3969 = vmul.f32 %v3924, %v3891
    %v3970 = vmul.f32 %v3928, %v3892
    %v3971 = vmul.f32 %v3928, %v3893
    %v3972 = vmul.f32 %v3932, %v3894
    %v3973 = vmul.f32 %v3932, %v3895
    %v3974 = vmul.f32 %v3936, %v3896
    %v3975 = vmul.f32 %v3936, %v3897
    %v3976 = vmul.f32 %v3940, %v3898
    %v3977 = vmul.f32 %v3940, %v3899
    %v3978 = vmul.f32 %v3944, %v3900
    %v3979 = vmul.f32 %v3944, %v3901
    %v3980 = vmul.f32 %v3948, %v3902
    %v3981 = vmul.f32 %v3948, %v3903
    %v3982 = vmul.f32 %v3952, %v3904
    %v3983 = vmul.f32 %v3952, %v3905
    %v3984 = vmul.f32 %v3956, %v3906
    %v3985 = vmul.f32 %v3956, %v3907
    %v3986 = vmul.f32 %v3960, %v3908
    %v3987 = vmul.f32 %v3960, %v3909
    %v3988 = vadd.f32 %v3857, %v3962
    %v3989 = vadd.f32 %v3858, %v3963
    %v3990 = vadd.f32 %v3859, %v3964
    %v3991 = vadd.f32 %v3860, %v3965
    %v3992 = vadd.f32 %v3861, %v3966
    %v3993 = vadd.f32 %v3862, %v3967
    %v3994 = vadd.f32 %v3863, %v3968
    %v3995 = vadd.f32 %v3864, %v3969
    %v3996 = vadd.f32 %v3865, %v3970
    %v3997 = vadd.f32 %v3866, %v3971
    %v3998 = vadd.f32 %v3867, %v3972
    %v3999 = vadd.f32 %v3868, %v3973
    %v4000 = vadd.f32 %v3869, %v3974
    %v4001 = vadd.f32 %v3870, %v3975
    %v4002 = vadd.f32 %v3871, %v3976
    %v4003 = vadd.f32 %v3872, %v3977
    %v4004 = vadd.f32 %v3873, %v3978
    %v4005 = vadd.f32 %v3874, %v3979
    %v4006 = vadd.f32 %v3875, %v3980
    %v4007 = vadd.f32 %v3876, %v3981
    %v4008 = vadd.f32 %v3877, %v3982
    %v4009 = vadd.f32 %v3878, %v3983
    %v4010 = vadd.f32 %v3879, %v3984
    %v4011 = vadd.f32 %v3880, %v3985
    %v4012 = vadd.f32 %v3881, %v3986
    %v4013 = vadd.f32 %v3882, %v3987
    %v4014 = vld [vmem:[%s7] sm:$0xf]
    %v4015 = vpack.c.bf16 %v3990, %v3988
    %v4016 = vpack.c.bf16 %v3991, %v3989
    %v4017 = vpack.c.bf16 %v3994, %v3992
    %v4018 = vpack.c.bf16 %v3995, %v3993
    %v4019 = vpack.c.bf16 %v3998, %v3996
    %v4020 = vpack.c.bf16 %v3999, %v3997
    %v4021 = vpack.c.bf16 %v4002, %v4000
    %v4022 = vpack.c.bf16 %v4003, %v4001
    %v4023 = vpack.c.bf16 %v4006, %v4004
    %v4024 = vpack.c.bf16 %v4007, %v4005
    %v4025 = vpack.c.bf16 %v4010, %v4008
    %v4026 = vpack.c.bf16 %v4011, %v4009
    %v4027 = vpack.c.bf16 %v4012, %v4012
    %v4028 = vpack.c.bf16 %v4013, %v4013
    %v4029 = vld [vmem:[%s8] sm:$0x3]
    %v4031 = vperm.slane %v4029, 0
    %v4032 = vperm.slane %v4029, 1
    %vm4035 = vcmask 850944
    %v4037 = vsel %vm4035, %v4014, 0
    %vm4039 = vcmask 1043456
    %v4041 = vsel %vm4039, %v4027, 0
    %v4044 = vsel %vm4039, %v4028, 0
    %4046 = vmatpush.bf16.msra.mxu0 0
    %4047 = vmatpush.bf16.msra.mxu0 %v4041
    %4048 = vmatpush.bf16.msra.mxu0 %v4025
    %4049 = vmatpush.bf16.msra.mxu0 %v4023
    %4050 = vmatpush.bf16.msra.mxu0 %v4021
    %4051 = vmatpush.bf16.msra.mxu0 %v4019
    %4052 = vmatpush.bf16.msra.mxu0 %v4017
    %4053 = vmatpush.bf16.msra.mxu0 %v4015
    %4054 = vmatmul.bf16.gmra.mxu0 %v4037
    %v4055 = vpop.f32.mrf.mxu0
    %v4056 = vadd.f32 %v4031, %v4055
    %v4057 = vpop.f32.mrf.mxu0
    %4058 = vdwg.mxu0
    %4059 = vmatpush.bf16.msra.mxu0 0
    %4060 = vmatpush.bf16.msra.mxu0 %v4044
    %4061 = vmatpush.bf16.msra.mxu0 %v4026
    %4062 = vmatpush.bf16.msra.mxu0 %v4024
    %4063 = vmatpush.bf16.msra.mxu0 %v4022
    %4064 = vmatpush.bf16.msra.mxu0 %v4020
    %4065 = vmatpush.bf16.msra.mxu0 %v4018
    %4066 = vmatpush.bf16.msra.mxu0 %v4016
    %4067 = vmatmul.bf16.gmra.mxu0 %v4037
    %v4068 = vpop.f32.mrf.mxu0
    %v4069 = vadd.f32 %v4032, %v4068
    %v4070 = vpop.f32.mrf.mxu0
    %4071 = vdwg.mxu0
    %4072 = vst [vmem:[%s11] sm:$0xff] %v4056
    %v4073 = vmax.f32 %v4069, 0.0
    %v4074 = vpack.c.bf16 %v4073, %v4073
    %v4075 = vld [vmem:[%s9] sm:$0xf]
    %v4076 = vld [vmem:[%s9 + $0x4] sm:$0xf]
    %v4077 = vld [vmem:[%s9 + $0x8] sm:$0xf]
    %v4078 = vld [vmem:[%s9 + $0xc] sm:$0xf]
    %v4079 = vld [vmem:[%s9 + $0x10] sm:$0xf]
    %v4080 = vld [vmem:[%s9 + $0x14] sm:$0xf]
    %v4081 = vld [vmem:[%s9 + $0x18] sm:$0xf]
    %v4082 = vld [vmem:[%s9 + $0x1c] sm:$0xf]
    %v4083 = vld [vmem:[%s9 + $0x20] sm:$0xf]
    %v4084 = vld [vmem:[%s9 + $0x24] sm:$0xf]
    %v4085 = vld [vmem:[%s9 + $0x28] sm:$0xf]
    %v4086 = vld [vmem:[%s9 + $0x2c] sm:$0xf]
    %v4087 = vld [vmem:[%s9 + $0x30] sm:$0xf]
    %v4088 = vld [vmem:[%s9 + $0x34] sm:$0xf]
    %v4089 = vld [vmem:[%s9 + $0x38] sm:$0xf]
    %v4090 = vld [vmem:[%s9 + $0x3c] sm:$0xf]
    %v4091 = vld [vmem:[%s10] sm:$0x1]
    %v4093 = vperm.slane %v4091, 0
    %v4111 = vunpack.c.l.b16 %v4075
    %v4112 = vunpack.c.l.b16 %v4076
    %v4113 = vunpack.c.l.b16 %v4077
    %v4114 = vunpack.c.l.b16 %v4078
    %v4115 = vunpack.c.l.b16 %v4079
    %v4116 = vunpack.c.l.b16 %v4080
    %v4117 = vunpack.c.l.b16 %v4081
    %v4118 = vunpack.c.l.b16 %v4082
    %v4119 = vunpack.c.l.b16 %v4083
    %v4120 = vunpack.c.l.b16 %v4084
    %v4121 = vunpack.c.l.b16 %v4085
    %v4122 = vunpack.c.l.b16 %v4086
    %v4123 = vunpack.c.l.b16 %v4087
    %v4124 = vunpack.c.l.b16 %v4088
    %v4125 = vunpack.c.l.b16 %v4089
    %v4126 = vunpack.c.l.b16 %v4090
    %v4127 = vpack.c.b16 %v4112, %v4111
    %v4128 = vpack.c.b16 %v4114, %v4113
    %v4129 = vpack.c.b16 %v4116, %v4115
    %v4130 = vpack.c.b16 %v4118, %v4117
    %v4131 = vpack.c.b16 %v4120, %v4119
    %v4132 = vpack.c.b16 %v4122, %v4121
    %v4133 = vpack.c.b16 %v4124, %v4123
    %v4134 = vpack.c.b16 %v4126, %v4125
    %4143 = vmatpush.bf16.msra.mxu0 %v4134
    %4144 = vmatpush.bf16.msra.mxu0 %v4133
    %4145 = vmatpush.bf16.msra.mxu0 %v4132
    %4146 = vmatpush.bf16.msra.mxu0 %v4131
    %4147 = vmatpush.bf16.msra.mxu0 %v4130
    %4148 = vmatpush.bf16.msra.mxu0 %v4129
    %4149 = vmatpush.bf16.msra.mxu0 %v4128
    %4150 = vmatpush.bf16.msra.mxu0 %v4127
    %4151 = vmatmul.bf16.gmra.mxu0 %v4074
    %v4152 = vpop.f32.mrf.mxu0
    %v4153 = vadd.f32 %v4093, %v4152
    %v4154 = vpop.f32.mrf.mxu0
    %4155 = vdwg.mxu0
    %v4156 = vtanh.pop %v4153
    %4157 = vst [vmem:[%s12] sm:$0xff] %v4156
    // Predicated region
    $region54: #{alphazero_forward.1} parent=1 // pred_check
      _
    $region55: #{alphazero_forward.1} parent=1 // pred_check_branch
      %4159 = sbr.rel (0) target = $region57
    $region56: #{alphazero_forward.1} parent=1 // pred_region
      _
    $region57: #{alphazero_forward.1} parent=1 // pred_fallthru
      _
    // Predicated region
    $region58: #{alphazero_forward.1} parent=1 // pred_check
      _
    $region59: #{alphazero_forward.1} parent=1 // pred_check_branch
      %4161 = sbr.rel (0) target = $region61
    $region60: #{alphazero_forward.1} parent=1 // pred_region
      _
    $region61: #{alphazero_forward.1} parent=1 // pred_fallthru
      _
    // Predicated region
    $region62: #{alphazero_forward.1} parent=1 // pred_check
      _
    $region63: #{alphazero_forward.1} parent=1 // pred_check_branch
      %4163 = sbr.rel (0) target = $region65
    $region64: #{alphazero_forward.1} parent=1 // pred_region
      _
    $region65: #{alphazero_forward.1} parent=1 // pred_fallthru
      _
    // Predicated region
    $region66: #{alphazero_forward.1} parent=1 // pred_check
      _
    $region67: #{alphazero_forward.1} parent=1 // pred_check_branch
      %4165 = sbr.rel (0) target = $region69
    $region68: #{alphazero_forward.1} parent=1 // pred_region
      _
    $region69: #{alphazero_forward.1} parent=1 // pred_fallthru
      _
    %4166 = vsyncpa [#allocation3], 1
    %4167 = vsyncpa [#allocation5], 1

</llo_original>
